<compile_context>
chip_gen: v5e
topology: v5e:2x2
jax: 0.10.0
libtpu: 0.0.40
codegen_flags: <defaults>
</compile_context>

<pallas_src>
import functools

import numpy as np
import jax
import jax.numpy as jnp
from jax import lax
from jax.experimental import pallas as pl
from jax.experimental.pallas import tpu as pltpu

KH = 4
KW = 4
STRIDE = 2
PAD = 1
LEAKY_SLOPE = 0.1                    # nn.LeakyReLU(0.1) in the PyTorch spec
CHANNELS = (1, 32, 64, 128, 1)       # layer1..layer4


# ---------------------------------------------------------------------------
# Fused kernel: 4 conv layers + LeakyReLU + feature flatten, one image per
# grid step.  Every op is a small 2-D matmul / elementwise op on VMEM data.
# ---------------------------------------------------------------------------
def _discriminator_kernel(x_ref, *refs, leaky_slope):
    num_layers = (len(refs) - 3) // 3
    layer_refs = [refs[3 * l: 3 * (l + 1)] for l in range(num_layers)]
    perm_ref = refs[3 * num_layers]
    out_ref = refs[3 * num_layers + 1]
    feat_ref = refs[3 * num_layers + 2]

    # Layer-1 input has a single channel, so the activation matrix is just the
    # raw image rows: act[h, w*Cin + c] with Cin == 1.
    act = x_ref[0].astype(jnp.float32)                       # [H, W]

    feat_val = None
    for l, (cw_ref, rs_ref, b_ref) in enumerate(layer_refs):
        acc = None
        for kh in range(KH):
            # Row gather (stride 2, pad 1) as a tiny 0/1 selection matmul.
            rows = jnp.dot(rs_ref[kh], act,
                           preferred_element_type=jnp.float32)      # [Hout, Win*Cin]
            cw_kh = cw_ref[kh]
            if cw_kh.shape[0] == 1:
                # Single-output-column layer (weights stored transposed as
                # [1, Win*Cin]): VPU row-dot instead of an N=1 MXU matmul.
                part = jnp.sum(rows * cw_kh, axis=1, keepdims=True)
            else:
                # Column gather + channel contraction folded into one matmul.
                part = jnp.dot(rows, cw_kh,
                               preferred_element_type=jnp.float32)  # [Hout, Wout*Cout]
            acc = part if acc is None else acc + part
        acc = acc + b_ref[...]
        if l < num_layers - 1:                                # LeakyReLU on layers 1-3
            acc = jnp.where(acc >= 0.0, acc, leaky_slope * acc)
        act = acc

        if l == num_layers - 2:
            # feature = post-activation layer-3 output flattened in PyTorch
            # NCHW order, produced lane-dense via a 0/1 permutation matmul.
            f = None
            for h in range(act.shape[0]):
                t = jnp.dot(act[h:h + 1, :], perm_ref[h],
                            preferred_element_type=jnp.float32)     # [1, C3*H3*W3]
                f = t if f is None else f + t
            feat_val = f

    out_ref[0] = act                                          # [Hout4, Wout4]
    feat_ref[0] = feat_val                                    # [1, C3*H3*W3]


# ---------------------------------------------------------------------------
# Host-side weight preparation (eager, runs once)
# ---------------------------------------------------------------------------
def _fold_conv_weights(w_oihw, hin, win):
    """Fold the stride-2 / pad-1 column gather into the conv weights.

    Returns (cw [KH, Win*Cin, Wout*Cout], rs [KH, Hout, Hin]) as numpy f32.
    """
    w_oihw = np.asarray(w_oihw, dtype=np.float32)
    cout, cin, _, _ = w_oihw.shape
    hout, wout = hin // STRIDE, win // STRIDE
    w_hwio = np.transpose(w_oihw, (2, 3, 1, 0))               # [KH, KW, Cin, Cout]

    cw = np.zeros((KH, win * cin, wout * cout), np.float32)
    rs = np.zeros((KH, hout, hin), np.float32)
    for kh in range(KH):
        for u in range(hout):
            h = STRIDE * u - PAD + kh
            if 0 <= h < hin:
                rs[kh, u, h] = 1.0
        for kw in range(KW):
            for v in range(wout):
                w_col = STRIDE * v - PAD + kw
                if 0 <= w_col < win:
                    cw[kh, w_col * cin:(w_col + 1) * cin,
                       v * cout:(v + 1) * cout] = w_hwio[kh, kw]
    return cw, rs


def prepare_discriminator(params, height, width):
    """Transform PyTorch-layout (OIHW) conv params into the fused-kernel form."""
    assert height % 16 == 0 and width % 16 == 0, "spatial dims must be /16"
    num_layers = len(CHANNELS) - 1
    inputs = []
    dims = []
    hin, win = height, width
    for l in range(num_layers):
        cin, cout = CHANNELS[l], CHANNELS[l + 1]
        hout, wout = hin // STRIDE, win // STRIDE
        cw, rs = _fold_conv_weights(params[f"w{l + 1}"], hin, win)
        if l == num_layers - 1 and wout * cout == 1:
            # Store the single-column last layer transposed for the row-dot path.
            cw = np.transpose(cw, (0, 2, 1))                  # [KH, 1, Win*Cin]
        b = np.asarray(params[f"b{l + 1}"], np.float32)
        b_tiled = np.tile(b, wout).reshape(1, wout * cout)    # bias[v*Cout + d] = b[d]
        inputs += [jnp.asarray(cw), jnp.asarray(rs), jnp.asarray(b_tiled)]
        dims.append((hin, win, cin, hout, wout, cout))
        hin, win = hout, wout

    # Permutation matrices flattening the layer-3 output into NCHW order:
    # feature[c*H3*W3 + h*W3 + w] = act3[h, w*C3 + c]
    h3, w3, c3 = dims[-2][3], dims[-2][4], dims[-2][5]
    perm = np.zeros((h3, w3 * c3, c3 * h3 * w3), np.float32)
    for h in range(h3):
        for w in range(w3):
            for c in range(c3):
                perm[h, w * c3 + c, c * h3 * w3 + h * w3 + w] = 1.0
    inputs.append(jnp.asarray(perm))
    return inputs


# ---------------------------------------------------------------------------
# Forward pass (single fused pallas_call, grid over batch)
# ---------------------------------------------------------------------------
def discriminator_forward(weight_inputs, x_nchw):
    """x_nchw: [N, 1, H, W] f32 -> (out [N,1,H/16,W/16], feature [N, 128*H/8*W/8])."""
    n, cin, h, w = x_nchw.shape
    assert cin == 1
    h4, w4 = h // 16, w // 16
    feat_dim = weight_inputs[-1].shape[2]

    x2d = x_nchw[:, 0, :, :]                                  # [N, H, W]

    kernel = functools.partial(_discriminator_kernel, leaky_slope=LEAKY_SLOPE)

    def full_spec(a):
        return pl.BlockSpec(a.shape, lambda i: (0,) * a.ndim)  # resident weights

    in_specs = [pl.BlockSpec((1, h, w), lambda i: (i, 0, 0))]
    in_specs += [full_spec(a) for a in weight_inputs]

    out_specs = (
        pl.BlockSpec((1, h4, w4), lambda i: (i, 0, 0)),
        pl.BlockSpec((1, 1, feat_dim), lambda i: (i, 0, 0)),
    )
    out_shape = (
        jax.ShapeDtypeStruct((n, h4, w4), jnp.float32),
        jax.ShapeDtypeStruct((n, 1, feat_dim), jnp.float32),
    )

    out4, feat = pl.pallas_call(
        kernel,
        grid=(n,),
        in_specs=in_specs,
        out_specs=out_specs,
        out_shape=out_shape,
        compiler_params=pltpu.CompilerParams(
            dimension_semantics=("parallel",)),
    )(x2d, *weight_inputs)

    return out4.reshape(n, 1, h4, w4), feat.reshape(n, feat_dim)


# ---------------------------------------------------------------------------
# Synthetic parameters (PyTorch layout: conv weights OIHW) + plain-XLA reference
# ---------------------------------------------------------------------------
def init_discriminator_params(key):
    keys = jax.random.split(key, 2 * (len(CHANNELS) - 1))
    params = {}
    for l in range(len(CHANNELS) - 1):
        cin, cout = CHANNELS[l], CHANNELS[l + 1]
        fan_in = cin * KH * KW
        w = jax.random.normal(keys[2 * l], (cout, cin, KH, KW), jnp.float32)
        params[f"w{l + 1}"] = w / np.sqrt(fan_in)
        params[f"b{l + 1}"] = 0.01 * jax.random.normal(
            keys[2 * l + 1], (cout,), jnp.float32)
    return params


def discriminator_reference(params, x_nchw):
    def conv(x, wt, b, slope):
        y = lax.conv_general_dilated(
            x, wt, window_strides=(STRIDE, STRIDE),
            padding=((PAD, PAD), (PAD, PAD)),
            dimension_numbers=("NCHW", "OIHW", "NCHW"))
        y = y + b.reshape(1, -1, 1, 1)
        if slope is not None:
            y = jnp.where(y >= 0.0, y, slope * y)
        return y

    out = conv(x_nchw, params["w1"], params["b1"], LEAKY_SLOPE)
    out = conv(out, params["w2"], params["b2"], LEAKY_SLOPE)
    out = conv(out, params["w3"], params["b3"], LEAKY_SLOPE)
    feature = out.reshape(out.shape[0], -1)
    out = conv(out, params["w4"], params["b4"], None)
    return out, feature


if __name__ == "__main__":
    key = jax.random.PRNGKey(0)
    k_param, k_input = jax.random.split(key)

    params = init_discriminator_params(k_param)
    # NCHW input with in_channels=1; 16x16 keeps all four stride-2 convs
    # integer-sized (16 -> 8 -> 4 -> 2 -> 1).
    batch, height, width = 2, 16, 16
    x = jax.random.normal(k_input, (batch, 1, height, width), jnp.float32)

    weight_inputs = prepare_discriminator(params, height, width)
    fwd = jax.jit(discriminator_forward)
    out, feature = fwd(weight_inputs, x)
    jax.block_until_ready((out, feature))

    assert out.shape == (batch, 1, height // 16, width // 16), out.shape
    assert feature.shape == (batch, 128 * (height // 8) * (width // 8)), feature.shape

    # Numerical check against a plain-XLA reference of the PyTorch module.
    ref_out, ref_feat = jax.jit(discriminator_reference)(params, x)
    jax.block_until_ready((ref_out, ref_feat))
    err_out = float(jnp.max(jnp.abs(out - ref_out)))
    err_feat = float(jnp.max(jnp.abs(feature - ref_feat)))
    assert err_out < 5e-2, err_out
    assert err_feat < 5e-2, err_feat

    print("KERNEL_OK")
</pallas_src>

<mosaic_0001>
module attributes {stable_mosaic.version = 11 : i64} {
  func.func @_discriminator_kernel(%arg0: i32, %arg1: memref<1x16x16xf32, #tpu.memory_space<vmem>>, %arg2: memref<4x16x256xf32, #tpu.memory_space<vmem>>, %arg3: memref<4x8x16xf32, #tpu.memory_space<vmem>>, %arg4: memref<1x256xf32, #tpu.memory_space<vmem>>, %arg5: memref<4x256x256xf32, #tpu.memory_space<vmem>>, %arg6: memref<4x4x8xf32, #tpu.memory_space<vmem>>, %arg7: memref<1x256xf32, #tpu.memory_space<vmem>>, %arg8: memref<4x256x256xf32, #tpu.memory_space<vmem>>, %arg9: memref<4x2x4xf32, #tpu.memory_space<vmem>>, %arg10: memref<1x256xf32, #tpu.memory_space<vmem>>, %arg11: memref<4x1x256xf32, #tpu.memory_space<vmem>>, %arg12: memref<4x1x2xf32, #tpu.memory_space<vmem>>, %arg13: memref<1x1xf32, #tpu.memory_space<vmem>>, %arg14: memref<2x256x512xf32, #tpu.memory_space<vmem>>, %arg15: memref<1x1x1xf32, #tpu.memory_space<vmem>>, %arg16: memref<1x1x512xf32, #tpu.memory_space<vmem>>) attributes {dimension_semantics = [#tpu.dimension_semantics<parallel>], iteration_bounds = array<i64: 2>, scalar_prefetch = 0 : i64, scratch_operands = 0 : i64, tpu.core_type = #tpu.core_type<tc>, window_params = [{transform_indices = @transform_0, window_bounds = array<i64: 1, 16, 16>}, {pipeline_mode = #tpu.pipeline_mode<synchronous>, transform_indices = @transform_1, window_bounds = array<i64: 4, 16, 256>}, {pipeline_mode = #tpu.pipeline_mode<synchronous>, transform_indices = @transform_2, window_bounds = array<i64: 4, 8, 16>}, {pipeline_mode = #tpu.pipeline_mode<synchronous>, transform_indices = @transform_3, window_bounds = array<i64: 1, 256>}, {pipeline_mode = #tpu.pipeline_mode<synchronous>, transform_indices = @transform_4, window_bounds = array<i64: 4, 256, 256>}, {pipeline_mode = #tpu.pipeline_mode<synchronous>, transform_indices = @transform_5, window_bounds = array<i64: 4, 4, 8>}, {pipeline_mode = #tpu.pipeline_mode<synchronous>, transform_indices = @transform_6, window_bounds = array<i64: 1, 256>}, {pipeline_mode = #tpu.pipeline_mode<synchronous>, transform_indices = @transform_7, window_bounds = array<i64: 4, 256, 256>}, {pipeline_mode = #tpu.pipeline_mode<synchronous>, transform_indices = @transform_8, window_bounds = array<i64: 4, 2, 4>}, {pipeline_mode = #tpu.pipeline_mode<synchronous>, transform_indices = @transform_9, window_bounds = array<i64: 1, 256>}, {pipeline_mode = #tpu.pipeline_mode<synchronous>, transform_indices = @transform_10, window_bounds = array<i64: 4, 1, 256>}, {pipeline_mode = #tpu.pipeline_mode<synchronous>, transform_indices = @transform_11, window_bounds = array<i64: 4, 1, 2>}, {pipeline_mode = #tpu.pipeline_mode<synchronous>, transform_indices = @transform_12, window_bounds = array<i64: 1, 1>}, {pipeline_mode = #tpu.pipeline_mode<synchronous>, transform_indices = @transform_13, window_bounds = array<i64: 2, 256, 512>}, {transform_indices = @transform_14, window_bounds = array<i64: 1, 1, 1>}, {transform_indices = @transform_15, window_bounds = array<i64: 1, 1, 512>}]} {
    %c0 = arith.constant 0 : index
    %c0_0 = arith.constant 0 : index
    %c0_1 = arith.constant 0 : index
    %0 = vector.load %arg1[%c0, %c0_0, %c0_1] : memref<1x16x16xf32, #tpu.memory_space<vmem>>, vector<1x16x16xf32>
    %1 = vector.shape_cast %0 : vector<1x16x16xf32> to vector<16x16xf32>
    %c0_2 = arith.constant 0 : index
    %c0_3 = arith.constant 0 : index
    %c0_4 = arith.constant 0 : index
    %2 = vector.load %arg3[%c0_2, %c0_3, %c0_4] : memref<4x8x16xf32, #tpu.memory_space<vmem>>, vector<1x8x16xf32>
    %3 = vector.shape_cast %2 : vector<1x8x16xf32> to vector<8x16xf32>
    %cst = arith.constant dense<0.000000e+00> : vector<8x16xf32>
    %4 = tpu.matmul %3, %1, %cst {dimension_numbers = #tpu.dot_dimension_numbers<[1], [0], [0], [1], [0, 0, 1, 1], [], []>} : vector<8x16xf32>, vector<16x16xf32>, vector<8x16xf32> -> vector<8x16xf32>
    %c0_5 = arith.constant 0 : index
    %c0_6 = arith.constant 0 : index
    %c0_7 = arith.constant 0 : index
    %5 = vector.load %arg2[%c0_5, %c0_6, %c0_7] : memref<4x16x256xf32, #tpu.memory_space<vmem>>, vector<1x16x256xf32>
    %6 = vector.shape_cast %5 : vector<1x16x256xf32> to vector<16x256xf32>
    %cst_8 = arith.constant dense<0.000000e+00> : vector<8x256xf32>
    %7 = tpu.matmul %4, %6, %cst_8 {dimension_numbers = #tpu.dot_dimension_numbers<[1], [0], [0], [1], [0, 0, 1, 1], [], []>} : vector<8x16xf32>, vector<16x256xf32>, vector<8x256xf32> -> vector<8x256xf32>
    %c1 = arith.constant 1 : index
    %c0_9 = arith.constant 0 : index
    %c0_10 = arith.constant 0 : index
    %8 = vector.load %arg3[%c1, %c0_9, %c0_10] : memref<4x8x16xf32, #tpu.memory_space<vmem>>, vector<1x8x16xf32>
    %9 = vector.shape_cast %8 : vector<1x8x16xf32> to vector<8x16xf32>
    %cst_11 = arith.constant dense<0.000000e+00> : vector<8x16xf32>
    %10 = tpu.matmul %9, %1, %cst_11 {dimension_numbers = #tpu.dot_dimension_numbers<[1], [0], [0], [1], [0, 0, 1, 1], [], []>} : vector<8x16xf32>, vector<16x16xf32>, vector<8x16xf32> -> vector<8x16xf32>
    %c1_12 = arith.constant 1 : index
    %c0_13 = arith.constant 0 : index
    %c0_14 = arith.constant 0 : index
    %11 = vector.load %arg2[%c1_12, %c0_13, %c0_14] : memref<4x16x256xf32, #tpu.memory_space<vmem>>, vector<1x16x256xf32>
    %12 = vector.shape_cast %11 : vector<1x16x256xf32> to vector<16x256xf32>
    %cst_15 = arith.constant dense<0.000000e+00> : vector<8x256xf32>
    %13 = tpu.matmul %10, %12, %cst_15 {dimension_numbers = #tpu.dot_dimension_numbers<[1], [0], [0], [1], [0, 0, 1, 1], [], []>} : vector<8x16xf32>, vector<16x256xf32>, vector<8x256xf32> -> vector<8x256xf32>
    %14 = arith.addf %7, %13 : vector<8x256xf32>
    %c2 = arith.constant 2 : index
    %c0_16 = arith.constant 0 : index
    %c0_17 = arith.constant 0 : index
    %15 = vector.load %arg3[%c2, %c0_16, %c0_17] : memref<4x8x16xf32, #tpu.memory_space<vmem>>, vector<1x8x16xf32>
    %16 = vector.shape_cast %15 : vector<1x8x16xf32> to vector<8x16xf32>
    %cst_18 = arith.constant dense<0.000000e+00> : vector<8x16xf32>
    %17 = tpu.matmul %16, %1, %cst_18 {dimension_numbers = #tpu.dot_dimension_numbers<[1], [0], [0], [1], [0, 0, 1, 1], [], []>} : vector<8x16xf32>, vector<16x16xf32>, vector<8x16xf32> -> vector<8x16xf32>
    %c2_19 = arith.constant 2 : index
    %c0_20 = arith.constant 0 : index
    %c0_21 = arith.constant 0 : index
    %18 = vector.load %arg2[%c2_19, %c0_20, %c0_21] : memref<4x16x256xf32, #tpu.memory_space<vmem>>, vector<1x16x256xf32>
    %19 = vector.shape_cast %18 : vector<1x16x256xf32> to vector<16x256xf32>
    %cst_22 = arith.constant dense<0.000000e+00> : vector<8x256xf32>
    %20 = tpu.matmul %17, %19, %cst_22 {dimension_numbers = #tpu.dot_dimension_numbers<[1], [0], [0], [1], [0, 0, 1, 1], [], []>} : vector<8x16xf32>, vector<16x256xf32>, vector<8x256xf32> -> vector<8x256xf32>
    %21 = arith.addf %14, %20 : vector<8x256xf32>
    %c3 = arith.constant 3 : index
    %c0_23 = arith.constant 0 : index
    %c0_24 = arith.constant 0 : index
    %22 = vector.load %arg3[%c3, %c0_23, %c0_24] : memref<4x8x16xf32, #tpu.memory_space<vmem>>, vector<1x8x16xf32>
    %23 = vector.shape_cast %22 : vector<1x8x16xf32> to vector<8x16xf32>
    %cst_25 = arith.constant dense<0.000000e+00> : vector<8x16xf32>
    %24 = tpu.matmul %23, %1, %cst_25 {dimension_numbers = #tpu.dot_dimension_numbers<[1], [0], [0], [1], [0, 0, 1, 1], [], []>} : vector<8x16xf32>, vector<16x16xf32>, vector<8x16xf32> -> vector<8x16xf32>
    %c3_26 = arith.constant 3 : index
    %c0_27 = arith.constant 0 : index
    %c0_28 = arith.constant 0 : index
    %25 = vector.load %arg2[%c3_26, %c0_27, %c0_28] : memref<4x16x256xf32, #tpu.memory_space<vmem>>, vector<1x16x256xf32>
    %26 = vector.shape_cast %25 : vector<1x16x256xf32> to vector<16x256xf32>
    %cst_29 = arith.constant dense<0.000000e+00> : vector<8x256xf32>
    %27 = tpu.matmul %24, %26, %cst_29 {dimension_numbers = #tpu.dot_dimension_numbers<[1], [0], [0], [1], [0, 0, 1, 1], [], []>} : vector<8x16xf32>, vector<16x256xf32>, vector<8x256xf32> -> vector<8x256xf32>
    %28 = arith.addf %21, %27 : vector<8x256xf32>
    %c0_30 = arith.constant 0 : index
    %c0_31 = arith.constant 0 : index
    %29 = vector.load %arg4[%c0_30, %c0_31] : memref<1x256xf32, #tpu.memory_space<vmem>>, vector<1x256xf32>
    %30 = vector.broadcast %29 : vector<1x256xf32> to vector<8x256xf32>
    %31 = arith.addf %28, %30 : vector<8x256xf32>
    %cst_32 = arith.constant 0.000000e+00 : f32
    %32 = vector.broadcast %cst_32 : f32 to vector<8x256xf32>
    %33 = arith.cmpf oge, %31, %32 : vector<8x256xf32>
    %cst_33 = arith.constant 1.000000e-01 : f32
    %34 = vector.broadcast %cst_33 : f32 to vector<8x256xf32>
    %35 = arith.mulf %34, %31 : vector<8x256xf32>
    %36 = arith.select %33, %31, %35 : vector<8x256xi1>, vector<8x256xf32>
    %c0_34 = arith.constant 0 : index
    %c0_35 = arith.constant 0 : index
    %c0_36 = arith.constant 0 : index
    %37 = vector.load %arg6[%c0_34, %c0_35, %c0_36] : memref<4x4x8xf32, #tpu.memory_space<vmem>>, vector<1x4x8xf32>
    %38 = vector.shape_cast %37 : vector<1x4x8xf32> to vector<4x8xf32>
    %cst_37 = arith.constant dense<0.000000e+00> : vector<4x256xf32>
    %39 = tpu.matmul %38, %36, %cst_37 {dimension_numbers = #tpu.dot_dimension_numbers<[1], [0], [0], [1], [0, 0, 1, 1], [], []>} : vector<4x8xf32>, vector<8x256xf32>, vector<4x256xf32> -> vector<4x256xf32>
    %c0_38 = arith.constant 0 : index
    %c0_39 = arith.constant 0 : index
    %c0_40 = arith.constant 0 : index
    %40 = vector.load %arg5[%c0_38, %c0_39, %c0_40] : memref<4x256x256xf32, #tpu.memory_space<vmem>>, vector<1x256x256xf32>
    %41 = vector.shape_cast %40 : vector<1x256x256xf32> to vector<256x256xf32>
    %cst_41 = arith.constant dense<0.000000e+00> : vector<4x256xf32>
    %42 = tpu.matmul %39, %41, %cst_41 {dimension_numbers = #tpu.dot_dimension_numbers<[1], [0], [0], [1], [0, 0, 1, 1], [], []>} : vector<4x256xf32>, vector<256x256xf32>, vector<4x256xf32> -> vector<4x256xf32>
    %c1_42 = arith.constant 1 : index
    %c0_43 = arith.constant 0 : index
    %c0_44 = arith.constant 0 : index
    %43 = vector.load %arg6[%c1_42, %c0_43, %c0_44] : memref<4x4x8xf32, #tpu.memory_space<vmem>>, vector<1x4x8xf32>
    %44 = vector.shape_cast %43 : vector<1x4x8xf32> to vector<4x8xf32>
    %cst_45 = arith.constant dense<0.000000e+00> : vector<4x256xf32>
    %45 = tpu.matmul %44, %36, %cst_45 {dimension_numbers = #tpu.dot_dimension_numbers<[1], [0], [0], [1], [0, 0, 1, 1], [], []>} : vector<4x8xf32>, vector<8x256xf32>, vector<4x256xf32> -> vector<4x256xf32>
    %c1_46 = arith.constant 1 : index
    %c0_47 = arith.constant 0 : index
    %c0_48 = arith.constant 0 : index
    %46 = vector.load %arg5[%c1_46, %c0_47, %c0_48] : memref<4x256x256xf32, #tpu.memory_space<vmem>>, vector<1x256x256xf32>
    %47 = vector.shape_cast %46 : vector<1x256x256xf32> to vector<256x256xf32>
    %cst_49 = arith.constant dense<0.000000e+00> : vector<4x256xf32>
    %48 = tpu.matmul %45, %47, %cst_49 {dimension_numbers = #tpu.dot_dimension_numbers<[1], [0], [0], [1], [0, 0, 1, 1], [], []>} : vector<4x256xf32>, vector<256x256xf32>, vector<4x256xf32> -> vector<4x256xf32>
    %49 = arith.addf %42, %48 : vector<4x256xf32>
    %c2_50 = arith.constant 2 : index
    %c0_51 = arith.constant 0 : index
    %c0_52 = arith.constant 0 : index
    %50 = vector.load %arg6[%c2_50, %c0_51, %c0_52] : memref<4x4x8xf32, #tpu.memory_space<vmem>>, vector<1x4x8xf32>
    %51 = vector.shape_cast %50 : vector<1x4x8xf32> to vector<4x8xf32>
    %cst_53 = arith.constant dense<0.000000e+00> : vector<4x256xf32>
    %52 = tpu.matmul %51, %36, %cst_53 {dimension_numbers = #tpu.dot_dimension_numbers<[1], [0], [0], [1], [0, 0, 1, 1], [], []>} : vector<4x8xf32>, vector<8x256xf32>, vector<4x256xf32> -> vector<4x256xf32>
    %c2_54 = arith.constant 2 : index
    %c0_55 = arith.constant 0 : index
    %c0_56 = arith.constant 0 : index
    %53 = vector.load %arg5[%c2_54, %c0_55, %c0_56] : memref<4x256x256xf32, #tpu.memory_space<vmem>>, vector<1x256x256xf32>
    %54 = vector.shape_cast %53 : vector<1x256x256xf32> to vector<256x256xf32>
    %cst_57 = arith.constant dense<0.000000e+00> : vector<4x256xf32>
    %55 = tpu.matmul %52, %54, %cst_57 {dimension_numbers = #tpu.dot_dimension_numbers<[1], [0], [0], [1], [0, 0, 1, 1], [], []>} : vector<4x256xf32>, vector<256x256xf32>, vector<4x256xf32> -> vector<4x256xf32>
    %56 = arith.addf %49, %55 : vector<4x256xf32>
    %c3_58 = arith.constant 3 : index
    %c0_59 = arith.constant 0 : index
    %c0_60 = arith.constant 0 : index
    %57 = vector.load %arg6[%c3_58, %c0_59, %c0_60] : memref<4x4x8xf32, #tpu.memory_space<vmem>>, vector<1x4x8xf32>
    %58 = vector.shape_cast %57 : vector<1x4x8xf32> to vector<4x8xf32>
    %cst_61 = arith.constant dense<0.000000e+00> : vector<4x256xf32>
    %59 = tpu.matmul %58, %36, %cst_61 {dimension_numbers = #tpu.dot_dimension_numbers<[1], [0], [0], [1], [0, 0, 1, 1], [], []>} : vector<4x8xf32>, vector<8x256xf32>, vector<4x256xf32> -> vector<4x256xf32>
    %c3_62 = arith.constant 3 : index
    %c0_63 = arith.constant 0 : index
    %c0_64 = arith.constant 0 : index
    %60 = vector.load %arg5[%c3_62, %c0_63, %c0_64] : memref<4x256x256xf32, #tpu.memory_space<vmem>>, vector<1x256x256xf32>
    %61 = vector.shape_cast %60 : vector<1x256x256xf32> to vector<256x256xf32>
    %cst_65 = arith.constant dense<0.000000e+00> : vector<4x256xf32>
    %62 = tpu.matmul %59, %61, %cst_65 {dimension_numbers = #tpu.dot_dimension_numbers<[1], [0], [0], [1], [0, 0, 1, 1], [], []>} : vector<4x256xf32>, vector<256x256xf32>, vector<4x256xf32> -> vector<4x256xf32>
    %63 = arith.addf %56, %62 : vector<4x256xf32>
    %c0_66 = arith.constant 0 : index
    %c0_67 = arith.constant 0 : index
    %64 = vector.load %arg7[%c0_66, %c0_67] : memref<1x256xf32, #tpu.memory_space<vmem>>, vector<1x256xf32>
    %65 = vector.broadcast %64 : vector<1x256xf32> to vector<4x256xf32>
    %66 = arith.addf %63, %65 : vector<4x256xf32>
    %cst_68 = arith.constant 0.000000e+00 : f32
    %67 = vector.broadcast %cst_68 : f32 to vector<4x256xf32>
    %68 = arith.cmpf oge, %66, %67 : vector<4x256xf32>
    %cst_69 = arith.constant 1.000000e-01 : f32
    %69 = vector.broadcast %cst_69 : f32 to vector<4x256xf32>
    %70 = arith.mulf %69, %66 : vector<4x256xf32>
    %71 = arith.select %68, %66, %70 : vector<4x256xi1>, vector<4x256xf32>
    %c0_70 = arith.constant 0 : index
    %c0_71 = arith.constant 0 : index
    %c0_72 = arith.constant 0 : index
    %72 = vector.load %arg9[%c0_70, %c0_71, %c0_72] : memref<4x2x4xf32, #tpu.memory_space<vmem>>, vector<1x2x4xf32>
    %73 = vector.shape_cast %72 : vector<1x2x4xf32> to vector<2x4xf32>
    %cst_73 = arith.constant dense<0.000000e+00> : vector<2x256xf32>
    %74 = tpu.matmul %73, %71, %cst_73 {dimension_numbers = #tpu.dot_dimension_numbers<[1], [0], [0], [1], [0, 0, 1, 1], [], []>} : vector<2x4xf32>, vector<4x256xf32>, vector<2x256xf32> -> vector<2x256xf32>
    %c0_74 = arith.constant 0 : index
    %c0_75 = arith.constant 0 : index
    %c0_76 = arith.constant 0 : index
    %75 = vector.load %arg8[%c0_74, %c0_75, %c0_76] : memref<4x256x256xf32, #tpu.memory_space<vmem>>, vector<1x256x256xf32>
    %76 = vector.shape_cast %75 : vector<1x256x256xf32> to vector<256x256xf32>
    %cst_77 = arith.constant dense<0.000000e+00> : vector<2x256xf32>
    %77 = tpu.matmul %74, %76, %cst_77 {dimension_numbers = #tpu.dot_dimension_numbers<[1], [0], [0], [1], [0, 0, 1, 1], [], []>} : vector<2x256xf32>, vector<256x256xf32>, vector<2x256xf32> -> vector<2x256xf32>
    %c1_78 = arith.constant 1 : index
    %c0_79 = arith.constant 0 : index
    %c0_80 = arith.constant 0 : index
    %78 = vector.load %arg9[%c1_78, %c0_79, %c0_80] : memref<4x2x4xf32, #tpu.memory_space<vmem>>, vector<1x2x4xf32>
    %79 = vector.shape_cast %78 : vector<1x2x4xf32> to vector<2x4xf32>
    %cst_81 = arith.constant dense<0.000000e+00> : vector<2x256xf32>
    %80 = tpu.matmul %79, %71, %cst_81 {dimension_numbers = #tpu.dot_dimension_numbers<[1], [0], [0], [1], [0, 0, 1, 1], [], []>} : vector<2x4xf32>, vector<4x256xf32>, vector<2x256xf32> -> vector<2x256xf32>
    %c1_82 = arith.constant 1 : index
    %c0_83 = arith.constant 0 : index
    %c0_84 = arith.constant 0 : index
    %81 = vector.load %arg8[%c1_82, %c0_83, %c0_84] : memref<4x256x256xf32, #tpu.memory_space<vmem>>, vector<1x256x256xf32>
    %82 = vector.shape_cast %81 : vector<1x256x256xf32> to vector<256x256xf32>
    %cst_85 = arith.constant dense<0.000000e+00> : vector<2x256xf32>
    %83 = tpu.matmul %80, %82, %cst_85 {dimension_numbers = #tpu.dot_dimension_numbers<[1], [0], [0], [1], [0, 0, 1, 1], [], []>} : vector<2x256xf32>, vector<256x256xf32>, vector<2x256xf32> -> vector<2x256xf32>
    %84 = arith.addf %77, %83 : vector<2x256xf32>
    %c2_86 = arith.constant 2 : index
    %c0_87 = arith.constant 0 : index
    %c0_88 = arith.constant 0 : index
    %85 = vector.load %arg9[%c2_86, %c0_87, %c0_88] : memref<4x2x4xf32, #tpu.memory_space<vmem>>, vector<1x2x4xf32>
    %86 = vector.shape_cast %85 : vector<1x2x4xf32> to vector<2x4xf32>
    %cst_89 = arith.constant dense<0.000000e+00> : vector<2x256xf32>
    %87 = tpu.matmul %86, %71, %cst_89 {dimension_numbers = #tpu.dot_dimension_numbers<[1], [0], [0], [1], [0, 0, 1, 1], [], []>} : vector<2x4xf32>, vector<4x256xf32>, vector<2x256xf32> -> vector<2x256xf32>
    %c2_90 = arith.constant 2 : index
    %c0_91 = arith.constant 0 : index
    %c0_92 = arith.constant 0 : index
    %88 = vector.load %arg8[%c2_90, %c0_91, %c0_92] : memref<4x256x256xf32, #tpu.memory_space<vmem>>, vector<1x256x256xf32>
    %89 = vector.shape_cast %88 : vector<1x256x256xf32> to vector<256x256xf32>
    %cst_93 = arith.constant dense<0.000000e+00> : vector<2x256xf32>
    %90 = tpu.matmul %87, %89, %cst_93 {dimension_numbers = #tpu.dot_dimension_numbers<[1], [0], [0], [1], [0, 0, 1, 1], [], []>} : vector<2x256xf32>, vector<256x256xf32>, vector<2x256xf32> -> vector<2x256xf32>
    %91 = arith.addf %84, %90 : vector<2x256xf32>
    %c3_94 = arith.constant 3 : index
    %c0_95 = arith.constant 0 : index
    %c0_96 = arith.constant 0 : index
    %92 = vector.load %arg9[%c3_94, %c0_95, %c0_96] : memref<4x2x4xf32, #tpu.memory_space<vmem>>, vector<1x2x4xf32>
    %93 = vector.shape_cast %92 : vector<1x2x4xf32> to vector<2x4xf32>
    %cst_97 = arith.constant dense<0.000000e+00> : vector<2x256xf32>
    %94 = tpu.matmul %93, %71, %cst_97 {dimension_numbers = #tpu.dot_dimension_numbers<[1], [0], [0], [1], [0, 0, 1, 1], [], []>} : vector<2x4xf32>, vector<4x256xf32>, vector<2x256xf32> -> vector<2x256xf32>
    %c3_98 = arith.constant 3 : index
    %c0_99 = arith.constant 0 : index
    %c0_100 = arith.constant 0 : index
    %95 = vector.load %arg8[%c3_98, %c0_99, %c0_100] : memref<4x256x256xf32, #tpu.memory_space<vmem>>, vector<1x256x256xf32>
    %96 = vector.shape_cast %95 : vector<1x256x256xf32> to vector<256x256xf32>
    %cst_101 = arith.constant dense<0.000000e+00> : vector<2x256xf32>
    %97 = tpu.matmul %94, %96, %cst_101 {dimension_numbers = #tpu.dot_dimension_numbers<[1], [0], [0], [1], [0, 0, 1, 1], [], []>} : vector<2x256xf32>, vector<256x256xf32>, vector<2x256xf32> -> vector<2x256xf32>
    %98 = arith.addf %91, %97 : vector<2x256xf32>
    %c0_102 = arith.constant 0 : index
    %c0_103 = arith.constant 0 : index
    %99 = vector.load %arg10[%c0_102, %c0_103] : memref<1x256xf32, #tpu.memory_space<vmem>>, vector<1x256xf32>
    %100 = vector.broadcast %99 : vector<1x256xf32> to vector<2x256xf32>
    %101 = arith.addf %98, %100 : vector<2x256xf32>
    %cst_104 = arith.constant 0.000000e+00 : f32
    %102 = vector.broadcast %cst_104 : f32 to vector<2x256xf32>
    %103 = arith.cmpf oge, %101, %102 : vector<2x256xf32>
    %cst_105 = arith.constant 1.000000e-01 : f32
    %104 = vector.broadcast %cst_105 : f32 to vector<2x256xf32>
    %105 = arith.mulf %104, %101 : vector<2x256xf32>
    %106 = arith.select %103, %101, %105 : vector<2x256xi1>, vector<2x256xf32>
    %107 = vector.extract_strided_slice %106 {offsets = [0, 0], sizes = [1, 256], strides = [1, 1]} : vector<2x256xf32> to vector<1x256xf32>
    %c0_106 = arith.constant 0 : index
    %c0_107 = arith.constant 0 : index
    %c0_108 = arith.constant 0 : index
    %108 = vector.load %arg14[%c0_106, %c0_107, %c0_108] : memref<2x256x512xf32, #tpu.memory_space<vmem>>, vector<1x256x512xf32>
    %109 = vector.shape_cast %108 : vector<1x256x512xf32> to vector<256x512xf32>
    %cst_109 = arith.constant dense<0.000000e+00> : vector<1x512xf32>
    %110 = tpu.matmul %107, %109, %cst_109 {dimension_numbers = #tpu.dot_dimension_numbers<[1], [0], [0], [1], [0, 0, 1, 1], [], []>} : vector<1x256xf32>, vector<256x512xf32>, vector<1x512xf32> -> vector<1x512xf32>
    %111 = vector.extract_strided_slice %106 {offsets = [1, 0], sizes = [1, 256], strides = [1, 1]} : vector<2x256xf32> to vector<1x256xf32>
    %c1_110 = arith.constant 1 : index
    %c0_111 = arith.constant 0 : index
    %c0_112 = arith.constant 0 : index
    %112 = vector.load %arg14[%c1_110, %c0_111, %c0_112] : memref<2x256x512xf32, #tpu.memory_space<vmem>>, vector<1x256x512xf32>
    %113 = vector.shape_cast %112 : vector<1x256x512xf32> to vector<256x512xf32>
    %cst_113 = arith.constant dense<0.000000e+00> : vector<1x512xf32>
    %114 = tpu.matmul %111, %113, %cst_113 {dimension_numbers = #tpu.dot_dimension_numbers<[1], [0], [0], [1], [0, 0, 1, 1], [], []>} : vector<1x256xf32>, vector<256x512xf32>, vector<1x512xf32> -> vector<1x512xf32>
    %115 = arith.addf %110, %114 : vector<1x512xf32>
    %c0_114 = arith.constant 0 : index
    %c0_115 = arith.constant 0 : index
    %c0_116 = arith.constant 0 : index
    %116 = vector.load %arg12[%c0_114, %c0_115, %c0_116] : memref<4x1x2xf32, #tpu.memory_space<vmem>>, vector<1x1x2xf32>
    %117 = vector.shape_cast %116 : vector<1x1x2xf32> to vector<1x2xf32>
    %cst_117 = arith.constant dense<0.000000e+00> : vector<1x256xf32>
    %118 = tpu.matmul %117, %106, %cst_117 {dimension_numbers = #tpu.dot_dimension_numbers<[1], [0], [0], [1], [0, 0, 1, 1], [], []>} : vector<1x2xf32>, vector<2x256xf32>, vector<1x256xf32> -> vector<1x256xf32>
    %c0_118 = arith.constant 0 : index
    %c0_119 = arith.constant 0 : index
    %c0_120 = arith.constant 0 : index
    %119 = vector.load %arg11[%c0_118, %c0_119, %c0_120] : memref<4x1x256xf32, #tpu.memory_space<vmem>>, vector<1x1x256xf32>
    %120 = vector.shape_cast %119 : vector<1x1x256xf32> to vector<1x256xf32>
    %121 = arith.mulf %118, %120 : vector<1x256xf32>
    %cst_121 = arith.constant dense<0.000000e+00> : vector<1xf32>
    %122 = vector.multi_reduction <add>, %121, %cst_121 [1] : vector<1x256xf32> to vector<1xf32>
    %123 = vector.shape_cast %122 : vector<1xf32> to vector<1x1xf32>
    %c1_122 = arith.constant 1 : index
    %c0_123 = arith.constant 0 : index
    %c0_124 = arith.constant 0 : index
    %124 = vector.load %arg12[%c1_122, %c0_123, %c0_124] : memref<4x1x2xf32, #tpu.memory_space<vmem>>, vector<1x1x2xf32>
    %125 = vector.shape_cast %124 : vector<1x1x2xf32> to vector<1x2xf32>
    %cst_125 = arith.constant dense<0.000000e+00> : vector<1x256xf32>
    %126 = tpu.matmul %125, %106, %cst_125 {dimension_numbers = #tpu.dot_dimension_numbers<[1], [0], [0], [1], [0, 0, 1, 1], [], []>} : vector<1x2xf32>, vector<2x256xf32>, vector<1x256xf32> -> vector<1x256xf32>
    %c1_126 = arith.constant 1 : index
    %c0_127 = arith.constant 0 : index
    %c0_128 = arith.constant 0 : index
    %127 = vector.load %arg11[%c1_126, %c0_127, %c0_128] : memref<4x1x256xf32, #tpu.memory_space<vmem>>, vector<1x1x256xf32>
    %128 = vector.shape_cast %127 : vector<1x1x256xf32> to vector<1x256xf32>
    %129 = arith.mulf %126, %128 : vector<1x256xf32>
    %cst_129 = arith.constant dense<0.000000e+00> : vector<1xf32>
    %130 = vector.multi_reduction <add>, %129, %cst_129 [1] : vector<1x256xf32> to vector<1xf32>
    %131 = vector.shape_cast %130 : vector<1xf32> to vector<1x1xf32>
    %132 = arith.addf %123, %131 : vector<1x1xf32>
    %c2_130 = arith.constant 2 : index
    %c0_131 = arith.constant 0 : index
    %c0_132 = arith.constant 0 : index
    %133 = vector.load %arg12[%c2_130, %c0_131, %c0_132] : memref<4x1x2xf32, #tpu.memory_space<vmem>>, vector<1x1x2xf32>
    %134 = vector.shape_cast %133 : vector<1x1x2xf32> to vector<1x2xf32>
    %cst_133 = arith.constant dense<0.000000e+00> : vector<1x256xf32>
    %135 = tpu.matmul %134, %106, %cst_133 {dimension_numbers = #tpu.dot_dimension_numbers<[1], [0], [0], [1], [0, 0, 1, 1], [], []>} : vector<1x2xf32>, vector<2x256xf32>, vector<1x256xf32> -> vector<1x256xf32>
    %c2_134 = arith.constant 2 : index
    %c0_135 = arith.constant 0 : index
    %c0_136 = arith.constant 0 : index
    %136 = vector.load %arg11[%c2_134, %c0_135, %c0_136] : memref<4x1x256xf32, #tpu.memory_space<vmem>>, vector<1x1x256xf32>
    %137 = vector.shape_cast %136 : vector<1x1x256xf32> to vector<1x256xf32>
    %138 = arith.mulf %135, %137 : vector<1x256xf32>
    %cst_137 = arith.constant dense<0.000000e+00> : vector<1xf32>
    %139 = vector.multi_reduction <add>, %138, %cst_137 [1] : vector<1x256xf32> to vector<1xf32>
    %140 = vector.shape_cast %139 : vector<1xf32> to vector<1x1xf32>
    %141 = arith.addf %132, %140 : vector<1x1xf32>
    %c3_138 = arith.constant 3 : index
    %c0_139 = arith.constant 0 : index
    %c0_140 = arith.constant 0 : index
    %142 = vector.load %arg12[%c3_138, %c0_139, %c0_140] : memref<4x1x2xf32, #tpu.memory_space<vmem>>, vector<1x1x2xf32>
    %143 = vector.shape_cast %142 : vector<1x1x2xf32> to vector<1x2xf32>
    %cst_141 = arith.constant dense<0.000000e+00> : vector<1x256xf32>
    %144 = tpu.matmul %143, %106, %cst_141 {dimension_numbers = #tpu.dot_dimension_numbers<[1], [0], [0], [1], [0, 0, 1, 1], [], []>} : vector<1x2xf32>, vector<2x256xf32>, vector<1x256xf32> -> vector<1x256xf32>
    %c3_142 = arith.constant 3 : index
    %c0_143 = arith.constant 0 : index
    %c0_144 = arith.constant 0 : index
    %145 = vector.load %arg11[%c3_142, %c0_143, %c0_144] : memref<4x1x256xf32, #tpu.memory_space<vmem>>, vector<1x1x256xf32>
    %146 = vector.shape_cast %145 : vector<1x1x256xf32> to vector<1x256xf32>
    %147 = arith.mulf %144, %146 : vector<1x256xf32>
    %cst_145 = arith.constant dense<0.000000e+00> : vector<1xf32>
    %148 = vector.multi_reduction <add>, %147, %cst_145 [1] : vector<1x256xf32> to vector<1xf32>
    %149 = vector.shape_cast %148 : vector<1xf32> to vector<1x1xf32>
    %150 = arith.addf %141, %149 : vector<1x1xf32>
    %c0_146 = arith.constant 0 : index
    %c0_147 = arith.constant 0 : index
    %151 = vector.load %arg13[%c0_146, %c0_147] : memref<1x1xf32, #tpu.memory_space<vmem>>, vector<1x1xf32>
    %152 = arith.addf %150, %151 : vector<1x1xf32>
    %c0_148 = arith.constant 0 : index
    %c0_149 = arith.constant 0 : index
    %c0_150 = arith.constant 0 : index
    %153 = vector.load %arg15[%c0_148, %c0_149, %c0_150] : memref<1x1x1xf32, #tpu.memory_space<vmem>>, vector<1x1x1xf32>
    %154 = vector.shape_cast %153 : vector<1x1x1xf32> to vector<1x1xf32>
    %155 = vector.shape_cast %152 : vector<1x1xf32> to vector<1x1x1xf32>
    tpu.vector_store %arg15[%c0_148, %c0_149, %c0_150], %155 {strides = array<i32>} : memref<1x1x1xf32, #tpu.memory_space<vmem>>, vector<1x1x1xf32>,
    %c0_151 = arith.constant 0 : index
    %c0_152 = arith.constant 0 : index
    %c0_153 = arith.constant 0 : index
    %156 = vector.load %arg16[%c0_151, %c0_152, %c0_153] : memref<1x1x512xf32, #tpu.memory_space<vmem>>, vector<1x1x512xf32>
    %157 = vector.shape_cast %156 : vector<1x1x512xf32> to vector<1x512xf32>
    %158 = vector.shape_cast %115 : vector<1x512xf32> to vector<1x1x512xf32>
    tpu.vector_store %arg16[%c0_151, %c0_152, %c0_153], %158 {strides = array<i32>} : memref<1x1x512xf32, #tpu.memory_space<vmem>>, vector<1x1x512xf32>,
    return
  }
  func.func @transform_0(%arg0: i32) -> (i32, i32, i32) {
    %c0_i32 = arith.constant 0 : i32
    %c0_i32_0 = arith.constant 0 : i32
    %c0_i32_1 = arith.constant 0 : i32
    return %arg0, %c0_i32, %c0_i32_0 : i32, i32, i32
  }
  func.func @transform_1(%arg0: i32) -> (i32, i32, i32) {
    %c0_i32 = arith.constant 0 : i32
    %c0_i32_0 = arith.constant 0 : i32
    %c0_i32_1 = arith.constant 0 : i32
    %c0_i32_2 = arith.constant 0 : i32
    return %c0_i32, %c0_i32_0, %c0_i32_1 : i32, i32, i32
  }
  func.func @transform_2(%arg0: i32) -> (i32, i32, i32) {
    %c0_i32 = arith.constant 0 : i32
    %c0_i32_0 = arith.constant 0 : i32
    %c0_i32_1 = arith.constant 0 : i32
    %c0_i32_2 = arith.constant 0 : i32
    return %c0_i32, %c0_i32_0, %c0_i32_1 : i32, i32, i32
  }
  func.func @transform_3(%arg0: i32) -> (i32, i32) {
    %c0_i32 = arith.constant 0 : i32
    %c0_i32_0 = arith.constant 0 : i32
    %c0_i32_1 = arith.constant 0 : i32
    return %c0_i32, %c0_i32_0 : i32, i32
  }
  func.func @transform_4(%arg0: i32) -> (i32, i32, i32) {
    %c0_i32 = arith.constant 0 : i32
    %c0_i32_0 = arith.constant 0 : i32
    %c0_i32_1 = arith.constant 0 : i32
    %c0_i32_2 = arith.constant 0 : i32
    return %c0_i32, %c0_i32_0, %c0_i32_1 : i32, i32, i32
  }
  func.func @transform_5(%arg0: i32) -> (i32, i32, i32) {
    %c0_i32 = arith.constant 0 : i32
    %c0_i32_0 = arith.constant 0 : i32
    %c0_i32_1 = arith.constant 0 : i32
    %c0_i32_2 = arith.constant 0 : i32
    return %c0_i32, %c0_i32_0, %c0_i32_1 : i32, i32, i32
  }
  func.func @transform_6(%arg0: i32) -> (i32, i32) {
    %c0_i32 = arith.constant 0 : i32
    %c0_i32_0 = arith.constant 0 : i32
    %c0_i32_1 = arith.constant 0 : i32
    return %c0_i32, %c0_i32_0 : i32, i32
  }
  func.func @transform_7(%arg0: i32) -> (i32, i32, i32) {
    %c0_i32 = arith.constant 0 : i32
    %c0_i32_0 = arith.constant 0 : i32
    %c0_i32_1 = arith.constant 0 : i32
    %c0_i32_2 = arith.constant 0 : i32
    return %c0_i32, %c0_i32_0, %c0_i32_1 : i32, i32, i32
  }
  func.func @transform_8(%arg0: i32) -> (i32, i32, i32) {
    %c0_i32 = arith.constant 0 : i32
    %c0_i32_0 = arith.constant 0 : i32
    %c0_i32_1 = arith.constant 0 : i32
    %c0_i32_2 = arith.constant 0 : i32
    return %c0_i32, %c0_i32_0, %c0_i32_1 : i32, i32, i32
  }
  func.func @transform_9(%arg0: i32) -> (i32, i32) {
    %c0_i32 = arith.constant 0 : i32
    %c0_i32_0 = arith.constant 0 : i32
    %c0_i32_1 = arith.constant 0 : i32
    return %c0_i32, %c0_i32_0 : i32, i32
  }
  func.func @transform_10(%arg0: i32) -> (i32, i32, i32) {
    %c0_i32 = arith.constant 0 : i32
    %c0_i32_0 = arith.constant 0 : i32
    %c0_i32_1 = arith.constant 0 : i32
    %c0_i32_2 = arith.constant 0 : i32
    return %c0_i32, %c0_i32_0, %c0_i32_1 : i32, i32, i32
  }
  func.func @transform_11(%arg0: i32) -> (i32, i32, i32) {
    %c0_i32 = arith.constant 0 : i32
    %c0_i32_0 = arith.constant 0 : i32
    %c0_i32_1 = arith.constant 0 : i32
    %c0_i32_2 = arith.constant 0 : i32
    return %c0_i32, %c0_i32_0, %c0_i32_1 : i32, i32, i32
  }
  func.func @transform_12(%arg0: i32) -> (i32, i32) {
    %c0_i32 = arith.constant 0 : i32
    %c0_i32_0 = arith.constant 0 : i32
    %c0_i32_1 = arith.constant 0 : i32
    return %c0_i32, %c0_i32_0 : i32, i32
  }
  func.func @transform_13(%arg0: i32) -> (i32, i32, i32) {
    %c0_i32 = arith.constant 0 : i32
    %c0_i32_0 = arith.constant 0 : i32
    %c0_i32_1 = arith.constant 0 : i32
    %c0_i32_2 = arith.constant 0 : i32
    return %c0_i32, %c0_i32_0, %c0_i32_1 : i32, i32, i32
  }
  func.func @transform_14(%arg0: i32) -> (i32, i32, i32) {
    %c0_i32 = arith.constant 0 : i32
    %c0_i32_0 = arith.constant 0 : i32
    %c0_i32_1 = arith.constant 0 : i32
    return %arg0, %c0_i32, %c0_i32_0 : i32, i32, i32
  }
  func.func @transform_15(%arg0: i32) -> (i32, i32, i32) {
    %c0_i32 = arith.constant 0 : i32
    %c0_i32_0 = arith.constant 0 : i32
    %c0_i32_1 = arith.constant 0 : i32
    return %arg0, %c0_i32, %c0_i32_0 : i32, i32, i32
  }
}

</mosaic_0001>

<llo_original>
// kernel: discriminator_forward.1
$region0: #{discriminator_forward.1}
  #allocation0 [shape = 'u32[]', space=smem, size = 0x4, offset = 0x4, fixed_abs, tag = 'smem constant byte address 0x4 - core index']
  #allocation1 [shape = 'u32[72,128]{1,0:T(1,128)}', space=vmem, size = 0x9000, scoped, tag = 'internal scratch']
  #allocation2 [shape = 'f32[1,1]{1,0:T(1,128)S(1)}', space=vmem, size = 0x200, scoped, tag = 'scoped memory for discriminator_forward.1']
  %s0 = inlined_call_operand.hbm [shape: f32[2,16,16], index: 0, kind: input, shape index: {}]
  %s1 = inlined_call_operand.hbm [shape: f32[4,16,256], index: 1, kind: input, shape index: {}]
  %s2 = inlined_call_operand.hbm [shape: f32[4,8,16], index: 2, kind: input, shape index: {}]
  %s3 = inlined_call_operand.vmem [shape: f32[1,256], index: 3, kind: input, shape index: {}]
  %s4 = inlined_call_operand.hbm [shape: f32[4,256,256], index: 4, kind: input, shape index: {}]
  %s5 = inlined_call_operand.hbm [shape: f32[4,4,8], index: 5, kind: input, shape index: {}]
  %s6 = inlined_call_operand.vmem [shape: f32[1,256], index: 6, kind: input, shape index: {}]
  %s7 = inlined_call_operand.hbm [shape: f32[4,256,256], index: 7, kind: input, shape index: {}]
  %s8 = inlined_call_operand.hbm [shape: f32[4,2,4], index: 8, kind: input, shape index: {}]
  %s9 = inlined_call_operand.vmem [shape: f32[1,256], index: 9, kind: input, shape index: {}]
  %s10 = inlined_call_operand.vmem [shape: f32[4,1,256], index: 10, kind: input, shape index: {}]
  %s11 = inlined_call_operand.vmem [shape: f32[4,1,2], index: 11, kind: input, shape index: {}]
  %s12 = inlined_call_operand.<no memory space> [shape: f32[1,1], index: 12, kind: input, shape index: {}]
  %s13 = inlined_call_operand.hbm [shape: f32[2,256,512], index: 13, kind: input, shape index: {}]
  %s14 = inlined_call_operand.vmem [shape: f32[2,1,1], index: 14, kind: output, shape index: {0}]
  %s15 = inlined_call_operand.vmem [shape: f32[2,1,512], index: 15, kind: output, shape index: {1}]
  %16 = xla_tuple %s14, %s15
  %s17 = sld [smem:[#allocation0]]
  $region129: #{discriminator_forward.1} parent=0
    _
  %s19 = ssub.s32 1, %s17
  %s20 = scalar_select 0, %s19, %s17
  %v21 = vstv %s12
  %22 = vst [vmem:[#allocation2] sm:$0x1] %v21
  $region1: #{discriminator_forward.1} parent=0
    #allocation3 [shape = 'u8[16384]{0}', space=vmem, size = 0x4000, scoped, tag = 'input window, operand 0']
    #allocation4 [shape = 's32[2]{0}', space=sflag, size = 0x8, scoped, tag = 'scoped memory for discriminator_forward.1']
    #allocation5 [shape = 'u8[65536]{0}', space=vmem, size = 0x10000, scoped, tag = 'input window, operand 1, single buffered']
    #allocation6 [shape = 's32[1]{0}', space=sflag, size = 0x4, scoped, tag = 'scoped memory for discriminator_forward.1']
    #allocation7 [shape = 'u8[16384]{0}', space=vmem, size = 0x4000, scoped, tag = 'input window, operand 2, single buffered']
    #allocation8 [shape = 'u8[1048576]{0}', space=vmem, size = 0x100000, scoped, tag = 'input window, operand 4, single buffered']
    #allocation9 [shape = 's32[1]{0}', space=sflag, size = 0x4, scoped, tag = 'scoped memory for discriminator_forward.1']
    #allocation10 [shape = 'u8[8192]{0}', space=vmem, size = 0x2000, scoped, tag = 'input window, operand 5, single buffered']
    #allocation11 [shape = 'u8[1048576]{0}', space=vmem, size = 0x100000, scoped, tag = 'input window, operand 7, single buffered']
    #allocation12 [shape = 's32[1]{0}', space=sflag, size = 0x4, scoped, tag = 'scoped memory for discriminator_forward.1']
    #allocation13 [shape = 'u8[4096]{0}', space=vmem, size = 0x1000, scoped, tag = 'input window, operand 8, single buffered']
    #allocation14 [shape = 'u8[1048576]{0}', space=vmem, size = 0x100000, scoped, tag = 'input window, operand 13, single buffered']
    #allocation15 [shape = 's32[1]{0}', space=sflag, size = 0x4, scoped, tag = 'scoped memory for discriminator_forward.1']
    %23 = vsyncpa [#allocation4], 0
    %s24 = scalar_lea.sflag [#allocation4], 1
    %25 = vsyncpa %s24, 0
    %26 = vsyncpa [#allocation6], 0
    %27 = vsyncpa [#allocation9], 0
    %28 = vsyncpa [#allocation12], 0
    %29 = vsyncpa [#allocation15], 0
    loop: start=0, step=1, limit=4
    $region2: #{discriminator_forward.1} parent=1 // loop_pre_header
      _
    $region3: #{discriminator_forward.1} parent=1 // loop_header
      %s31 = sphi 0, %s35
      %p32 = scmp.ge.s32.totalorder %s31, 4
      %s41 = sphi 0, %s43
      %s44 = sphi 0, %s41
      %s45 = sphi 0, %s44
      %s61 = sphi 0, %s45
      %s65 = sphi 0, %s65
      %s67 = sphi 0, %s65
      %s68 = sphi 0, %s67
      %s82 = sphi 0, %s68
      %s86 = sphi 0, %s86
      %s88 = sphi 0, %s86
      %s89 = sphi 0, %s88
      %s103 = sphi 0, %s89
      %s107 = sphi 0, %s107
      %s109 = sphi 0, %s107
      %s110 = sphi 0, %s109
      %s124 = sphi 0, %s110
      %s128 = sphi 0, %s128
      %s130 = sphi 0, %s128
      %s131 = sphi 0, %s130
      %s145 = sphi 0, %s131
      %s149 = sphi 0, %s149
      %s151 = sphi 0, %s149
      %s152 = sphi 0, %s151
      %s166 = sphi 0, %s152
      %s170 = sphi 0, %s170
      %s172 = sphi 0, %s170
      %s173 = sphi 0, %s172
      %s187 = sphi 0, %s173
      %s191 = sphi 0, %s191
      %s193 = sphi 0, %s191
      %s194 = sphi 0, %s193
      %s208 = sphi 0, %s194
      %s212 = sphi 0, %s212
      %s214 = sphi 0, %s212
      %s215 = sphi 0, %s214
      %s229 = sphi 0, %s215
      %s233 = sphi 0, %s233
      %s235 = sphi 0, %s233
      %s236 = sphi 0, %s235
      %s250 = sphi 0, %s236
      %s254 = sphi 0, %s254
      %s256 = sphi 0, %s254
      %s257 = sphi 0, %s256
      %s271 = sphi 0, %s257
      %s275 = sphi 0, %s275
      %s277 = sphi 0, %s275
      %s278 = sphi 0, %s277
      %s292 = sphi 0, %s278
      %s296 = sphi 0, %s296
      %s298 = sphi 0, %s296
      %s299 = sphi 0, %s298
      %s313 = sphi 0, %s299
      %s317 = sphi 0, %s317
      %s319 = sphi 0, %s317
      %s320 = sphi 0, %s319
      %s334 = sphi 0, %s320
      %s340 = sphi 0, %s342
      %s343 = sphi 0, %s340
      %s344 = sphi 0, %s343
      %s360 = sphi 0, %s344
      %s366 = sphi 0, %s368
      %s369 = sphi 0, %s366
      %s370 = sphi 0, %s369
      %s386 = sphi 0, %s370
    $region4: #{discriminator_forward.1} parent=1 // loop_header_branch
      %34 = sbr.rel (%p32) target = $region8
    $region5: #{discriminator_forward.1} parent=1 // loop_body
      %s36 = ssub.s32 %s31, 1
      %s37 = ssub.s32 %s31, 2
      %s38 = sadd.s32 %s31, 1
      %s39 = ssub.s32 %s31, %s38
      %p40 = scmp.eq.s32.totalorder %s39, 0
      %s42 = sadd.s32 %s41, 1
      %s43 = scalar_select %p40, %s41, %s42
      %p46 = pneg %p40
      %p47 = scmp.eq.s32.totalorder %s31, 1
      %p48 = por %p46, %p47
      %p49 = scmp.ne.s32.totalorder %s41, %s44
      %p50 = scmp.eq.s32.totalorder %s31, 0
      %p51 = por %p49, %p50
      %p52 = scmp.ne.s32.totalorder %s41, %s44
      %p53 = scmp.eq.s32.totalorder %s36, 1
      %p54 = por %p52, %p53
      %p55 = scmp.ne.s32.totalorder %s44, %s45
      %p56 = scmp.eq.s32.totalorder %s36, 0
      %p57 = por %p55, %p56
      %p58 = scmp.ne.s32.totalorder %s44, %s45
      %p59 = scmp.eq.s32.totalorder %s37, 1
      %p60 = por %p58, %p59
      %p62 = scmp.ne.s32.totalorder %s45, %s61
      %p63 = scmp.eq.s32.totalorder %s37, 0
      %p64 = por %p62, %p63
      %s66 = sadd.s32 %s65, 1
      %p69 = scmp.eq.s32.totalorder %s31, 1
      %p70 = scmp.ne.s32.totalorder %s65, %s67
      %p71 = scmp.eq.s32.totalorder %s31, 0
      %p72 = por %p70, %p71
      %p73 = scmp.ne.s32.totalorder %s65, %s67
      %p74 = scmp.eq.s32.totalorder %s36, 1
      %p75 = por %p73, %p74
      %p76 = scmp.ne.s32.totalorder %s67, %s68
      %p77 = scmp.eq.s32.totalorder %s36, 0
      %p78 = por %p76, %p77
      %p79 = scmp.ne.s32.totalorder %s67, %s68
      %p80 = scmp.eq.s32.totalorder %s37, 1
      %p81 = por %p79, %p80
      %p83 = scmp.ne.s32.totalorder %s68, %s82
      %p84 = scmp.eq.s32.totalorder %s37, 0
      %p85 = por %p83, %p84
      %s87 = sadd.s32 %s86, 1
      %p90 = scmp.eq.s32.totalorder %s31, 1
      %p91 = scmp.ne.s32.totalorder %s86, %s88
      %p92 = scmp.eq.s32.totalorder %s31, 0
      %p93 = por %p91, %p92
      %p94 = scmp.ne.s32.totalorder %s86, %s88
      %p95 = scmp.eq.s32.totalorder %s36, 1
      %p96 = por %p94, %p95
      %p97 = scmp.ne.s32.totalorder %s88, %s89
      %p98 = scmp.eq.s32.totalorder %s36, 0
      %p99 = por %p97, %p98
      %p100 = scmp.ne.s32.totalorder %s88, %s89
      %p101 = scmp.eq.s32.totalorder %s37, 1
      %p102 = por %p100, %p101
      %p104 = scmp.ne.s32.totalorder %s89, %s103
      %p105 = scmp.eq.s32.totalorder %s37, 0
      %p106 = por %p104, %p105
      %s108 = sadd.s32 %s107, 1
      %p111 = scmp.eq.s32.totalorder %s31, 1
      %p112 = scmp.ne.s32.totalorder %s107, %s109
      %p113 = scmp.eq.s32.totalorder %s31, 0
      %p114 = por %p112, %p113
      %p115 = scmp.ne.s32.totalorder %s107, %s109
      %p116 = scmp.eq.s32.totalorder %s36, 1
      %p117 = por %p115, %p116
      %p118 = scmp.ne.s32.totalorder %s109, %s110
      %p119 = scmp.eq.s32.totalorder %s36, 0
      %p120 = por %p118, %p119
      %p121 = scmp.ne.s32.totalorder %s109, %s110
      %p122 = scmp.eq.s32.totalorder %s37, 1
      %p123 = por %p121, %p122
      %p125 = scmp.ne.s32.totalorder %s110, %s124
      %p126 = scmp.eq.s32.totalorder %s37, 0
      %p127 = por %p125, %p126
      %s129 = sadd.s32 %s128, 1
      %p132 = scmp.eq.s32.totalorder %s31, 1
      %p133 = scmp.ne.s32.totalorder %s128, %s130
      %p134 = scmp.eq.s32.totalorder %s31, 0
      %p135 = por %p133, %p134
      %p136 = scmp.ne.s32.totalorder %s128, %s130
      %p137 = scmp.eq.s32.totalorder %s36, 1
      %p138 = por %p136, %p137
      %p139 = scmp.ne.s32.totalorder %s130, %s131
      %p140 = scmp.eq.s32.totalorder %s36, 0
      %p141 = por %p139, %p140
      %p142 = scmp.ne.s32.totalorder %s130, %s131
      %p143 = scmp.eq.s32.totalorder %s37, 1
      %p144 = por %p142, %p143
      %p146 = scmp.ne.s32.totalorder %s131, %s145
      %p147 = scmp.eq.s32.totalorder %s37, 0
      %p148 = por %p146, %p147
      %s150 = sadd.s32 %s149, 1
      %p153 = scmp.eq.s32.totalorder %s31, 1
      %p154 = scmp.ne.s32.totalorder %s149, %s151
      %p155 = scmp.eq.s32.totalorder %s31, 0
      %p156 = por %p154, %p155
      %p157 = scmp.ne.s32.totalorder %s149, %s151
      %p158 = scmp.eq.s32.totalorder %s36, 1
      %p159 = por %p157, %p158
      %p160 = scmp.ne.s32.totalorder %s151, %s152
      %p161 = scmp.eq.s32.totalorder %s36, 0
      %p162 = por %p160, %p161
      %p163 = scmp.ne.s32.totalorder %s151, %s152
      %p164 = scmp.eq.s32.totalorder %s37, 1
      %p165 = por %p163, %p164
      %p167 = scmp.ne.s32.totalorder %s152, %s166
      %p168 = scmp.eq.s32.totalorder %s37, 0
      %p169 = por %p167, %p168
      %s171 = sadd.s32 %s170, 1
      %p174 = scmp.eq.s32.totalorder %s31, 1
      %p175 = scmp.ne.s32.totalorder %s170, %s172
      %p176 = scmp.eq.s32.totalorder %s31, 0
      %p177 = por %p175, %p176
      %p178 = scmp.ne.s32.totalorder %s170, %s172
      %p179 = scmp.eq.s32.totalorder %s36, 1
      %p180 = por %p178, %p179
      %p181 = scmp.ne.s32.totalorder %s172, %s173
      %p182 = scmp.eq.s32.totalorder %s36, 0
      %p183 = por %p181, %p182
      %p184 = scmp.ne.s32.totalorder %s172, %s173
      %p185 = scmp.eq.s32.totalorder %s37, 1
      %p186 = por %p184, %p185
      %p188 = scmp.ne.s32.totalorder %s173, %s187
      %p189 = scmp.eq.s32.totalorder %s37, 0
      %p190 = por %p188, %p189
      %s192 = sadd.s32 %s191, 1
      %p195 = scmp.eq.s32.totalorder %s31, 1
      %p196 = scmp.ne.s32.totalorder %s191, %s193
      %p197 = scmp.eq.s32.totalorder %s31, 0
      %p198 = por %p196, %p197
      %p199 = scmp.ne.s32.totalorder %s191, %s193
      %p200 = scmp.eq.s32.totalorder %s36, 1
      %p201 = por %p199, %p200
      %p202 = scmp.ne.s32.totalorder %s193, %s194
      %p203 = scmp.eq.s32.totalorder %s36, 0
      %p204 = por %p202, %p203
      %p205 = scmp.ne.s32.totalorder %s193, %s194
      %p206 = scmp.eq.s32.totalorder %s37, 1
      %p207 = por %p205, %p206
      %p209 = scmp.ne.s32.totalorder %s194, %s208
      %p210 = scmp.eq.s32.totalorder %s37, 0
      %p211 = por %p209, %p210
      %s213 = sadd.s32 %s212, 1
      %p216 = scmp.eq.s32.totalorder %s31, 1
      %p217 = scmp.ne.s32.totalorder %s212, %s214
      %p218 = scmp.eq.s32.totalorder %s31, 0
      %p219 = por %p217, %p218
      %p220 = scmp.ne.s32.totalorder %s212, %s214
      %p221 = scmp.eq.s32.totalorder %s36, 1
      %p222 = por %p220, %p221
      %p223 = scmp.ne.s32.totalorder %s214, %s215
      %p224 = scmp.eq.s32.totalorder %s36, 0
      %p225 = por %p223, %p224
      %p226 = scmp.ne.s32.totalorder %s214, %s215
      %p227 = scmp.eq.s32.totalorder %s37, 1
      %p228 = por %p226, %p227
      %p230 = scmp.ne.s32.totalorder %s215, %s229
      %p231 = scmp.eq.s32.totalorder %s37, 0
      %p232 = por %p230, %p231
      %s234 = sadd.s32 %s233, 1
      %p237 = scmp.eq.s32.totalorder %s31, 1
      %p238 = scmp.ne.s32.totalorder %s233, %s235
      %p239 = scmp.eq.s32.totalorder %s31, 0
      %p240 = por %p238, %p239
      %p241 = scmp.ne.s32.totalorder %s233, %s235
      %p242 = scmp.eq.s32.totalorder %s36, 1
      %p243 = por %p241, %p242
      %p244 = scmp.ne.s32.totalorder %s235, %s236
      %p245 = scmp.eq.s32.totalorder %s36, 0
      %p246 = por %p244, %p245
      %p247 = scmp.ne.s32.totalorder %s235, %s236
      %p248 = scmp.eq.s32.totalorder %s37, 1
      %p249 = por %p247, %p248
      %p251 = scmp.ne.s32.totalorder %s236, %s250
      %p252 = scmp.eq.s32.totalorder %s37, 0
      %p253 = por %p251, %p252
      %s255 = sadd.s32 %s254, 1
      %p258 = scmp.eq.s32.totalorder %s31, 1
      %p259 = scmp.ne.s32.totalorder %s254, %s256
      %p260 = scmp.eq.s32.totalorder %s31, 0
      %p261 = por %p259, %p260
      %p262 = scmp.ne.s32.totalorder %s254, %s256
      %p263 = scmp.eq.s32.totalorder %s36, 1
      %p264 = por %p262, %p263
      %p265 = scmp.ne.s32.totalorder %s256, %s257
      %p266 = scmp.eq.s32.totalorder %s36, 0
      %p267 = por %p265, %p266
      %p268 = scmp.ne.s32.totalorder %s256, %s257
      %p269 = scmp.eq.s32.totalorder %s37, 1
      %p270 = por %p268, %p269
      %p272 = scmp.ne.s32.totalorder %s257, %s271
      %p273 = scmp.eq.s32.totalorder %s37, 0
      %p274 = por %p272, %p273
      %s276 = sadd.s32 %s275, 1
      %p279 = scmp.eq.s32.totalorder %s31, 1
      %p280 = scmp.ne.s32.totalorder %s275, %s277
      %p281 = scmp.eq.s32.totalorder %s31, 0
      %p282 = por %p280, %p281
      %p283 = scmp.ne.s32.totalorder %s275, %s277
      %p284 = scmp.eq.s32.totalorder %s36, 1
      %p285 = por %p283, %p284
      %p286 = scmp.ne.s32.totalorder %s277, %s278
      %p287 = scmp.eq.s32.totalorder %s36, 0
      %p288 = por %p286, %p287
      %p289 = scmp.ne.s32.totalorder %s277, %s278
      %p290 = scmp.eq.s32.totalorder %s37, 1
      %p291 = por %p289, %p290
      %p293 = scmp.ne.s32.totalorder %s278, %s292
      %p294 = scmp.eq.s32.totalorder %s37, 0
      %p295 = por %p293, %p294
      %s297 = sadd.s32 %s296, 1
      %p300 = scmp.eq.s32.totalorder %s31, 1
      %p301 = scmp.ne.s32.totalorder %s296, %s298
      %p302 = scmp.eq.s32.totalorder %s31, 0
      %p303 = por %p301, %p302
      %p304 = scmp.ne.s32.totalorder %s296, %s298
      %p305 = scmp.eq.s32.totalorder %s36, 1
      %p306 = por %p304, %p305
      %p307 = scmp.ne.s32.totalorder %s298, %s299
      %p308 = scmp.eq.s32.totalorder %s36, 0
      %p309 = por %p307, %p308
      %p310 = scmp.ne.s32.totalorder %s298, %s299
      %p311 = scmp.eq.s32.totalorder %s37, 1
      %p312 = por %p310, %p311
      %p314 = scmp.ne.s32.totalorder %s299, %s313
      %p315 = scmp.eq.s32.totalorder %s37, 0
      %p316 = por %p314, %p315
      %s318 = sadd.s32 %s317, 1
      %p321 = scmp.eq.s32.totalorder %s31, 1
      %p322 = scmp.ne.s32.totalorder %s317, %s319
      %p323 = scmp.eq.s32.totalorder %s31, 0
      %p324 = por %p322, %p323
      %p325 = scmp.ne.s32.totalorder %s317, %s319
      %p326 = scmp.eq.s32.totalorder %s36, 1
      %p327 = por %p325, %p326
      %p328 = scmp.ne.s32.totalorder %s319, %s320
      %p329 = scmp.eq.s32.totalorder %s36, 0
      %p330 = por %p328, %p329
      %p331 = scmp.ne.s32.totalorder %s319, %s320
      %p332 = scmp.eq.s32.totalorder %s37, 1
      %p333 = por %p331, %p332
      %p335 = scmp.ne.s32.totalorder %s320, %s334
      %p336 = scmp.eq.s32.totalorder %s37, 0
      %p337 = por %p335, %p336
      %s338 = ssub.s32 %s31, %s38
      %p339 = scmp.eq.s32.totalorder %s338, 0
      %s341 = sadd.s32 %s340, 1
      %s342 = scalar_select %p339, %s340, %s341
      %p345 = pneg %p339
      %p346 = scmp.eq.s32.totalorder %s31, 1
      %p347 = por %p345, %p346
      %p348 = scmp.ne.s32.totalorder %s340, %s343
      %p349 = scmp.eq.s32.totalorder %s31, 0
      %p350 = por %p348, %p349
      %p351 = scmp.ne.s32.totalorder %s340, %s343
      %p352 = scmp.eq.s32.totalorder %s36, 1
      %p353 = por %p351, %p352
      %p354 = scmp.ne.s32.totalorder %s343, %s344
      %p355 = scmp.eq.s32.totalorder %s36, 0
      %p356 = por %p354, %p355
      %p357 = scmp.ne.s32.totalorder %s343, %s344
      %p358 = scmp.eq.s32.totalorder %s37, 1
      %p359 = por %p357, %p358
      %p361 = scmp.ne.s32.totalorder %s344, %s360
      %p362 = scmp.eq.s32.totalorder %s37, 0
      %p363 = por %p361, %p362
      %s364 = ssub.s32 %s31, %s38
      %p365 = scmp.eq.s32.totalorder %s364, 0
      %s367 = sadd.s32 %s366, 1
      %s368 = scalar_select %p365, %s366, %s367
      %p371 = pneg %p365
      %p372 = scmp.eq.s32.totalorder %s31, 1
      %p373 = por %p371, %p372
      %p374 = scmp.ne.s32.totalorder %s366, %s369
      %p375 = scmp.eq.s32.totalorder %s31, 0
      %p376 = por %p374, %p375
      %p377 = scmp.ne.s32.totalorder %s366, %s369
      %p378 = scmp.eq.s32.totalorder %s36, 1
      %p379 = por %p377, %p378
      %p380 = scmp.ne.s32.totalorder %s369, %s370
      %p381 = scmp.eq.s32.totalorder %s36, 0
      %p382 = por %p380, %p381
      %p383 = scmp.ne.s32.totalorder %s369, %s370
      %p384 = scmp.eq.s32.totalorder %s37, 1
      %p385 = por %p383, %p384
      %p387 = scmp.ne.s32.totalorder %s370, %s386
      %p388 = scmp.eq.s32.totalorder %s37, 0
      %p389 = por %p387, %p388
      %p390 = scmp.le.s32.totalorder 1, %s31
      %p391 = scmp.lt.s32.totalorder %s31, 3
      %p392 = pnand %p390, %p391
      %p393 = pneg %p392
      // Predicated region
      $region9: #{discriminator_forward.1} parent=5 // pred_check
        _
      $region10: #{discriminator_forward.1} parent=5 // pred_check_branch
        %395 = sbr.rel (%p392) target = $region12
      $region11: #{discriminator_forward.1} parent=5 // pred_region
        %s396 = ssub.s32 %s31, 1
        // Predicated region
        $region13: #{discriminator_forward.1} parent=11 // pred_check
          %p397 = pneg %p78
        $region14: #{discriminator_forward.1} parent=11 // pred_check_branch
          %399 = sbr.rel (%p397) target = $region16
        $region15: #{discriminator_forward.1} parent=11 // pred_region
          %401 = vsyncadd [#allocation6], 0
          %s402 = sshll.u32 %s1, 4
          %s403 = int_to_ptr.hbm [resolvable:$true] %s402
          %s404 = sshll.u32 [#allocation5], 4
          %s405 = int_to_ptr.vmem [resolvable:$true] %s404
          %410 = dma.hbm_to_vmem [thread:$0]  %s403, 2048, %s405, [#allocation6], 256, 256, 16
        $region16: #{discriminator_forward.1} parent=11 // pred_fallthru
          _
        // Predicated region
        $region17: #{discriminator_forward.1} parent=11 // pred_check
          %p411 = pneg %p99
        $region18: #{discriminator_forward.1} parent=11 // pred_check_branch
          %413 = sbr.rel (%p411) target = $region20
        $region19: #{discriminator_forward.1} parent=11 // pred_region
          %415 = vsyncadd [#allocation6], 0
          %s416 = sshll.u32 %s2, 4
          %s417 = int_to_ptr.hbm [resolvable:$true] %s416
          %s418 = sshll.u32 [#allocation7], 4
          %s419 = int_to_ptr.vmem [resolvable:$true] %s418
          %424 = dma.hbm_to_vmem [thread:$0]  %s417, 512, %s419, [#allocation6], 128, 128, 8
        $region20: #{discriminator_forward.1} parent=11 // pred_fallthru
          _
        // Predicated region
        $region21: #{discriminator_forward.1} parent=11 // pred_check
          %p425 = pneg %p120
        $region22: #{discriminator_forward.1} parent=11 // pred_check_branch
          %427 = sbr.rel (%p425) target = $region24
        $region23: #{discriminator_forward.1} parent=11 // pred_region
          _
        $region24: #{discriminator_forward.1} parent=11 // pred_fallthru
          _
        // Predicated region
        $region25: #{discriminator_forward.1} parent=11 // pred_check
          %p428 = pneg %p141
        $region26: #{discriminator_forward.1} parent=11 // pred_check_branch
          %430 = sbr.rel (%p428) target = $region28
        $region27: #{discriminator_forward.1} parent=11 // pred_region
          %432 = vsyncadd [#allocation9], 0
          %s433 = sshll.u32 %s4, 4
          %s434 = int_to_ptr.hbm [resolvable:$true] %s433
          %s435 = sshll.u32 [#allocation8], 4
          %s436 = int_to_ptr.vmem [resolvable:$true] %s435
          %441 = dma.hbm_to_vmem [thread:$0]  %s434, 32768, %s436, [#allocation9], 256, 256, 16
        $region28: #{discriminator_forward.1} parent=11 // pred_fallthru
          _
        // Predicated region
        $region29: #{discriminator_forward.1} parent=11 // pred_check
          %p442 = pneg %p162
        $region30: #{discriminator_forward.1} parent=11 // pred_check_branch
          %444 = sbr.rel (%p442) target = $region32
        $region31: #{discriminator_forward.1} parent=11 // pred_region
          %446 = vsyncadd [#allocation9], 0
          %s447 = sshll.u32 %s5, 4
          %s448 = int_to_ptr.hbm [resolvable:$true] %s447
          %s449 = sshll.u32 [#allocation10], 4
          %s450 = int_to_ptr.vmem [resolvable:$true] %s449
          %455 = dma.hbm_to_vmem [thread:$0]  %s448, 256, %s450, [#allocation9], 64, 64, 4
        $region32: #{discriminator_forward.1} parent=11 // pred_fallthru
          _
        // Predicated region
        $region33: #{discriminator_forward.1} parent=11 // pred_check
          %p456 = pneg %p183
        $region34: #{discriminator_forward.1} parent=11 // pred_check_branch
          %458 = sbr.rel (%p456) target = $region36
        $region35: #{discriminator_forward.1} parent=11 // pred_region
          _
        $region36: #{discriminator_forward.1} parent=11 // pred_fallthru
          _
        // Predicated region
        $region37: #{discriminator_forward.1} parent=11 // pred_check
          %p459 = pneg %p204
        $region38: #{discriminator_forward.1} parent=11 // pred_check_branch
          %461 = sbr.rel (%p459) target = $region40
        $region39: #{discriminator_forward.1} parent=11 // pred_region
          %463 = vsyncadd [#allocation12], 0
          %s464 = sshll.u32 %s7, 4
          %s465 = int_to_ptr.hbm [resolvable:$true] %s464
          %s466 = sshll.u32 [#allocation11], 4
          %s467 = int_to_ptr.vmem [resolvable:$true] %s466
          %472 = dma.hbm_to_vmem [thread:$0]  %s465, 32768, %s467, [#allocation12], 256, 256, 16
        $region40: #{discriminator_forward.1} parent=11 // pred_fallthru
          _
        // Predicated region
        $region41: #{discriminator_forward.1} parent=11 // pred_check
          %p473 = pneg %p225
        $region42: #{discriminator_forward.1} parent=11 // pred_check_branch
          %475 = sbr.rel (%p473) target = $region44
        $region43: #{discriminator_forward.1} parent=11 // pred_region
          %477 = vsyncadd [#allocation12], 0
          %s478 = sshll.u32 %s8, 4
          %s479 = int_to_ptr.hbm [resolvable:$true] %s478
          %s480 = sshll.u32 [#allocation13], 4
          %s481 = int_to_ptr.vmem [resolvable:$true] %s480
          %486 = dma.hbm_to_vmem [thread:$0]  %s479, 128, %s481, [#allocation12], 32, 32, 2
        $region44: #{discriminator_forward.1} parent=11 // pred_fallthru
          _
        // Predicated region
        $region45: #{discriminator_forward.1} parent=11 // pred_check
          %p487 = pneg %p246
        $region46: #{discriminator_forward.1} parent=11 // pred_check_branch
          %489 = sbr.rel (%p487) target = $region48
        $region47: #{discriminator_forward.1} parent=11 // pred_region
          _
        $region48: #{discriminator_forward.1} parent=11 // pred_fallthru
          _
        // Predicated region
        $region49: #{discriminator_forward.1} parent=11 // pred_check
          %p490 = pneg %p267
        $region50: #{discriminator_forward.1} parent=11 // pred_check_branch
          %492 = sbr.rel (%p490) target = $region52
        $region51: #{discriminator_forward.1} parent=11 // pred_region
          _
        $region52: #{discriminator_forward.1} parent=11 // pred_fallthru
          _
        // Predicated region
        $region53: #{discriminator_forward.1} parent=11 // pred_check
          %p493 = pneg %p288
        $region54: #{discriminator_forward.1} parent=11 // pred_check_branch
          %495 = sbr.rel (%p493) target = $region56
        $region55: #{discriminator_forward.1} parent=11 // pred_region
          _
        $region56: #{discriminator_forward.1} parent=11 // pred_fallthru
          _
        // Predicated region
        $region57: #{discriminator_forward.1} parent=11 // pred_check
          %p496 = pneg %p309
        $region58: #{discriminator_forward.1} parent=11 // pred_check_branch
          %498 = sbr.rel (%p496) target = $region60
        $region59: #{discriminator_forward.1} parent=11 // pred_region
          _
        $region60: #{discriminator_forward.1} parent=11 // pred_fallthru
          _
        // Predicated region
        $region61: #{discriminator_forward.1} parent=11 // pred_check
          %p499 = pneg %p330
        $region62: #{discriminator_forward.1} parent=11 // pred_check_branch
          %501 = sbr.rel (%p499) target = $region64
        $region63: #{discriminator_forward.1} parent=11 // pred_region
          %503 = vsyncadd [#allocation15], 0
          %s504 = sshll.u32 %s13, 4
          %s505 = int_to_ptr.hbm [resolvable:$true] %s504
          %s506 = sshll.u32 [#allocation14], 4
          %s507 = int_to_ptr.vmem [resolvable:$true] %s506
          %512 = dma.hbm_to_vmem [thread:$0]  %s505, 32768, %s507, [#allocation15], 512, 512, 32
        $region64: #{discriminator_forward.1} parent=11 // pred_fallthru
          _
      $region12: #{discriminator_forward.1} parent=5 // pred_fallthru
        _
      %p513 = scmp.lt.s32.totalorder %s31, 2
      // Predicated region
      $region65: #{discriminator_forward.1} parent=5 // pred_check
        %p514 = pneg %p513
      $region66: #{discriminator_forward.1} parent=5 // pred_check_branch
        %516 = sbr.rel (%p514) target = $region68
      $region67: #{discriminator_forward.1} parent=5 // pred_region
        // Predicated region
        $region69: #{discriminator_forward.1} parent=67 // pred_check
          %p517 = pneg %p51
        $region70: #{discriminator_forward.1} parent=67 // pred_check_branch
          %519 = sbr.rel (%p517) target = $region72
        $region71: #{discriminator_forward.1} parent=67 // pred_region
          %s520 = sand.u32 %s41, 1
          %s521 = scalar_lea.sflag [#allocation4], %s520
          %s522 = sand.u32 %s41, 1
          %s523 = smul.addr %s522, 16
          %s524 = scalar_lea.vmem [#allocation3], %s523
          %526 = vsyncadd %s521, 0
          %s527 = smul.addr %s31, 2
          %s528 = smul.addr %s527, 8
          %s529 = scalar_lea.hbm %s0, %s528
          %s530 = sshll.u32 %s529, 4
          %s531 = int_to_ptr.hbm [resolvable:$true] %s530
          %s532 = sshll.u32 %s524, 4
          %s533 = int_to_ptr.vmem [resolvable:$true] %s532
          %538 = dma.hbm_to_vmem [thread:$0]  %s531, 256, %s533, %s521, 128, 128, 8
        $region72: #{discriminator_forward.1} parent=67 // pred_fallthru
          _
      $region68: #{discriminator_forward.1} parent=5 // pred_fallthru
        _
      %p539 = scmp.le.s32.totalorder 1, %s31
      %p540 = scmp.lt.s32.totalorder %s31, 3
      %p541 = pnand %p539, %p540
      %p542 = pneg %p541
      // Predicated region
      $region73: #{discriminator_forward.1} parent=5 // pred_check
        _
      $region74: #{discriminator_forward.1} parent=5 // pred_check_branch
        %544 = sbr.rel (%p541) target = $region76
      $region75: #{discriminator_forward.1} parent=5 // pred_region
        %s545 = ssub.s32 %s31, 1
        %s546 = sand.u32 %s44, 1
        %s547 = scalar_lea.sflag [#allocation4], %s546
        %s548 = sand.u32 %s44, 1
        %s549 = smul.addr %s548, 16
        %s550 = scalar_lea.vmem [#allocation3], %s549
        // Predicated region
        $region77: #{discriminator_forward.1} parent=75 // pred_check
          %p551 = pneg %p57
        $region78: #{discriminator_forward.1} parent=75 // pred_check_branch
          %553 = sbr.rel (%p551) target = $region80
        $region79: #{discriminator_forward.1} parent=75 // pred_region
          %555 = dma.done %s547, 256
        $region80: #{discriminator_forward.1} parent=75 // pred_fallthru
          _
        // Predicated region
        $region81: #{discriminator_forward.1} parent=75 // pred_check
          %p556 = pneg %p78
        $region82: #{discriminator_forward.1} parent=75 // pred_check_branch
          %558 = sbr.rel (%p556) target = $region84
        $region83: #{discriminator_forward.1} parent=75 // pred_region
          %560 = dma.done [#allocation6], 2048
        $region84: #{discriminator_forward.1} parent=75 // pred_fallthru
          _
        // Predicated region
        $region85: #{discriminator_forward.1} parent=75 // pred_check
          %p561 = pneg %p99
        $region86: #{discriminator_forward.1} parent=75 // pred_check_branch
          %563 = sbr.rel (%p561) target = $region88
        $region87: #{discriminator_forward.1} parent=75 // pred_region
          %565 = dma.done [#allocation6], 512
        $region88: #{discriminator_forward.1} parent=75 // pred_fallthru
          _
        // Predicated region
        $region89: #{discriminator_forward.1} parent=75 // pred_check
          %p566 = pneg %p141
        $region90: #{discriminator_forward.1} parent=75 // pred_check_branch
          %568 = sbr.rel (%p566) target = $region92
        $region91: #{discriminator_forward.1} parent=75 // pred_region
          %570 = dma.done [#allocation9], 32768
        $region92: #{discriminator_forward.1} parent=75 // pred_fallthru
          _
        // Predicated region
        $region93: #{discriminator_forward.1} parent=75 // pred_check
          %p571 = pneg %p162
        $region94: #{discriminator_forward.1} parent=75 // pred_check_branch
          %573 = sbr.rel (%p571) target = $region96
        $region95: #{discriminator_forward.1} parent=75 // pred_region
          %575 = dma.done [#allocation9], 256
        $region96: #{discriminator_forward.1} parent=75 // pred_fallthru
          _
        // Predicated region
        $region97: #{discriminator_forward.1} parent=75 // pred_check
          %p576 = pneg %p204
        $region98: #{discriminator_forward.1} parent=75 // pred_check_branch
          %578 = sbr.rel (%p576) target = $region100
        $region99: #{discriminator_forward.1} parent=75 // pred_region
          %580 = dma.done [#allocation12], 32768
        $region100: #{discriminator_forward.1} parent=75 // pred_fallthru
          _
        // Predicated region
        $region101: #{discriminator_forward.1} parent=75 // pred_check
          %p581 = pneg %p225
        $region102: #{discriminator_forward.1} parent=75 // pred_check_branch
          %583 = sbr.rel (%p581) target = $region104
        $region103: #{discriminator_forward.1} parent=75 // pred_region
          %585 = dma.done [#allocation12], 128
        $region104: #{discriminator_forward.1} parent=75 // pred_fallthru
          _
        // Predicated region
        $region105: #{discriminator_forward.1} parent=75 // pred_check
          %p586 = pneg %p330
        $region106: #{discriminator_forward.1} parent=75 // pred_check_branch
          %588 = sbr.rel (%p586) target = $region108
        $region107: #{discriminator_forward.1} parent=75 // pred_region
          %590 = dma.done [#allocation15], 32768
        $region108: #{discriminator_forward.1} parent=75 // pred_fallthru
          _
        %s591 = sand.u32 %s44, 1
        %s592 = scalar_lea.sflag [#allocation4], %s591
        %s593 = sand.u32 %s44, 1
        %s594 = smul.addr %s593, 16
        %s595 = scalar_lea.vmem [#allocation3], %s594
        %p596 = pneg %p57
        %p597 = pneg %p54
        %p598 = pneg %p78
        %p599 = pneg %p75
        %p600 = pneg %p99
        %p601 = pneg %p96
        %p602 = pneg %p120
        %p603 = pneg %p117
        %p604 = pneg %p141
        %p605 = pneg %p138
        %p606 = pneg %p162
        %p607 = pneg %p159
        %p608 = pneg %p183
        %p609 = pneg %p180
        %p610 = pneg %p204
        %p611 = pneg %p201
        %p612 = pneg %p225
        %p613 = pneg %p222
        %p614 = pneg %p246
        %p615 = pneg %p243
        %p616 = pneg %p267
        %p617 = pneg %p264
        %p618 = pneg %p288
        %p619 = pneg %p285
        %p620 = pneg %p309
        %p621 = pneg %p306
        %p622 = pneg %p330
        %p623 = pneg %p327
        %p624 = pneg %p356
        %p625 = pneg %p353
        %p626 = scmp.lt.s32.totalorder %s36, 1
        %s627 = scalar_select %p626, %s36, 1
        %s628 = scalar_lea.vmem %s14, %s627
        %p629 = pneg %p382
        %p630 = pneg %p379
        %p631 = scmp.lt.s32.totalorder %s36, 1
        %s632 = scalar_select %p631, %s36, 1
        %s633 = smul.addr %s632, 4
        %s634 = scalar_lea.vmem %s15, %s633
        %p635 = scmp.lt.s32.totalorder %s36, 1
        %s636 = scalar_select %p635, %s36, 1
        %s637 = scalar_lea.vmem %s14, %s636
        %p638 = scmp.lt.s32.totalorder %s36, 1
        %s639 = scalar_select %p638, %s36, 1
        %s640 = smul.addr %s639, 4
        %s641 = scalar_lea.vmem %s15, %s640
        %v642 = vld [vmem:[%s550] sm:$0xff]
        %v643 = vld [vmem:[%s550 + $0x8] sm:$0xff]
        %v644 = vld [vmem:[#allocation7] sm:$0xff]
        %vm645 = vcmask 130048
        %v647 = vsel %vm645, %v644, 0
        %649 = vmatpush.msra.mxu0 0.0
        %650 = vmatpush.msra.mxu0 0.0
        %651 = vmatpush.msra.mxu0 0.0
        %652 = vmatpush.msra.mxu0 0.0
        %653 = vmatpush.msra.mxu0 0.0
        %654 = vmatpush.msra.mxu0 0.0
        %655 = vmatpush.msra.mxu0 0.0
        %656 = vmatpush.msra.mxu0 0.0
        %657 = vmatpush.msra.mxu0 0.0
        %658 = vmatpush.msra.mxu0 0.0
        %659 = vmatpush.msra.mxu0 0.0
        %660 = vmatpush.msra.mxu0 0.0
        %661 = vmatpush.msra.mxu0 0.0
        %662 = vmatpush.msra.mxu0 0.0
        %663 = vmatpush.msra.mxu0 %v643
        %664 = vmatpush.msra.mxu0 %v642
        %665 = vmatmul.f32.gmra.mxu0 %v647
        %v666 = vpop.f32.mrf.mxu0
        %v667 = vadd.f32 0.0, %v666
        %668 = vdwg.mxu0
        %v669 = vld [vmem:[#allocation5] sm:$0xff]
        %v670 = vld [vmem:[#allocation5 + $0x8] sm:$0xff]
        %v671 = vld [vmem:[#allocation5 + $0x10] sm:$0xff]
        %v672 = vld [vmem:[#allocation5 + $0x18] sm:$0xff]
        %s673 = scalar_lea.vmem [#allocation7], 8
        %v674 = vld [vmem:[%s673] sm:$0xff]
        %v676 = vsel %vm645, %v674, 0
        %678 = vmatpush.msra.mxu0 0.0
        %679 = vmatpush.msra.mxu0 0.0
        %680 = vmatpush.msra.mxu0 0.0
        %681 = vmatpush.msra.mxu0 0.0
        %682 = vmatpush.msra.mxu0 0.0
        %683 = vmatpush.msra.mxu0 0.0
        %684 = vmatpush.msra.mxu0 0.0
        %685 = vmatpush.msra.mxu0 0.0
        %686 = vmatpush.msra.mxu0 0.0
        %687 = vmatpush.msra.mxu0 0.0
        %688 = vmatpush.msra.mxu0 0.0
        %689 = vmatpush.msra.mxu0 0.0
        %690 = vmatpush.msra.mxu0 0.0
        %691 = vmatpush.msra.mxu0 0.0
        %692 = vmatpush.msra.mxu0 %v643
        %693 = vmatpush.msra.mxu0 %v642
        %694 = vmatmul.f32.gmra.mxu0 %v676
        %v695 = vpop.f32.mrf.mxu0
        %v696 = vadd.f32 0.0, %v695
        %697 = vdwg.mxu0
        %s698 = scalar_lea.vmem [#allocation5], 32
        %v699 = vld [vmem:[%s698] sm:$0xff]
        %v700 = vld [vmem:[%s698 + $0x8] sm:$0xff]
        %v701 = vld [vmem:[%s698 + $0x10] sm:$0xff]
        %v702 = vld [vmem:[%s698 + $0x18] sm:$0xff]
        %v704 = vsel %vm645, %v696, 0
        %706 = vmatpush.msra.mxu0 0.0
        %707 = vmatpush.msra.mxu0 0.0
        %708 = vmatpush.msra.mxu0 0.0
        %709 = vmatpush.msra.mxu0 0.0
        %710 = vmatpush.msra.mxu0 0.0
        %711 = vmatpush.msra.mxu0 0.0
        %712 = vmatpush.msra.mxu0 0.0
        %713 = vmatpush.msra.mxu0 0.0
        %714 = vmatpush.msra.mxu0 0.0
        %715 = vmatpush.msra.mxu0 0.0
        %716 = vmatpush.msra.mxu0 0.0
        %717 = vmatpush.msra.mxu0 0.0
        %718 = vmatpush.msra.mxu0 0.0
        %719 = vmatpush.msra.mxu0 0.0
        %720 = vmatpush.msra.mxu0 %v701
        %721 = vmatpush.msra.mxu0 %v699
        %722 = vmatmul.f32.gmra.mxu0 %v704
        %v723 = vpop.f32.mrf.mxu0
        %v724 = vadd.f32 0.0, %v723
        %725 = vdwg.mxu0
        %726 = vmatpush.msra.mxu0 0.0
        %727 = vmatpush.msra.mxu0 0.0
        %728 = vmatpush.msra.mxu0 0.0
        %729 = vmatpush.msra.mxu0 0.0
        %730 = vmatpush.msra.mxu0 0.0
        %731 = vmatpush.msra.mxu0 0.0
        %732 = vmatpush.msra.mxu0 0.0
        %733 = vmatpush.msra.mxu0 0.0
        %734 = vmatpush.msra.mxu0 0.0
        %735 = vmatpush.msra.mxu0 0.0
        %736 = vmatpush.msra.mxu0 0.0
        %737 = vmatpush.msra.mxu0 0.0
        %738 = vmatpush.msra.mxu0 0.0
        %739 = vmatpush.msra.mxu0 0.0
        %740 = vmatpush.msra.mxu0 %v702
        %741 = vmatpush.msra.mxu0 %v700
        %742 = vmatmul.f32.gmra.mxu0 %v704
        %v743 = vpop.f32.mrf.mxu0
        %v744 = vadd.f32 0.0, %v743
        %745 = vdwg.mxu0
        %v747 = vsel %vm645, %v667, 0
        %749 = vmatpush.msra.mxu0 0.0
        %750 = vmatpush.msra.mxu0 0.0
        %751 = vmatpush.msra.mxu0 0.0
        %752 = vmatpush.msra.mxu0 0.0
        %753 = vmatpush.msra.mxu0 0.0
        %754 = vmatpush.msra.mxu0 0.0
        %755 = vmatpush.msra.mxu0 0.0
        %756 = vmatpush.msra.mxu0 0.0
        %757 = vmatpush.msra.mxu0 0.0
        %758 = vmatpush.msra.mxu0 0.0
        %759 = vmatpush.msra.mxu0 0.0
        %760 = vmatpush.msra.mxu0 0.0
        %761 = vmatpush.msra.mxu0 0.0
        %762 = vmatpush.msra.mxu0 0.0
        %763 = vmatpush.msra.mxu0 %v671
        %764 = vmatpush.msra.mxu0 %v669
        %765 = vmatmul.f32.gmra.mxu0 %v747
        %v766 = vpop.f32.mrf.mxu0
        %v767 = vadd.f32 %v724, %v766
        %768 = vdwg.mxu0
        %769 = vmatpush.msra.mxu0 0.0
        %770 = vmatpush.msra.mxu0 0.0
        %771 = vmatpush.msra.mxu0 0.0
        %772 = vmatpush.msra.mxu0 0.0
        %773 = vmatpush.msra.mxu0 0.0
        %774 = vmatpush.msra.mxu0 0.0
        %775 = vmatpush.msra.mxu0 0.0
        %776 = vmatpush.msra.mxu0 0.0
        %777 = vmatpush.msra.mxu0 0.0
        %778 = vmatpush.msra.mxu0 0.0
        %779 = vmatpush.msra.mxu0 0.0
        %780 = vmatpush.msra.mxu0 0.0
        %781 = vmatpush.msra.mxu0 0.0
        %782 = vmatpush.msra.mxu0 0.0
        %783 = vmatpush.msra.mxu0 %v672
        %784 = vmatpush.msra.mxu0 %v670
        %785 = vmatmul.f32.gmra.mxu0 %v747
        %v786 = vpop.f32.mrf.mxu0
        %v787 = vadd.f32 %v744, %v786
        %788 = vdwg.mxu0
        %s789 = scalar_lea.vmem [#allocation7], 16
        %v790 = vld [vmem:[%s789] sm:$0xff]
        %v792 = vsel %vm645, %v790, 0
        %794 = vmatpush.msra.mxu0 0.0
        %795 = vmatpush.msra.mxu0 0.0
        %796 = vmatpush.msra.mxu0 0.0
        %797 = vmatpush.msra.mxu0 0.0
        %798 = vmatpush.msra.mxu0 0.0
        %799 = vmatpush.msra.mxu0 0.0
        %800 = vmatpush.msra.mxu0 0.0
        %801 = vmatpush.msra.mxu0 0.0
        %802 = vmatpush.msra.mxu0 0.0
        %803 = vmatpush.msra.mxu0 0.0
        %804 = vmatpush.msra.mxu0 0.0
        %805 = vmatpush.msra.mxu0 0.0
        %806 = vmatpush.msra.mxu0 0.0
        %807 = vmatpush.msra.mxu0 0.0
        %808 = vmatpush.msra.mxu0 %v643
        %809 = vmatpush.msra.mxu0 %v642
        %810 = vmatmul.f32.gmra.mxu0 %v792
        %v811 = vpop.f32.mrf.mxu0
        %v812 = vadd.f32 0.0, %v811
        %813 = vdwg.mxu0
        %s814 = scalar_lea.vmem [#allocation5], 64
        %v815 = vld [vmem:[%s814] sm:$0xff]
        %v816 = vld [vmem:[%s814 + $0x8] sm:$0xff]
        %v817 = vld [vmem:[%s814 + $0x10] sm:$0xff]
        %v818 = vld [vmem:[%s814 + $0x18] sm:$0xff]
        %v820 = vsel %vm645, %v812, 0
        %822 = vmatpush.msra.mxu0 0.0
        %823 = vmatpush.msra.mxu0 0.0
        %824 = vmatpush.msra.mxu0 0.0
        %825 = vmatpush.msra.mxu0 0.0
        %826 = vmatpush.msra.mxu0 0.0
        %827 = vmatpush.msra.mxu0 0.0
        %828 = vmatpush.msra.mxu0 0.0
        %829 = vmatpush.msra.mxu0 0.0
        %830 = vmatpush.msra.mxu0 0.0
        %831 = vmatpush.msra.mxu0 0.0
        %832 = vmatpush.msra.mxu0 0.0
        %833 = vmatpush.msra.mxu0 0.0
        %834 = vmatpush.msra.mxu0 0.0
        %835 = vmatpush.msra.mxu0 0.0
        %836 = vmatpush.msra.mxu0 %v817
        %837 = vmatpush.msra.mxu0 %v815
        %838 = vmatmul.f32.gmra.mxu0 %v820
        %v839 = vpop.f32.mrf.mxu0
        %v840 = vadd.f32 0.0, %v839
        %841 = vdwg.mxu0
        %842 = vmatpush.msra.mxu0 0.0
        %843 = vmatpush.msra.mxu0 0.0
        %844 = vmatpush.msra.mxu0 0.0
        %845 = vmatpush.msra.mxu0 0.0
        %846 = vmatpush.msra.mxu0 0.0
        %847 = vmatpush.msra.mxu0 0.0
        %848 = vmatpush.msra.mxu0 0.0
        %849 = vmatpush.msra.mxu0 0.0
        %850 = vmatpush.msra.mxu0 0.0
        %851 = vmatpush.msra.mxu0 0.0
        %852 = vmatpush.msra.mxu0 0.0
        %853 = vmatpush.msra.mxu0 0.0
        %854 = vmatpush.msra.mxu0 0.0
        %855 = vmatpush.msra.mxu0 0.0
        %856 = vmatpush.msra.mxu0 %v818
        %857 = vmatpush.msra.mxu0 %v816
        %858 = vmatmul.f32.gmra.mxu0 %v820
        %v859 = vpop.f32.mrf.mxu0
        %v860 = vadd.f32 0.0, %v859
        %861 = vdwg.mxu0
        %v862 = vadd.f32 %v767, %v840
        %v863 = vadd.f32 %v787, %v860
        %s864 = scalar_lea.vmem [#allocation7], 24
        %v865 = vld [vmem:[%s864] sm:$0xff]
        %v867 = vsel %vm645, %v865, 0
        %869 = vmatpush.msra.mxu0 0.0
        %870 = vmatpush.msra.mxu0 0.0
        %871 = vmatpush.msra.mxu0 0.0
        %872 = vmatpush.msra.mxu0 0.0
        %873 = vmatpush.msra.mxu0 0.0
        %874 = vmatpush.msra.mxu0 0.0
        %875 = vmatpush.msra.mxu0 0.0
        %876 = vmatpush.msra.mxu0 0.0
        %877 = vmatpush.msra.mxu0 0.0
        %878 = vmatpush.msra.mxu0 0.0
        %879 = vmatpush.msra.mxu0 0.0
        %880 = vmatpush.msra.mxu0 0.0
        %881 = vmatpush.msra.mxu0 0.0
        %882 = vmatpush.msra.mxu0 0.0
        %883 = vmatpush.msra.mxu0 %v643
        %884 = vmatpush.msra.mxu0 %v642
        %885 = vmatmul.f32.gmra.mxu0 %v867
        %v886 = vpop.f32.mrf.mxu0
        %v887 = vadd.f32 0.0, %v886
        %888 = vdwg.mxu0
        %s889 = scalar_lea.vmem [#allocation5], 96
        %v890 = vld [vmem:[%s889] sm:$0xff]
        %v891 = vld [vmem:[%s889 + $0x8] sm:$0xff]
        %v892 = vld [vmem:[%s889 + $0x10] sm:$0xff]
        %v893 = vld [vmem:[%s889 + $0x18] sm:$0xff]
        %v895 = vsel %vm645, %v887, 0
        %897 = vmatpush.msra.mxu0 0.0
        %898 = vmatpush.msra.mxu0 0.0
        %899 = vmatpush.msra.mxu0 0.0
        %900 = vmatpush.msra.mxu0 0.0
        %901 = vmatpush.msra.mxu0 0.0
        %902 = vmatpush.msra.mxu0 0.0
        %903 = vmatpush.msra.mxu0 0.0
        %904 = vmatpush.msra.mxu0 0.0
        %905 = vmatpush.msra.mxu0 0.0
        %906 = vmatpush.msra.mxu0 0.0
        %907 = vmatpush.msra.mxu0 0.0
        %908 = vmatpush.msra.mxu0 0.0
        %909 = vmatpush.msra.mxu0 0.0
        %910 = vmatpush.msra.mxu0 0.0
        %911 = vmatpush.msra.mxu0 %v892
        %912 = vmatpush.msra.mxu0 %v890
        %913 = vmatmul.f32.gmra.mxu0 %v895
        %v914 = vpop.f32.mrf.mxu0
        %v915 = vadd.f32 0.0, %v914
        %916 = vdwg.mxu0
        %917 = vmatpush.msra.mxu0 0.0
        %918 = vmatpush.msra.mxu0 0.0
        %919 = vmatpush.msra.mxu0 0.0
        %920 = vmatpush.msra.mxu0 0.0
        %921 = vmatpush.msra.mxu0 0.0
        %922 = vmatpush.msra.mxu0 0.0
        %923 = vmatpush.msra.mxu0 0.0
        %924 = vmatpush.msra.mxu0 0.0
        %925 = vmatpush.msra.mxu0 0.0
        %926 = vmatpush.msra.mxu0 0.0
        %927 = vmatpush.msra.mxu0 0.0
        %928 = vmatpush.msra.mxu0 0.0
        %929 = vmatpush.msra.mxu0 0.0
        %930 = vmatpush.msra.mxu0 0.0
        %931 = vmatpush.msra.mxu0 %v893
        %932 = vmatpush.msra.mxu0 %v891
        %933 = vmatmul.f32.gmra.mxu0 %v895
        %v934 = vpop.f32.mrf.mxu0
        %v935 = vadd.f32 0.0, %v934
        %936 = vdwg.mxu0
        %v937 = vadd.f32 %v862, %v915
        %v938 = vadd.f32 %v863, %v935
        %v939 = vld [vmem:[%s3] sm:$0x3]
        %v941 = vperm.slane %v939, 0
        %v942 = vperm.slane %v939, 1
        %v945 = vadd.f32 %v937, %v941
        %v946 = vadd.f32 %v938, %v942
        %vm947 = vcmp.ge.f32.partialorder %v945, 0.0
        %vm948 = vcmp.ge.f32.partialorder %v946, 0.0
        %v949 = vmul.f32 %v945, 0.1
        %v950 = vmul.f32 %v946, 0.1
        %v951 = vsel %vm947, %v945, %v949
        %v952 = vsel %vm948, %v946, %v950
        %v953 = vld [vmem:[#allocation10] sm:$0xf]
        %vm954 = vcmask 64512
        %v956 = vsel %vm954, %v953, 0
        %958 = vmatpush.msra.mxu0 0.0
        %959 = vmatpush.msra.mxu0 0.0
        %960 = vmatpush.msra.mxu0 0.0
        %961 = vmatpush.msra.mxu0 0.0
        %962 = vmatpush.msra.mxu0 0.0
        %963 = vmatpush.msra.mxu0 0.0
        %964 = vmatpush.msra.mxu0 0.0
        %965 = vmatpush.msra.mxu0 0.0
        %966 = vmatpush.msra.mxu0 0.0
        %967 = vmatpush.msra.mxu0 0.0
        %968 = vmatpush.msra.mxu0 0.0
        %969 = vmatpush.msra.mxu0 0.0
        %970 = vmatpush.msra.mxu0 0.0
        %971 = vmatpush.msra.mxu0 0.0
        %972 = vmatpush.msra.mxu0 0.0
        %973 = vmatpush.msra.mxu0 %v951
        %974 = vmatmul.f32.gmra.mxu0 %v956
        %v975 = vpop.f32.mrf.mxu0
        %v976 = vadd.f32 0.0, %v975
        %977 = vdwg.mxu0
        %978 = vmatpush.msra.mxu0 0.0
        %979 = vmatpush.msra.mxu0 0.0
        %980 = vmatpush.msra.mxu0 0.0
        %981 = vmatpush.msra.mxu0 0.0
        %982 = vmatpush.msra.mxu0 0.0
        %983 = vmatpush.msra.mxu0 0.0
        %984 = vmatpush.msra.mxu0 0.0
        %985 = vmatpush.msra.mxu0 0.0
        %986 = vmatpush.msra.mxu0 0.0
        %987 = vmatpush.msra.mxu0 0.0
        %988 = vmatpush.msra.mxu0 0.0
        %989 = vmatpush.msra.mxu0 0.0
        %990 = vmatpush.msra.mxu0 0.0
        %991 = vmatpush.msra.mxu0 0.0
        %992 = vmatpush.msra.mxu0 0.0
        %993 = vmatpush.msra.mxu0 %v952
        %994 = vmatmul.f32.gmra.mxu0 %v956
        %v995 = vpop.f32.mrf.mxu0
        %v996 = vadd.f32 0.0, %v995
        %997 = vdwg.mxu0
        %v998 = vld [vmem:[#allocation8] sm:$0xff]
        %v999 = vld [vmem:[#allocation8 + $0x8] sm:$0xff]
        %v1000 = vld [vmem:[#allocation8 + $0x10] sm:$0xff]
        %v1001 = vld [vmem:[#allocation8 + $0x18] sm:$0xff]
        %v1002 = vld [vmem:[#allocation8 + $0x20] sm:$0xff]
        %v1003 = vld [vmem:[#allocation8 + $0x28] sm:$0xff]
        %v1004 = vld [vmem:[#allocation8 + $0x30] sm:$0xff]
        %v1005 = vld [vmem:[#allocation8 + $0x38] sm:$0xff]
        %v1006 = vld [vmem:[#allocation8 + $0x40] sm:$0xff]
        %v1007 = vld [vmem:[#allocation8 + $0x48] sm:$0xff]
        %v1008 = vld [vmem:[#allocation8 + $0x50] sm:$0xff]
        %v1009 = vld [vmem:[#allocation8 + $0x58] sm:$0xff]
        %v1010 = vld [vmem:[#allocation8 + $0x60] sm:$0xff]
        %v1011 = vld [vmem:[#allocation8 + $0x68] sm:$0xff]
        %v1012 = vld [vmem:[#allocation8 + $0x70] sm:$0xff]
        %v1013 = vld [vmem:[#allocation8 + $0x78] sm:$0xff]
        %v1014 = vld [vmem:[#allocation8 + $0x80] sm:$0xff]
        %v1015 = vld [vmem:[#allocation8 + $0x88] sm:$0xff]
        %v1016 = vld [vmem:[#allocation8 + $0x90] sm:$0xff]
        %v1017 = vld [vmem:[#allocation8 + $0x98] sm:$0xff]
        %v1018 = vld [vmem:[#allocation8 + $0xa0] sm:$0xff]
        %v1019 = vld [vmem:[#allocation8 + $0xa8] sm:$0xff]
        %v1020 = vld [vmem:[#allocation8 + $0xb0] sm:$0xff]
        %v1021 = vld [vmem:[#allocation8 + $0xb8] sm:$0xff]
        %v1022 = vld [vmem:[#allocation8 + $0xc0] sm:$0xff]
        %v1023 = vld [vmem:[#allocation8 + $0xc8] sm:$0xff]
        %v1024 = vld [vmem:[#allocation8 + $0xd0] sm:$0xff]
        %v1025 = vld [vmem:[#allocation8 + $0xd8] sm:$0xff]
        %v1026 = vld [vmem:[#allocation8 + $0xe0] sm:$0xff]
        %v1027 = vld [vmem:[#allocation8 + $0xe8] sm:$0xff]
        %v1028 = vld [vmem:[#allocation8 + $0xf0] sm:$0xff]
        %v1029 = vld [vmem:[#allocation8 + $0xf8] sm:$0xff]
        %v1030 = vld [vmem:[#allocation8 + $0x100] sm:$0xff]
        %v1031 = vld [vmem:[#allocation8 + $0x108] sm:$0xff]
        %v1032 = vld [vmem:[#allocation8 + $0x110] sm:$0xff]
        %v1033 = vld [vmem:[#allocation8 + $0x118] sm:$0xff]
        %v1034 = vld [vmem:[#allocation8 + $0x120] sm:$0xff]
        %v1035 = vld [vmem:[#allocation8 + $0x128] sm:$0xff]
        %v1036 = vld [vmem:[#allocation8 + $0x130] sm:$0xff]
        %v1037 = vld [vmem:[#allocation8 + $0x138] sm:$0xff]
        %v1038 = vld [vmem:[#allocation8 + $0x140] sm:$0xff]
        %v1039 = vld [vmem:[#allocation8 + $0x148] sm:$0xff]
        %v1040 = vld [vmem:[#allocation8 + $0x150] sm:$0xff]
        %v1041 = vld [vmem:[#allocation8 + $0x158] sm:$0xff]
        %v1042 = vld [vmem:[#allocation8 + $0x160] sm:$0xff]
        %v1043 = vld [vmem:[#allocation8 + $0x168] sm:$0xff]
        %v1044 = vld [vmem:[#allocation8 + $0x170] sm:$0xff]
        %v1045 = vld [vmem:[#allocation8 + $0x178] sm:$0xff]
        %v1046 = vld [vmem:[#allocation8 + $0x180] sm:$0xff]
        %v1047 = vld [vmem:[#allocation8 + $0x188] sm:$0xff]
        %v1048 = vld [vmem:[#allocation8 + $0x190] sm:$0xff]
        %v1049 = vld [vmem:[#allocation8 + $0x198] sm:$0xff]
        %v1050 = vld [vmem:[#allocation8 + $0x1a0] sm:$0xff]
        %v1051 = vld [vmem:[#allocation8 + $0x1a8] sm:$0xff]
        %v1052 = vld [vmem:[#allocation8 + $0x1b0] sm:$0xff]
        %v1053 = vld [vmem:[#allocation8 + $0x1b8] sm:$0xff]
        %v1054 = vld [vmem:[#allocation8 + $0x1c0] sm:$0xff]
        %v1055 = vld [vmem:[#allocation8 + $0x1c8] sm:$0xff]
        %v1056 = vld [vmem:[#allocation8 + $0x1d0] sm:$0xff]
        %v1057 = vld [vmem:[#allocation8 + $0x1d8] sm:$0xff]
        %v1058 = vld [vmem:[#allocation8 + $0x1e0] sm:$0xff]
        %v1059 = vld [vmem:[#allocation8 + $0x1e8] sm:$0xff]
        %v1060 = vld [vmem:[#allocation8 + $0x1f0] sm:$0xff]
        %v1061 = vld [vmem:[#allocation8 + $0x1f8] sm:$0xff]
        %s1062 = scalar_lea.vmem [#allocation10], 4
        %v1063 = vld [vmem:[%s1062] sm:$0xf]
        %v1065 = vsel %vm954, %v1063, 0
        %1067 = vmatpush.msra.mxu0 0.0
        %1068 = vmatpush.msra.mxu0 0.0
        %1069 = vmatpush.msra.mxu0 0.0
        %1070 = vmatpush.msra.mxu0 0.0
        %1071 = vmatpush.msra.mxu0 0.0
        %1072 = vmatpush.msra.mxu0 0.0
        %1073 = vmatpush.msra.mxu0 0.0
        %1074 = vmatpush.msra.mxu0 0.0
        %1075 = vmatpush.msra.mxu0 0.0
        %1076 = vmatpush.msra.mxu0 0.0
        %1077 = vmatpush.msra.mxu0 0.0
        %1078 = vmatpush.msra.mxu0 0.0
        %1079 = vmatpush.msra.mxu0 0.0
        %1080 = vmatpush.msra.mxu0 0.0
        %1081 = vmatpush.msra.mxu0 0.0
        %1082 = vmatpush.msra.mxu0 %v951
        %1083 = vmatmul.f32.gmra.mxu0 %v1065
        %v1084 = vpop.f32.mrf.mxu0
        %v1085 = vadd.f32 0.0, %v1084
        %1086 = vdwg.mxu0
        %1087 = vmatpush.msra.mxu0 0.0
        %1088 = vmatpush.msra.mxu0 0.0
        %1089 = vmatpush.msra.mxu0 0.0
        %1090 = vmatpush.msra.mxu0 0.0
        %1091 = vmatpush.msra.mxu0 0.0
        %1092 = vmatpush.msra.mxu0 0.0
        %1093 = vmatpush.msra.mxu0 0.0
        %1094 = vmatpush.msra.mxu0 0.0
        %1095 = vmatpush.msra.mxu0 0.0
        %1096 = vmatpush.msra.mxu0 0.0
        %1097 = vmatpush.msra.mxu0 0.0
        %1098 = vmatpush.msra.mxu0 0.0
        %1099 = vmatpush.msra.mxu0 0.0
        %1100 = vmatpush.msra.mxu0 0.0
        %1101 = vmatpush.msra.mxu0 0.0
        %1102 = vmatpush.msra.mxu0 %v952
        %1103 = vmatmul.f32.gmra.mxu0 %v1065
        %v1104 = vpop.f32.mrf.mxu0
        %v1105 = vadd.f32 0.0, %v1104
        %1106 = vdwg.mxu0
        %s1107 = scalar_lea.vmem [#allocation8], 512
        %v1108 = vld [vmem:[%s1107] sm:$0xff]
        %v1109 = vld [vmem:[%s1107 + $0x8] sm:$0xff]
        %v1110 = vld [vmem:[%s1107 + $0x10] sm:$0xff]
        %v1111 = vld [vmem:[%s1107 + $0x18] sm:$0xff]
        %v1112 = vld [vmem:[%s1107 + $0x20] sm:$0xff]
        %v1113 = vld [vmem:[%s1107 + $0x28] sm:$0xff]
        %v1114 = vld [vmem:[%s1107 + $0x30] sm:$0xff]
        %v1115 = vld [vmem:[%s1107 + $0x38] sm:$0xff]
        %v1116 = vld [vmem:[%s1107 + $0x40] sm:$0xff]
        %v1117 = vld [vmem:[%s1107 + $0x48] sm:$0xff]
        %v1118 = vld [vmem:[%s1107 + $0x50] sm:$0xff]
        %v1119 = vld [vmem:[%s1107 + $0x58] sm:$0xff]
        %v1120 = vld [vmem:[%s1107 + $0x60] sm:$0xff]
        %v1121 = vld [vmem:[%s1107 + $0x68] sm:$0xff]
        %v1122 = vld [vmem:[%s1107 + $0x70] sm:$0xff]
        %v1123 = vld [vmem:[%s1107 + $0x78] sm:$0xff]
        %v1124 = vld [vmem:[%s1107 + $0x80] sm:$0xff]
        %v1125 = vld [vmem:[%s1107 + $0x88] sm:$0xff]
        %v1126 = vld [vmem:[%s1107 + $0x90] sm:$0xff]
        %v1127 = vld [vmem:[%s1107 + $0x98] sm:$0xff]
        %v1128 = vld [vmem:[%s1107 + $0xa0] sm:$0xff]
        %v1129 = vld [vmem:[%s1107 + $0xa8] sm:$0xff]
        %v1130 = vld [vmem:[%s1107 + $0xb0] sm:$0xff]
        %v1131 = vld [vmem:[%s1107 + $0xb8] sm:$0xff]
        %v1132 = vld [vmem:[%s1107 + $0xc0] sm:$0xff]
        %v1133 = vld [vmem:[%s1107 + $0xc8] sm:$0xff]
        %v1134 = vld [vmem:[%s1107 + $0xd0] sm:$0xff]
        %v1135 = vld [vmem:[%s1107 + $0xd8] sm:$0xff]
        %v1136 = vld [vmem:[%s1107 + $0xe0] sm:$0xff]
        %v1137 = vld [vmem:[%s1107 + $0xe8] sm:$0xff]
        %v1138 = vld [vmem:[%s1107 + $0xf0] sm:$0xff]
        %v1139 = vld [vmem:[%s1107 + $0xf8] sm:$0xff]
        %v1140 = vld [vmem:[%s1107 + $0x100] sm:$0xff]
        %v1141 = vld [vmem:[%s1107 + $0x108] sm:$0xff]
        %v1142 = vld [vmem:[%s1107 + $0x110] sm:$0xff]
        %v1143 = vld [vmem:[%s1107 + $0x118] sm:$0xff]
        %v1144 = vld [vmem:[%s1107 + $0x120] sm:$0xff]
        %v1145 = vld [vmem:[%s1107 + $0x128] sm:$0xff]
        %v1146 = vld [vmem:[%s1107 + $0x130] sm:$0xff]
        %v1147 = vld [vmem:[%s1107 + $0x138] sm:$0xff]
        %v1148 = vld [vmem:[%s1107 + $0x140] sm:$0xff]
        %v1149 = vld [vmem:[%s1107 + $0x148] sm:$0xff]
        %v1150 = vld [vmem:[%s1107 + $0x150] sm:$0xff]
        %v1151 = vld [vmem:[%s1107 + $0x158] sm:$0xff]
        %v1152 = vld [vmem:[%s1107 + $0x160] sm:$0xff]
        %v1153 = vld [vmem:[%s1107 + $0x168] sm:$0xff]
        %v1154 = vld [vmem:[%s1107 + $0x170] sm:$0xff]
        %v1155 = vld [vmem:[%s1107 + $0x178] sm:$0xff]
        %v1156 = vld [vmem:[%s1107 + $0x180] sm:$0xff]
        %v1157 = vld [vmem:[%s1107 + $0x188] sm:$0xff]
        %v1158 = vld [vmem:[%s1107 + $0x190] sm:$0xff]
        %v1159 = vld [vmem:[%s1107 + $0x198] sm:$0xff]
        %v1160 = vld [vmem:[%s1107 + $0x1a0] sm:$0xff]
        %v1161 = vld [vmem:[%s1107 + $0x1a8] sm:$0xff]
        %v1162 = vld [vmem:[%s1107 + $0x1b0] sm:$0xff]
        %v1163 = vld [vmem:[%s1107 + $0x1b8] sm:$0xff]
        %v1164 = vld [vmem:[%s1107 + $0x1c0] sm:$0xff]
        %v1165 = vld [vmem:[%s1107 + $0x1c8] sm:$0xff]
        %v1166 = vld [vmem:[%s1107 + $0x1d0] sm:$0xff]
        %v1167 = vld [vmem:[%s1107 + $0x1d8] sm:$0xff]
        %v1168 = vld [vmem:[%s1107 + $0x1e0] sm:$0xff]
        %v1169 = vld [vmem:[%s1107 + $0x1e8] sm:$0xff]
        %v1170 = vld [vmem:[%s1107 + $0x1f0] sm:$0xff]
        %v1171 = vld [vmem:[%s1107 + $0x1f8] sm:$0xff]
        %1172 = vmatpush.msra.mxu0 %v1138
        %1173 = vmatpush.msra.mxu0 %v1136
        %1174 = vmatpush.msra.mxu0 %v1134
        %1175 = vmatpush.msra.mxu0 %v1132
        %1176 = vmatpush.msra.mxu0 %v1130
        %1177 = vmatpush.msra.mxu0 %v1128
        %1178 = vmatpush.msra.mxu0 %v1126
        %1179 = vmatpush.msra.mxu0 %v1124
        %1180 = vmatpush.msra.mxu0 %v1122
        %1181 = vmatpush.msra.mxu0 %v1120
        %1182 = vmatpush.msra.mxu0 %v1118
        %1183 = vmatpush.msra.mxu0 %v1116
        %1184 = vmatpush.msra.mxu0 %v1114
        %1185 = vmatpush.msra.mxu0 %v1112
        %1186 = vmatpush.msra.mxu0 %v1110
        %1187 = vmatpush.msra.mxu0 %v1108
        %1188 = vmatmul.f32.gmra.mxu0 %v1085
        %v1189 = vpop.f32.mrf.mxu0
        %v1190 = vadd.f32 0.0, %v1189
        %1191 = vdwg.mxu0
        %1192 = vmatpush.msra.mxu0 %v1170
        %1193 = vmatpush.msra.mxu0 %v1168
        %1194 = vmatpush.msra.mxu0 %v1166
        %1195 = vmatpush.msra.mxu0 %v1164
        %1196 = vmatpush.msra.mxu0 %v1162
        %1197 = vmatpush.msra.mxu0 %v1160
        %1198 = vmatpush.msra.mxu0 %v1158
        %1199 = vmatpush.msra.mxu0 %v1156
        %1200 = vmatpush.msra.mxu0 %v1154
        %1201 = vmatpush.msra.mxu0 %v1152
        %1202 = vmatpush.msra.mxu0 %v1150
        %1203 = vmatpush.msra.mxu0 %v1148
        %1204 = vmatpush.msra.mxu0 %v1146
        %1205 = vmatpush.msra.mxu0 %v1144
        %1206 = vmatpush.msra.mxu0 %v1142
        %1207 = vmatpush.msra.mxu0 %v1140
        %1208 = vmatmul.f32.gmra.mxu0 %v1105
        %v1209 = vpop.f32.mrf.mxu0
        %v1210 = vadd.f32 %v1190, %v1209
        %1211 = vdwg.mxu0
        %1212 = vmatpush.msra.mxu0 %v1139
        %1213 = vmatpush.msra.mxu0 %v1137
        %1214 = vmatpush.msra.mxu0 %v1135
        %1215 = vmatpush.msra.mxu0 %v1133
        %1216 = vmatpush.msra.mxu0 %v1131
        %1217 = vmatpush.msra.mxu0 %v1129
        %1218 = vmatpush.msra.mxu0 %v1127
        %1219 = vmatpush.msra.mxu0 %v1125
        %1220 = vmatpush.msra.mxu0 %v1123
        %1221 = vmatpush.msra.mxu0 %v1121
        %1222 = vmatpush.msra.mxu0 %v1119
        %1223 = vmatpush.msra.mxu0 %v1117
        %1224 = vmatpush.msra.mxu0 %v1115
        %1225 = vmatpush.msra.mxu0 %v1113
        %1226 = vmatpush.msra.mxu0 %v1111
        %1227 = vmatpush.msra.mxu0 %v1109
        %1228 = vmatmul.f32.gmra.mxu0 %v1085
        %v1229 = vpop.f32.mrf.mxu0
        %v1230 = vadd.f32 0.0, %v1229
        %1231 = vdwg.mxu0
        %1232 = vmatpush.msra.mxu0 %v1171
        %1233 = vmatpush.msra.mxu0 %v1169
        %1234 = vmatpush.msra.mxu0 %v1167
        %1235 = vmatpush.msra.mxu0 %v1165
        %1236 = vmatpush.msra.mxu0 %v1163
        %1237 = vmatpush.msra.mxu0 %v1161
        %1238 = vmatpush.msra.mxu0 %v1159
        %1239 = vmatpush.msra.mxu0 %v1157
        %1240 = vmatpush.msra.mxu0 %v1155
        %1241 = vmatpush.msra.mxu0 %v1153
        %1242 = vmatpush.msra.mxu0 %v1151
        %1243 = vmatpush.msra.mxu0 %v1149
        %1244 = vmatpush.msra.mxu0 %v1147
        %1245 = vmatpush.msra.mxu0 %v1145
        %1246 = vmatpush.msra.mxu0 %v1143
        %1247 = vmatpush.msra.mxu0 %v1141
        %1248 = vmatmul.f32.gmra.mxu0 %v1105
        %v1249 = vpop.f32.mrf.mxu0
        %v1250 = vadd.f32 %v1230, %v1249
        %1251 = vdwg.mxu0
        %1252 = vmatpush.msra.mxu0 %v1028
        %1253 = vmatpush.msra.mxu0 %v1026
        %1254 = vmatpush.msra.mxu0 %v1024
        %1255 = vmatpush.msra.mxu0 %v1022
        %1256 = vmatpush.msra.mxu0 %v1020
        %1257 = vmatpush.msra.mxu0 %v1018
        %1258 = vmatpush.msra.mxu0 %v1016
        %1259 = vmatpush.msra.mxu0 %v1014
        %1260 = vmatpush.msra.mxu0 %v1012
        %1261 = vmatpush.msra.mxu0 %v1010
        %1262 = vmatpush.msra.mxu0 %v1008
        %1263 = vmatpush.msra.mxu0 %v1006
        %1264 = vmatpush.msra.mxu0 %v1004
        %1265 = vmatpush.msra.mxu0 %v1002
        %1266 = vmatpush.msra.mxu0 %v1000
        %1267 = vmatpush.msra.mxu0 %v998
        %1268 = vmatmul.f32.gmra.mxu0 %v976
        %v1269 = vpop.f32.mrf.mxu0
        %v1270 = vadd.f32 %v1210, %v1269
        %1271 = vdwg.mxu0
        %1272 = vmatpush.msra.mxu0 %v1060
        %1273 = vmatpush.msra.mxu0 %v1058
        %1274 = vmatpush.msra.mxu0 %v1056
        %1275 = vmatpush.msra.mxu0 %v1054
        %1276 = vmatpush.msra.mxu0 %v1052
        %1277 = vmatpush.msra.mxu0 %v1050
        %1278 = vmatpush.msra.mxu0 %v1048
        %1279 = vmatpush.msra.mxu0 %v1046
        %1280 = vmatpush.msra.mxu0 %v1044
        %1281 = vmatpush.msra.mxu0 %v1042
        %1282 = vmatpush.msra.mxu0 %v1040
        %1283 = vmatpush.msra.mxu0 %v1038
        %1284 = vmatpush.msra.mxu0 %v1036
        %1285 = vmatpush.msra.mxu0 %v1034
        %1286 = vmatpush.msra.mxu0 %v1032
        %1287 = vmatpush.msra.mxu0 %v1030
        %1288 = vmatmul.f32.gmra.mxu0 %v996
        %v1289 = vpop.f32.mrf.mxu0
        %v1290 = vadd.f32 %v1270, %v1289
        %1291 = vdwg.mxu0
        %1292 = vmatpush.msra.mxu0 %v1029
        %1293 = vmatpush.msra.mxu0 %v1027
        %1294 = vmatpush.msra.mxu0 %v1025
        %1295 = vmatpush.msra.mxu0 %v1023
        %1296 = vmatpush.msra.mxu0 %v1021
        %1297 = vmatpush.msra.mxu0 %v1019
        %1298 = vmatpush.msra.mxu0 %v1017
        %1299 = vmatpush.msra.mxu0 %v1015
        %1300 = vmatpush.msra.mxu0 %v1013
        %1301 = vmatpush.msra.mxu0 %v1011
        %1302 = vmatpush.msra.mxu0 %v1009
        %1303 = vmatpush.msra.mxu0 %v1007
        %1304 = vmatpush.msra.mxu0 %v1005
        %1305 = vmatpush.msra.mxu0 %v1003
        %1306 = vmatpush.msra.mxu0 %v1001
        %1307 = vmatpush.msra.mxu0 %v999
        %1308 = vmatmul.f32.gmra.mxu0 %v976
        %v1309 = vpop.f32.mrf.mxu0
        %v1310 = vadd.f32 %v1250, %v1309
        %1311 = vdwg.mxu0
        %1312 = vmatpush.msra.mxu0 %v1061
        %1313 = vmatpush.msra.mxu0 %v1059
        %1314 = vmatpush.msra.mxu0 %v1057
        %1315 = vmatpush.msra.mxu0 %v1055
        %1316 = vmatpush.msra.mxu0 %v1053
        %1317 = vmatpush.msra.mxu0 %v1051
        %1318 = vmatpush.msra.mxu0 %v1049
        %1319 = vmatpush.msra.mxu0 %v1047
        %1320 = vmatpush.msra.mxu0 %v1045
        %1321 = vmatpush.msra.mxu0 %v1043
        %1322 = vmatpush.msra.mxu0 %v1041
        %1323 = vmatpush.msra.mxu0 %v1039
        %1324 = vmatpush.msra.mxu0 %v1037
        %1325 = vmatpush.msra.mxu0 %v1035
        %1326 = vmatpush.msra.mxu0 %v1033
        %1327 = vmatpush.msra.mxu0 %v1031
        %1328 = vmatmul.f32.gmra.mxu0 %v996
        %v1329 = vpop.f32.mrf.mxu0
        %v1330 = vadd.f32 %v1310, %v1329
        %1331 = vdwg.mxu0
        %s1332 = scalar_lea.vmem [#allocation10], 8
        %v1333 = vld [vmem:[%s1332] sm:$0xf]
        %v1335 = vsel %vm954, %v1333, 0
        %1337 = vmatpush.msra.mxu0 0.0
        %1338 = vmatpush.msra.mxu0 0.0
        %1339 = vmatpush.msra.mxu0 0.0
        %1340 = vmatpush.msra.mxu0 0.0
        %1341 = vmatpush.msra.mxu0 0.0
        %1342 = vmatpush.msra.mxu0 0.0
        %1343 = vmatpush.msra.mxu0 0.0
        %1344 = vmatpush.msra.mxu0 0.0
        %1345 = vmatpush.msra.mxu0 0.0
        %1346 = vmatpush.msra.mxu0 0.0
        %1347 = vmatpush.msra.mxu0 0.0
        %1348 = vmatpush.msra.mxu0 0.0
        %1349 = vmatpush.msra.mxu0 0.0
        %1350 = vmatpush.msra.mxu0 0.0
        %1351 = vmatpush.msra.mxu0 0.0
        %1352 = vmatpush.msra.mxu0 %v951
        %1353 = vmatmul.f32.gmra.mxu0 %v1335
        %v1354 = vpop.f32.mrf.mxu0
        %v1355 = vadd.f32 0.0, %v1354
        %1356 = vdwg.mxu0
        %1357 = vmatpush.msra.mxu0 0.0
        %1358 = vmatpush.msra.mxu0 0.0
        %1359 = vmatpush.msra.mxu0 0.0
        %1360 = vmatpush.msra.mxu0 0.0
        %1361 = vmatpush.msra.mxu0 0.0
        %1362 = vmatpush.msra.mxu0 0.0
        %1363 = vmatpush.msra.mxu0 0.0
        %1364 = vmatpush.msra.mxu0 0.0
        %1365 = vmatpush.msra.mxu0 0.0
        %1366 = vmatpush.msra.mxu0 0.0
        %1367 = vmatpush.msra.mxu0 0.0
        %1368 = vmatpush.msra.mxu0 0.0
        %1369 = vmatpush.msra.mxu0 0.0
        %1370 = vmatpush.msra.mxu0 0.0
        %1371 = vmatpush.msra.mxu0 0.0
        %1372 = vmatpush.msra.mxu0 %v952
        %1373 = vmatmul.f32.gmra.mxu0 %v1335
        %v1374 = vpop.f32.mrf.mxu0
        %v1375 = vadd.f32 0.0, %v1374
        %1376 = vdwg.mxu0
        %s1377 = scalar_lea.vmem [#allocation8], 1024
        %v1378 = vld [vmem:[%s1377] sm:$0xff]
        %v1379 = vld [vmem:[%s1377 + $0x8] sm:$0xff]
        %v1380 = vld [vmem:[%s1377 + $0x10] sm:$0xff]
        %v1381 = vld [vmem:[%s1377 + $0x18] sm:$0xff]
        %v1382 = vld [vmem:[%s1377 + $0x20] sm:$0xff]
        %v1383 = vld [vmem:[%s1377 + $0x28] sm:$0xff]
        %v1384 = vld [vmem:[%s1377 + $0x30] sm:$0xff]
        %v1385 = vld [vmem:[%s1377 + $0x38] sm:$0xff]
        %v1386 = vld [vmem:[%s1377 + $0x40] sm:$0xff]
        %v1387 = vld [vmem:[%s1377 + $0x48] sm:$0xff]
        %v1388 = vld [vmem:[%s1377 + $0x50] sm:$0xff]
        %v1389 = vld [vmem:[%s1377 + $0x58] sm:$0xff]
        %v1390 = vld [vmem:[%s1377 + $0x60] sm:$0xff]
        %v1391 = vld [vmem:[%s1377 + $0x68] sm:$0xff]
        %v1392 = vld [vmem:[%s1377 + $0x70] sm:$0xff]
        %v1393 = vld [vmem:[%s1377 + $0x78] sm:$0xff]
        %v1394 = vld [vmem:[%s1377 + $0x80] sm:$0xff]
        %v1395 = vld [vmem:[%s1377 + $0x88] sm:$0xff]
        %v1396 = vld [vmem:[%s1377 + $0x90] sm:$0xff]
        %v1397 = vld [vmem:[%s1377 + $0x98] sm:$0xff]
        %v1398 = vld [vmem:[%s1377 + $0xa0] sm:$0xff]
        %v1399 = vld [vmem:[%s1377 + $0xa8] sm:$0xff]
        %v1400 = vld [vmem:[%s1377 + $0xb0] sm:$0xff]
        %v1401 = vld [vmem:[%s1377 + $0xb8] sm:$0xff]
        %v1402 = vld [vmem:[%s1377 + $0xc0] sm:$0xff]
        %v1403 = vld [vmem:[%s1377 + $0xc8] sm:$0xff]
        %v1404 = vld [vmem:[%s1377 + $0xd0] sm:$0xff]
        %v1405 = vld [vmem:[%s1377 + $0xd8] sm:$0xff]
        %v1406 = vld [vmem:[%s1377 + $0xe0] sm:$0xff]
        %v1407 = vld [vmem:[%s1377 + $0xe8] sm:$0xff]
        %v1408 = vld [vmem:[%s1377 + $0xf0] sm:$0xff]
        %v1409 = vld [vmem:[%s1377 + $0xf8] sm:$0xff]
        %v1410 = vld [vmem:[%s1377 + $0x100] sm:$0xff]
        %v1411 = vld [vmem:[%s1377 + $0x108] sm:$0xff]
        %v1412 = vld [vmem:[%s1377 + $0x110] sm:$0xff]
        %v1413 = vld [vmem:[%s1377 + $0x118] sm:$0xff]
        %v1414 = vld [vmem:[%s1377 + $0x120] sm:$0xff]
        %v1415 = vld [vmem:[%s1377 + $0x128] sm:$0xff]
        %v1416 = vld [vmem:[%s1377 + $0x130] sm:$0xff]
        %v1417 = vld [vmem:[%s1377 + $0x138] sm:$0xff]
        %v1418 = vld [vmem:[%s1377 + $0x140] sm:$0xff]
        %v1419 = vld [vmem:[%s1377 + $0x148] sm:$0xff]
        %v1420 = vld [vmem:[%s1377 + $0x150] sm:$0xff]
        %v1421 = vld [vmem:[%s1377 + $0x158] sm:$0xff]
        %v1422 = vld [vmem:[%s1377 + $0x160] sm:$0xff]
        %v1423 = vld [vmem:[%s1377 + $0x168] sm:$0xff]
        %v1424 = vld [vmem:[%s1377 + $0x170] sm:$0xff]
        %v1425 = vld [vmem:[%s1377 + $0x178] sm:$0xff]
        %v1426 = vld [vmem:[%s1377 + $0x180] sm:$0xff]
        %v1427 = vld [vmem:[%s1377 + $0x188] sm:$0xff]
        %v1428 = vld [vmem:[%s1377 + $0x190] sm:$0xff]
        %v1429 = vld [vmem:[%s1377 + $0x198] sm:$0xff]
        %v1430 = vld [vmem:[%s1377 + $0x1a0] sm:$0xff]
        %v1431 = vld [vmem:[%s1377 + $0x1a8] sm:$0xff]
        %v1432 = vld [vmem:[%s1377 + $0x1b0] sm:$0xff]
        %v1433 = vld [vmem:[%s1377 + $0x1b8] sm:$0xff]
        %v1434 = vld [vmem:[%s1377 + $0x1c0] sm:$0xff]
        %v1435 = vld [vmem:[%s1377 + $0x1c8] sm:$0xff]
        %v1436 = vld [vmem:[%s1377 + $0x1d0] sm:$0xff]
        %v1437 = vld [vmem:[%s1377 + $0x1d8] sm:$0xff]
        %v1438 = vld [vmem:[%s1377 + $0x1e0] sm:$0xff]
        %v1439 = vld [vmem:[%s1377 + $0x1e8] sm:$0xff]
        %v1440 = vld [vmem:[%s1377 + $0x1f0] sm:$0xff]
        %v1441 = vld [vmem:[%s1377 + $0x1f8] sm:$0xff]
        %1442 = vmatpush.msra.mxu0 %v1408
        %1443 = vmatpush.msra.mxu0 %v1406
        %1444 = vmatpush.msra.mxu0 %v1404
        %1445 = vmatpush.msra.mxu0 %v1402
        %1446 = vmatpush.msra.mxu0 %v1400
        %1447 = vmatpush.msra.mxu0 %v1398
        %1448 = vmatpush.msra.mxu0 %v1396
        %1449 = vmatpush.msra.mxu0 %v1394
        %1450 = vmatpush.msra.mxu0 %v1392
        %1451 = vmatpush.msra.mxu0 %v1390
        %1452 = vmatpush.msra.mxu0 %v1388
        %1453 = vmatpush.msra.mxu0 %v1386
        %1454 = vmatpush.msra.mxu0 %v1384
        %1455 = vmatpush.msra.mxu0 %v1382
        %1456 = vmatpush.msra.mxu0 %v1380
        %1457 = vmatpush.msra.mxu0 %v1378
        %1458 = vmatmul.f32.gmra.mxu0 %v1355
        %v1459 = vpop.f32.mrf.mxu0
        %v1460 = vadd.f32 0.0, %v1459
        %1461 = vdwg.mxu0
        %1462 = vmatpush.msra.mxu0 %v1440
        %1463 = vmatpush.msra.mxu0 %v1438
        %1464 = vmatpush.msra.mxu0 %v1436
        %1465 = vmatpush.msra.mxu0 %v1434
        %1466 = vmatpush.msra.mxu0 %v1432
        %1467 = vmatpush.msra.mxu0 %v1430
        %1468 = vmatpush.msra.mxu0 %v1428
        %1469 = vmatpush.msra.mxu0 %v1426
        %1470 = vmatpush.msra.mxu0 %v1424
        %1471 = vmatpush.msra.mxu0 %v1422
        %1472 = vmatpush.msra.mxu0 %v1420
        %1473 = vmatpush.msra.mxu0 %v1418
        %1474 = vmatpush.msra.mxu0 %v1416
        %1475 = vmatpush.msra.mxu0 %v1414
        %1476 = vmatpush.msra.mxu0 %v1412
        %1477 = vmatpush.msra.mxu0 %v1410
        %1478 = vmatmul.f32.gmra.mxu0 %v1375
        %v1479 = vpop.f32.mrf.mxu0
        %v1480 = vadd.f32 %v1460, %v1479
        %1481 = vdwg.mxu0
        %1482 = vmatpush.msra.mxu0 %v1409
        %1483 = vmatpush.msra.mxu0 %v1407
        %1484 = vmatpush.msra.mxu0 %v1405
        %1485 = vmatpush.msra.mxu0 %v1403
        %1486 = vmatpush.msra.mxu0 %v1401
        %1487 = vmatpush.msra.mxu0 %v1399
        %1488 = vmatpush.msra.mxu0 %v1397
        %1489 = vmatpush.msra.mxu0 %v1395
        %1490 = vmatpush.msra.mxu0 %v1393
        %1491 = vmatpush.msra.mxu0 %v1391
        %1492 = vmatpush.msra.mxu0 %v1389
        %1493 = vmatpush.msra.mxu0 %v1387
        %1494 = vmatpush.msra.mxu0 %v1385
        %1495 = vmatpush.msra.mxu0 %v1383
        %1496 = vmatpush.msra.mxu0 %v1381
        %1497 = vmatpush.msra.mxu0 %v1379
        %1498 = vmatmul.f32.gmra.mxu0 %v1355
        %v1499 = vpop.f32.mrf.mxu0
        %v1500 = vadd.f32 0.0, %v1499
        %1501 = vdwg.mxu0
        %1502 = vmatpush.msra.mxu0 %v1441
        %1503 = vmatpush.msra.mxu0 %v1439
        %1504 = vmatpush.msra.mxu0 %v1437
        %1505 = vmatpush.msra.mxu0 %v1435
        %1506 = vmatpush.msra.mxu0 %v1433
        %1507 = vmatpush.msra.mxu0 %v1431
        %1508 = vmatpush.msra.mxu0 %v1429
        %1509 = vmatpush.msra.mxu0 %v1427
        %1510 = vmatpush.msra.mxu0 %v1425
        %1511 = vmatpush.msra.mxu0 %v1423
        %1512 = vmatpush.msra.mxu0 %v1421
        %1513 = vmatpush.msra.mxu0 %v1419
        %1514 = vmatpush.msra.mxu0 %v1417
        %1515 = vmatpush.msra.mxu0 %v1415
        %1516 = vmatpush.msra.mxu0 %v1413
        %1517 = vmatpush.msra.mxu0 %v1411
        %1518 = vmatmul.f32.gmra.mxu0 %v1375
        %v1519 = vpop.f32.mrf.mxu0
        %v1520 = vadd.f32 %v1500, %v1519
        %1521 = vdwg.mxu0
        %v1522 = vadd.f32 %v1290, %v1480
        %v1523 = vadd.f32 %v1330, %v1520
        %s1524 = scalar_lea.vmem [#allocation10], 12
        %v1525 = vld [vmem:[%s1524] sm:$0xf]
        %v1527 = vsel %vm954, %v1525, 0
        %1529 = vmatpush.msra.mxu0 0.0
        %1530 = vmatpush.msra.mxu0 0.0
        %1531 = vmatpush.msra.mxu0 0.0
        %1532 = vmatpush.msra.mxu0 0.0
        %1533 = vmatpush.msra.mxu0 0.0
        %1534 = vmatpush.msra.mxu0 0.0
        %1535 = vmatpush.msra.mxu0 0.0
        %1536 = vmatpush.msra.mxu0 0.0
        %1537 = vmatpush.msra.mxu0 0.0
        %1538 = vmatpush.msra.mxu0 0.0
        %1539 = vmatpush.msra.mxu0 0.0
        %1540 = vmatpush.msra.mxu0 0.0
        %1541 = vmatpush.msra.mxu0 0.0
        %1542 = vmatpush.msra.mxu0 0.0
        %1543 = vmatpush.msra.mxu0 0.0
        %1544 = vmatpush.msra.mxu0 %v951
        %1545 = vmatmul.f32.gmra.mxu0 %v1527
        %v1546 = vpop.f32.mrf.mxu0
        %v1547 = vadd.f32 0.0, %v1546
        %1548 = vdwg.mxu0
        %1549 = vmatpush.msra.mxu0 0.0
        %1550 = vmatpush.msra.mxu0 0.0
        %1551 = vmatpush.msra.mxu0 0.0
        %1552 = vmatpush.msra.mxu0 0.0
        %1553 = vmatpush.msra.mxu0 0.0
        %1554 = vmatpush.msra.mxu0 0.0
        %1555 = vmatpush.msra.mxu0 0.0
        %1556 = vmatpush.msra.mxu0 0.0
        %1557 = vmatpush.msra.mxu0 0.0
        %1558 = vmatpush.msra.mxu0 0.0
        %1559 = vmatpush.msra.mxu0 0.0
        %1560 = vmatpush.msra.mxu0 0.0
        %1561 = vmatpush.msra.mxu0 0.0
        %1562 = vmatpush.msra.mxu0 0.0
        %1563 = vmatpush.msra.mxu0 0.0
        %1564 = vmatpush.msra.mxu0 %v952
        %1565 = vmatmul.f32.gmra.mxu0 %v1527
        %v1566 = vpop.f32.mrf.mxu0
        %v1567 = vadd.f32 0.0, %v1566
        %1568 = vdwg.mxu0
        %s1569 = scalar_lea.vmem [#allocation8], 1536
        %v1570 = vld [vmem:[%s1569] sm:$0xff]
        %v1571 = vld [vmem:[%s1569 + $0x8] sm:$0xff]
        %v1572 = vld [vmem:[%s1569 + $0x10] sm:$0xff]
        %v1573 = vld [vmem:[%s1569 + $0x18] sm:$0xff]
        %v1574 = vld [vmem:[%s1569 + $0x20] sm:$0xff]
        %v1575 = vld [vmem:[%s1569 + $0x28] sm:$0xff]
        %v1576 = vld [vmem:[%s1569 + $0x30] sm:$0xff]
        %v1577 = vld [vmem:[%s1569 + $0x38] sm:$0xff]
        %v1578 = vld [vmem:[%s1569 + $0x40] sm:$0xff]
        %v1579 = vld [vmem:[%s1569 + $0x48] sm:$0xff]
        %v1580 = vld [vmem:[%s1569 + $0x50] sm:$0xff]
        %v1581 = vld [vmem:[%s1569 + $0x58] sm:$0xff]
        %v1582 = vld [vmem:[%s1569 + $0x60] sm:$0xff]
        %v1583 = vld [vmem:[%s1569 + $0x68] sm:$0xff]
        %v1584 = vld [vmem:[%s1569 + $0x70] sm:$0xff]
        %v1585 = vld [vmem:[%s1569 + $0x78] sm:$0xff]
        %v1586 = vld [vmem:[%s1569 + $0x80] sm:$0xff]
        %v1587 = vld [vmem:[%s1569 + $0x88] sm:$0xff]
        %v1588 = vld [vmem:[%s1569 + $0x90] sm:$0xff]
        %v1589 = vld [vmem:[%s1569 + $0x98] sm:$0xff]
        %v1590 = vld [vmem:[%s1569 + $0xa0] sm:$0xff]
        %v1591 = vld [vmem:[%s1569 + $0xa8] sm:$0xff]
        %v1592 = vld [vmem:[%s1569 + $0xb0] sm:$0xff]
        %v1593 = vld [vmem:[%s1569 + $0xb8] sm:$0xff]
        %v1594 = vld [vmem:[%s1569 + $0xc0] sm:$0xff]
        %v1595 = vld [vmem:[%s1569 + $0xc8] sm:$0xff]
        %v1596 = vld [vmem:[%s1569 + $0xd0] sm:$0xff]
        %v1597 = vld [vmem:[%s1569 + $0xd8] sm:$0xff]
        %v1598 = vld [vmem:[%s1569 + $0xe0] sm:$0xff]
        %v1599 = vld [vmem:[%s1569 + $0xe8] sm:$0xff]
        %v1600 = vld [vmem:[%s1569 + $0xf0] sm:$0xff]
        %v1601 = vld [vmem:[%s1569 + $0xf8] sm:$0xff]
        %v1602 = vld [vmem:[%s1569 + $0x100] sm:$0xff]
        %v1603 = vld [vmem:[%s1569 + $0x108] sm:$0xff]
        %v1604 = vld [vmem:[%s1569 + $0x110] sm:$0xff]
        %v1605 = vld [vmem:[%s1569 + $0x118] sm:$0xff]
        %v1606 = vld [vmem:[%s1569 + $0x120] sm:$0xff]
        %v1607 = vld [vmem:[%s1569 + $0x128] sm:$0xff]
        %v1608 = vld [vmem:[%s1569 + $0x130] sm:$0xff]
        %v1609 = vld [vmem:[%s1569 + $0x138] sm:$0xff]
        %v1610 = vld [vmem:[%s1569 + $0x140] sm:$0xff]
        %v1611 = vld [vmem:[%s1569 + $0x148] sm:$0xff]
        %v1612 = vld [vmem:[%s1569 + $0x150] sm:$0xff]
        %v1613 = vld [vmem:[%s1569 + $0x158] sm:$0xff]
        %v1614 = vld [vmem:[%s1569 + $0x160] sm:$0xff]
        %v1615 = vld [vmem:[%s1569 + $0x168] sm:$0xff]
        %v1616 = vld [vmem:[%s1569 + $0x170] sm:$0xff]
        %v1617 = vld [vmem:[%s1569 + $0x178] sm:$0xff]
        %v1618 = vld [vmem:[%s1569 + $0x180] sm:$0xff]
        %v1619 = vld [vmem:[%s1569 + $0x188] sm:$0xff]
        %v1620 = vld [vmem:[%s1569 + $0x190] sm:$0xff]
        %v1621 = vld [vmem:[%s1569 + $0x198] sm:$0xff]
        %v1622 = vld [vmem:[%s1569 + $0x1a0] sm:$0xff]
        %v1623 = vld [vmem:[%s1569 + $0x1a8] sm:$0xff]
        %v1624 = vld [vmem:[%s1569 + $0x1b0] sm:$0xff]
        %v1625 = vld [vmem:[%s1569 + $0x1b8] sm:$0xff]
        %v1626 = vld [vmem:[%s1569 + $0x1c0] sm:$0xff]
        %v1627 = vld [vmem:[%s1569 + $0x1c8] sm:$0xff]
        %v1628 = vld [vmem:[%s1569 + $0x1d0] sm:$0xff]
        %v1629 = vld [vmem:[%s1569 + $0x1d8] sm:$0xff]
        %v1630 = vld [vmem:[%s1569 + $0x1e0] sm:$0xff]
        %v1631 = vld [vmem:[%s1569 + $0x1e8] sm:$0xff]
        %v1632 = vld [vmem:[%s1569 + $0x1f0] sm:$0xff]
        %v1633 = vld [vmem:[%s1569 + $0x1f8] sm:$0xff]
        %1634 = vmatpush.msra.mxu0 %v1600
        %1635 = vmatpush.msra.mxu0 %v1598
        %1636 = vmatpush.msra.mxu0 %v1596
        %1637 = vmatpush.msra.mxu0 %v1594
        %1638 = vmatpush.msra.mxu0 %v1592
        %1639 = vmatpush.msra.mxu0 %v1590
        %1640 = vmatpush.msra.mxu0 %v1588
        %1641 = vmatpush.msra.mxu0 %v1586
        %1642 = vmatpush.msra.mxu0 %v1584
        %1643 = vmatpush.msra.mxu0 %v1582
        %1644 = vmatpush.msra.mxu0 %v1580
        %1645 = vmatpush.msra.mxu0 %v1578
        %1646 = vmatpush.msra.mxu0 %v1576
        %1647 = vmatpush.msra.mxu0 %v1574
        %1648 = vmatpush.msra.mxu0 %v1572
        %1649 = vmatpush.msra.mxu0 %v1570
        %1650 = vmatmul.f32.gmra.mxu0 %v1547
        %v1651 = vpop.f32.mrf.mxu0
        %v1652 = vadd.f32 0.0, %v1651
        %1653 = vdwg.mxu0
        %1654 = vmatpush.msra.mxu0 %v1632
        %1655 = vmatpush.msra.mxu0 %v1630
        %1656 = vmatpush.msra.mxu0 %v1628
        %1657 = vmatpush.msra.mxu0 %v1626
        %1658 = vmatpush.msra.mxu0 %v1624
        %1659 = vmatpush.msra.mxu0 %v1622
        %1660 = vmatpush.msra.mxu0 %v1620
        %1661 = vmatpush.msra.mxu0 %v1618
        %1662 = vmatpush.msra.mxu0 %v1616
        %1663 = vmatpush.msra.mxu0 %v1614
        %1664 = vmatpush.msra.mxu0 %v1612
        %1665 = vmatpush.msra.mxu0 %v1610
        %1666 = vmatpush.msra.mxu0 %v1608
        %1667 = vmatpush.msra.mxu0 %v1606
        %1668 = vmatpush.msra.mxu0 %v1604
        %1669 = vmatpush.msra.mxu0 %v1602
        %1670 = vmatmul.f32.gmra.mxu0 %v1567
        %v1671 = vpop.f32.mrf.mxu0
        %v1672 = vadd.f32 %v1652, %v1671
        %1673 = vdwg.mxu0
        %1674 = vmatpush.msra.mxu0 %v1601
        %1675 = vmatpush.msra.mxu0 %v1599
        %1676 = vmatpush.msra.mxu0 %v1597
        %1677 = vmatpush.msra.mxu0 %v1595
        %1678 = vmatpush.msra.mxu0 %v1593
        %1679 = vmatpush.msra.mxu0 %v1591
        %1680 = vmatpush.msra.mxu0 %v1589
        %1681 = vmatpush.msra.mxu0 %v1587
        %1682 = vmatpush.msra.mxu0 %v1585
        %1683 = vmatpush.msra.mxu0 %v1583
        %1684 = vmatpush.msra.mxu0 %v1581
        %1685 = vmatpush.msra.mxu0 %v1579
        %1686 = vmatpush.msra.mxu0 %v1577
        %1687 = vmatpush.msra.mxu0 %v1575
        %1688 = vmatpush.msra.mxu0 %v1573
        %1689 = vmatpush.msra.mxu0 %v1571
        %1690 = vmatmul.f32.gmra.mxu0 %v1547
        %v1691 = vpop.f32.mrf.mxu0
        %v1692 = vadd.f32 0.0, %v1691
        %1693 = vdwg.mxu0
        %1694 = vmatpush.msra.mxu0 %v1633
        %1695 = vmatpush.msra.mxu0 %v1631
        %1696 = vmatpush.msra.mxu0 %v1629
        %1697 = vmatpush.msra.mxu0 %v1627
        %1698 = vmatpush.msra.mxu0 %v1625
        %1699 = vmatpush.msra.mxu0 %v1623
        %1700 = vmatpush.msra.mxu0 %v1621
        %1701 = vmatpush.msra.mxu0 %v1619
        %1702 = vmatpush.msra.mxu0 %v1617
        %1703 = vmatpush.msra.mxu0 %v1615
        %1704 = vmatpush.msra.mxu0 %v1613
        %1705 = vmatpush.msra.mxu0 %v1611
        %1706 = vmatpush.msra.mxu0 %v1609
        %1707 = vmatpush.msra.mxu0 %v1607
        %1708 = vmatpush.msra.mxu0 %v1605
        %1709 = vmatpush.msra.mxu0 %v1603
        %1710 = vmatmul.f32.gmra.mxu0 %v1567
        %v1711 = vpop.f32.mrf.mxu0
        %v1712 = vadd.f32 %v1692, %v1711
        %1713 = vdwg.mxu0
        %v1714 = vadd.f32 %v1522, %v1672
        %v1715 = vadd.f32 %v1523, %v1712
        %v1716 = vld [vmem:[%s6] sm:$0x3]
        %v1718 = vperm.slane %v1716, 0
        %v1719 = vperm.slane %v1716, 1
        %v1722 = vadd.f32 %v1714, %v1718
        %v1723 = vadd.f32 %v1715, %v1719
        %vm1724 = vcmp.ge.f32.partialorder %v1722, 0.0
        %vm1725 = vcmp.ge.f32.partialorder %v1723, 0.0
        %v1726 = vmul.f32 %v1722, 0.1
        %v1727 = vmul.f32 %v1723, 0.1
        %v1728 = vsel %vm1724, %v1722, %v1726
        %v1729 = vsel %vm1725, %v1723, %v1727
        %v1730 = vld [vmem:[#allocation13] sm:$0x3]
        %vm1731 = vcmask 31744
        %v1733 = vsel %vm1731, %v1730, 0
        %vm1735 = vcmask 1043456
        %v1737 = vsel %vm1735, %v1728, 0
        %v1740 = vsel %vm1735, %v1729, 0
        %1742 = vmatpush.msra.mxu0 0.0
        %1743 = vmatpush.msra.mxu0 0.0
        %1744 = vmatpush.msra.mxu0 0.0
        %1745 = vmatpush.msra.mxu0 0.0
        %1746 = vmatpush.msra.mxu0 0.0
        %1747 = vmatpush.msra.mxu0 0.0
        %1748 = vmatpush.msra.mxu0 0.0
        %1749 = vmatpush.msra.mxu0 0.0
        %1750 = vmatpush.msra.mxu0 0.0
        %1751 = vmatpush.msra.mxu0 0.0
        %1752 = vmatpush.msra.mxu0 0.0
        %1753 = vmatpush.msra.mxu0 0.0
        %1754 = vmatpush.msra.mxu0 0.0
        %1755 = vmatpush.msra.mxu0 0.0
        %1756 = vmatpush.msra.mxu0 0.0
        %1757 = vmatpush.msra.mxu0 %v1737
        %1758 = vmatmul.f32.gmra.mxu0 %v1733
        %v1759 = vpop.f32.mrf.mxu0
        %v1760 = vadd.f32 0.0, %v1759
        %1761 = vdwg.mxu0
        %1762 = vmatpush.msra.mxu0 0.0
        %1763 = vmatpush.msra.mxu0 0.0
        %1764 = vmatpush.msra.mxu0 0.0
        %1765 = vmatpush.msra.mxu0 0.0
        %1766 = vmatpush.msra.mxu0 0.0
        %1767 = vmatpush.msra.mxu0 0.0
        %1768 = vmatpush.msra.mxu0 0.0
        %1769 = vmatpush.msra.mxu0 0.0
        %1770 = vmatpush.msra.mxu0 0.0
        %1771 = vmatpush.msra.mxu0 0.0
        %1772 = vmatpush.msra.mxu0 0.0
        %1773 = vmatpush.msra.mxu0 0.0
        %1774 = vmatpush.msra.mxu0 0.0
        %1775 = vmatpush.msra.mxu0 0.0
        %1776 = vmatpush.msra.mxu0 0.0
        %1777 = vmatpush.msra.mxu0 %v1740
        %1778 = vmatmul.f32.gmra.mxu0 %v1733
        %v1779 = vpop.f32.mrf.mxu0
        %v1780 = vadd.f32 0.0, %v1779
        %1781 = vdwg.mxu0
        %v1782 = vld [vmem:[#allocation11] sm:$0xff]
        %v1783 = vld [vmem:[#allocation11 + $0x8] sm:$0xff]
        %v1784 = vld [vmem:[#allocation11 + $0x10] sm:$0xff]
        %v1785 = vld [vmem:[#allocation11 + $0x18] sm:$0xff]
        %v1786 = vld [vmem:[#allocation11 + $0x20] sm:$0xff]
        %v1787 = vld [vmem:[#allocation11 + $0x28] sm:$0xff]
        %v1788 = vld [vmem:[#allocation11 + $0x30] sm:$0xff]
        %v1789 = vld [vmem:[#allocation11 + $0x38] sm:$0xff]
        %v1790 = vld [vmem:[#allocation11 + $0x40] sm:$0xff]
        %v1791 = vld [vmem:[#allocation11 + $0x48] sm:$0xff]
        %v1792 = vld [vmem:[#allocation11 + $0x50] sm:$0xff]
        %v1793 = vld [vmem:[#allocation11 + $0x58] sm:$0xff]
        %v1794 = vld [vmem:[#allocation11 + $0x60] sm:$0xff]
        %v1795 = vld [vmem:[#allocation11 + $0x68] sm:$0xff]
        %v1796 = vld [vmem:[#allocation11 + $0x70] sm:$0xff]
        %v1797 = vld [vmem:[#allocation11 + $0x78] sm:$0xff]
        %v1798 = vld [vmem:[#allocation11 + $0x80] sm:$0xff]
        %v1799 = vld [vmem:[#allocation11 + $0x88] sm:$0xff]
        %v1800 = vld [vmem:[#allocation11 + $0x90] sm:$0xff]
        %v1801 = vld [vmem:[#allocation11 + $0x98] sm:$0xff]
        %v1802 = vld [vmem:[#allocation11 + $0xa0] sm:$0xff]
        %v1803 = vld [vmem:[#allocation11 + $0xa8] sm:$0xff]
        %v1804 = vld [vmem:[#allocation11 + $0xb0] sm:$0xff]
        %v1805 = vld [vmem:[#allocation11 + $0xb8] sm:$0xff]
        %v1806 = vld [vmem:[#allocation11 + $0xc0] sm:$0xff]
        %v1807 = vld [vmem:[#allocation11 + $0xc8] sm:$0xff]
        %v1808 = vld [vmem:[#allocation11 + $0xd0] sm:$0xff]
        %v1809 = vld [vmem:[#allocation11 + $0xd8] sm:$0xff]
        %v1810 = vld [vmem:[#allocation11 + $0xe0] sm:$0xff]
        %v1811 = vld [vmem:[#allocation11 + $0xe8] sm:$0xff]
        %v1812 = vld [vmem:[#allocation11 + $0xf0] sm:$0xff]
        %v1813 = vld [vmem:[#allocation11 + $0xf8] sm:$0xff]
        %v1814 = vld [vmem:[#allocation11 + $0x100] sm:$0xff]
        %v1815 = vld [vmem:[#allocation11 + $0x108] sm:$0xff]
        %v1816 = vld [vmem:[#allocation11 + $0x110] sm:$0xff]
        %v1817 = vld [vmem:[#allocation11 + $0x118] sm:$0xff]
        %v1818 = vld [vmem:[#allocation11 + $0x120] sm:$0xff]
        %v1819 = vld [vmem:[#allocation11 + $0x128] sm:$0xff]
        %v1820 = vld [vmem:[#allocation11 + $0x130] sm:$0xff]
        %v1821 = vld [vmem:[#allocation11 + $0x138] sm:$0xff]
        %v1822 = vld [vmem:[#allocation11 + $0x140] sm:$0xff]
        %v1823 = vld [vmem:[#allocation11 + $0x148] sm:$0xff]
        %v1824 = vld [vmem:[#allocation11 + $0x150] sm:$0xff]
        %v1825 = vld [vmem:[#allocation11 + $0x158] sm:$0xff]
        %v1826 = vld [vmem:[#allocation11 + $0x160] sm:$0xff]
        %v1827 = vld [vmem:[#allocation11 + $0x168] sm:$0xff]
        %v1828 = vld [vmem:[#allocation11 + $0x170] sm:$0xff]
        %v1829 = vld [vmem:[#allocation11 + $0x178] sm:$0xff]
        %v1830 = vld [vmem:[#allocation11 + $0x180] sm:$0xff]
        %v1831 = vld [vmem:[#allocation11 + $0x188] sm:$0xff]
        %v1832 = vld [vmem:[#allocation11 + $0x190] sm:$0xff]
        %v1833 = vld [vmem:[#allocation11 + $0x198] sm:$0xff]
        %v1834 = vld [vmem:[#allocation11 + $0x1a0] sm:$0xff]
        %v1835 = vld [vmem:[#allocation11 + $0x1a8] sm:$0xff]
        %v1836 = vld [vmem:[#allocation11 + $0x1b0] sm:$0xff]
        %v1837 = vld [vmem:[#allocation11 + $0x1b8] sm:$0xff]
        %v1838 = vld [vmem:[#allocation11 + $0x1c0] sm:$0xff]
        %v1839 = vld [vmem:[#allocation11 + $0x1c8] sm:$0xff]
        %v1840 = vld [vmem:[#allocation11 + $0x1d0] sm:$0xff]
        %v1841 = vld [vmem:[#allocation11 + $0x1d8] sm:$0xff]
        %v1842 = vld [vmem:[#allocation11 + $0x1e0] sm:$0xff]
        %v1843 = vld [vmem:[#allocation11 + $0x1e8] sm:$0xff]
        %v1844 = vld [vmem:[#allocation11 + $0x1f0] sm:$0xff]
        %v1845 = vld [vmem:[#allocation11 + $0x1f8] sm:$0xff]
        %s1846 = scalar_lea.vmem [#allocation13], 2
        %v1847 = vld [vmem:[%s1846] sm:$0x3]
        %v1849 = vsel %vm1731, %v1847, 0
        %1851 = vmatpush.msra.mxu0 0.0
        %1852 = vmatpush.msra.mxu0 0.0
        %1853 = vmatpush.msra.mxu0 0.0
        %1854 = vmatpush.msra.mxu0 0.0
        %1855 = vmatpush.msra.mxu0 0.0
        %1856 = vmatpush.msra.mxu0 0.0
        %1857 = vmatpush.msra.mxu0 0.0
        %1858 = vmatpush.msra.mxu0 0.0
        %1859 = vmatpush.msra.mxu0 0.0
        %1860 = vmatpush.msra.mxu0 0.0
        %1861 = vmatpush.msra.mxu0 0.0
        %1862 = vmatpush.msra.mxu0 0.0
        %1863 = vmatpush.msra.mxu0 0.0
        %1864 = vmatpush.msra.mxu0 0.0
        %1865 = vmatpush.msra.mxu0 0.0
        %1866 = vmatpush.msra.mxu0 %v1737
        %1867 = vmatmul.f32.gmra.mxu0 %v1849
        %v1868 = vpop.f32.mrf.mxu0
        %v1869 = vadd.f32 0.0, %v1868
        %1870 = vdwg.mxu0
        %1871 = vmatpush.msra.mxu0 0.0
        %1872 = vmatpush.msra.mxu0 0.0
        %1873 = vmatpush.msra.mxu0 0.0
        %1874 = vmatpush.msra.mxu0 0.0
        %1875 = vmatpush.msra.mxu0 0.0
        %1876 = vmatpush.msra.mxu0 0.0
        %1877 = vmatpush.msra.mxu0 0.0
        %1878 = vmatpush.msra.mxu0 0.0
        %1879 = vmatpush.msra.mxu0 0.0
        %1880 = vmatpush.msra.mxu0 0.0
        %1881 = vmatpush.msra.mxu0 0.0
        %1882 = vmatpush.msra.mxu0 0.0
        %1883 = vmatpush.msra.mxu0 0.0
        %1884 = vmatpush.msra.mxu0 0.0
        %1885 = vmatpush.msra.mxu0 0.0
        %1886 = vmatpush.msra.mxu0 %v1740
        %1887 = vmatmul.f32.gmra.mxu0 %v1849
        %v1888 = vpop.f32.mrf.mxu0
        %v1889 = vadd.f32 0.0, %v1888
        %1890 = vdwg.mxu0
        %s1891 = scalar_lea.vmem [#allocation11], 512
        %v1892 = vld [vmem:[%s1891] sm:$0xff]
        %v1893 = vld [vmem:[%s1891 + $0x8] sm:$0xff]
        %v1894 = vld [vmem:[%s1891 + $0x10] sm:$0xff]
        %v1895 = vld [vmem:[%s1891 + $0x18] sm:$0xff]
        %v1896 = vld [vmem:[%s1891 + $0x20] sm:$0xff]
        %v1897 = vld [vmem:[%s1891 + $0x28] sm:$0xff]
        %v1898 = vld [vmem:[%s1891 + $0x30] sm:$0xff]
        %v1899 = vld [vmem:[%s1891 + $0x38] sm:$0xff]
        %v1900 = vld [vmem:[%s1891 + $0x40] sm:$0xff]
        %v1901 = vld [vmem:[%s1891 + $0x48] sm:$0xff]
        %v1902 = vld [vmem:[%s1891 + $0x50] sm:$0xff]
        %v1903 = vld [vmem:[%s1891 + $0x58] sm:$0xff]
        %v1904 = vld [vmem:[%s1891 + $0x60] sm:$0xff]
        %v1905 = vld [vmem:[%s1891 + $0x68] sm:$0xff]
        %v1906 = vld [vmem:[%s1891 + $0x70] sm:$0xff]
        %v1907 = vld [vmem:[%s1891 + $0x78] sm:$0xff]
        %v1908 = vld [vmem:[%s1891 + $0x80] sm:$0xff]
        %v1909 = vld [vmem:[%s1891 + $0x88] sm:$0xff]
        %v1910 = vld [vmem:[%s1891 + $0x90] sm:$0xff]
        %v1911 = vld [vmem:[%s1891 + $0x98] sm:$0xff]
        %v1912 = vld [vmem:[%s1891 + $0xa0] sm:$0xff]
        %v1913 = vld [vmem:[%s1891 + $0xa8] sm:$0xff]
        %v1914 = vld [vmem:[%s1891 + $0xb0] sm:$0xff]
        %v1915 = vld [vmem:[%s1891 + $0xb8] sm:$0xff]
        %v1916 = vld [vmem:[%s1891 + $0xc0] sm:$0xff]
        %v1917 = vld [vmem:[%s1891 + $0xc8] sm:$0xff]
        %v1918 = vld [vmem:[%s1891 + $0xd0] sm:$0xff]
        %v1919 = vld [vmem:[%s1891 + $0xd8] sm:$0xff]
        %v1920 = vld [vmem:[%s1891 + $0xe0] sm:$0xff]
        %v1921 = vld [vmem:[%s1891 + $0xe8] sm:$0xff]
        %v1922 = vld [vmem:[%s1891 + $0xf0] sm:$0xff]
        %v1923 = vld [vmem:[%s1891 + $0xf8] sm:$0xff]
        %v1924 = vld [vmem:[%s1891 + $0x100] sm:$0xff]
        %v1925 = vld [vmem:[%s1891 + $0x108] sm:$0xff]
        %v1926 = vld [vmem:[%s1891 + $0x110] sm:$0xff]
        %v1927 = vld [vmem:[%s1891 + $0x118] sm:$0xff]
        %v1928 = vld [vmem:[%s1891 + $0x120] sm:$0xff]
        %v1929 = vld [vmem:[%s1891 + $0x128] sm:$0xff]
        %v1930 = vld [vmem:[%s1891 + $0x130] sm:$0xff]
        %v1931 = vld [vmem:[%s1891 + $0x138] sm:$0xff]
        %v1932 = vld [vmem:[%s1891 + $0x140] sm:$0xff]
        %v1933 = vld [vmem:[%s1891 + $0x148] sm:$0xff]
        %v1934 = vld [vmem:[%s1891 + $0x150] sm:$0xff]
        %v1935 = vld [vmem:[%s1891 + $0x158] sm:$0xff]
        %v1936 = vld [vmem:[%s1891 + $0x160] sm:$0xff]
        %v1937 = vld [vmem:[%s1891 + $0x168] sm:$0xff]
        %v1938 = vld [vmem:[%s1891 + $0x170] sm:$0xff]
        %v1939 = vld [vmem:[%s1891 + $0x178] sm:$0xff]
        %v1940 = vld [vmem:[%s1891 + $0x180] sm:$0xff]
        %v1941 = vld [vmem:[%s1891 + $0x188] sm:$0xff]
        %v1942 = vld [vmem:[%s1891 + $0x190] sm:$0xff]
        %v1943 = vld [vmem:[%s1891 + $0x198] sm:$0xff]
        %v1944 = vld [vmem:[%s1891 + $0x1a0] sm:$0xff]
        %v1945 = vld [vmem:[%s1891 + $0x1a8] sm:$0xff]
        %v1946 = vld [vmem:[%s1891 + $0x1b0] sm:$0xff]
        %v1947 = vld [vmem:[%s1891 + $0x1b8] sm:$0xff]
        %v1948 = vld [vmem:[%s1891 + $0x1c0] sm:$0xff]
        %v1949 = vld [vmem:[%s1891 + $0x1c8] sm:$0xff]
        %v1950 = vld [vmem:[%s1891 + $0x1d0] sm:$0xff]
        %v1951 = vld [vmem:[%s1891 + $0x1d8] sm:$0xff]
        %v1952 = vld [vmem:[%s1891 + $0x1e0] sm:$0xff]
        %v1953 = vld [vmem:[%s1891 + $0x1e8] sm:$0xff]
        %v1954 = vld [vmem:[%s1891 + $0x1f0] sm:$0xff]
        %v1955 = vld [vmem:[%s1891 + $0x1f8] sm:$0xff]
        %1956 = vmatpush.msra.mxu0 %v1922
        %1957 = vmatpush.msra.mxu0 %v1920
        %1958 = vmatpush.msra.mxu0 %v1918
        %1959 = vmatpush.msra.mxu0 %v1916
        %1960 = vmatpush.msra.mxu0 %v1914
        %1961 = vmatpush.msra.mxu0 %v1912
        %1962 = vmatpush.msra.mxu0 %v1910
        %1963 = vmatpush.msra.mxu0 %v1908
        %1964 = vmatpush.msra.mxu0 %v1906
        %1965 = vmatpush.msra.mxu0 %v1904
        %1966 = vmatpush.msra.mxu0 %v1902
        %1967 = vmatpush.msra.mxu0 %v1900
        %1968 = vmatpush.msra.mxu0 %v1898
        %1969 = vmatpush.msra.mxu0 %v1896
        %1970 = vmatpush.msra.mxu0 %v1894
        %1971 = vmatpush.msra.mxu0 %v1892
        %1972 = vmatmul.f32.gmra.mxu0 %v1869
        %v1973 = vpop.f32.mrf.mxu0
        %v1974 = vadd.f32 0.0, %v1973
        %1975 = vdwg.mxu0
        %1976 = vmatpush.msra.mxu0 %v1954
        %1977 = vmatpush.msra.mxu0 %v1952
        %1978 = vmatpush.msra.mxu0 %v1950
        %1979 = vmatpush.msra.mxu0 %v1948
        %1980 = vmatpush.msra.mxu0 %v1946
        %1981 = vmatpush.msra.mxu0 %v1944
        %1982 = vmatpush.msra.mxu0 %v1942
        %1983 = vmatpush.msra.mxu0 %v1940
        %1984 = vmatpush.msra.mxu0 %v1938
        %1985 = vmatpush.msra.mxu0 %v1936
        %1986 = vmatpush.msra.mxu0 %v1934
        %1987 = vmatpush.msra.mxu0 %v1932
        %1988 = vmatpush.msra.mxu0 %v1930
        %1989 = vmatpush.msra.mxu0 %v1928
        %1990 = vmatpush.msra.mxu0 %v1926
        %1991 = vmatpush.msra.mxu0 %v1924
        %1992 = vmatmul.f32.gmra.mxu0 %v1889
        %v1993 = vpop.f32.mrf.mxu0
        %v1994 = vadd.f32 %v1974, %v1993
        %1995 = vdwg.mxu0
        %1996 = vmatpush.msra.mxu0 %v1923
        %1997 = vmatpush.msra.mxu0 %v1921
        %1998 = vmatpush.msra.mxu0 %v1919
        %1999 = vmatpush.msra.mxu0 %v1917
        %2000 = vmatpush.msra.mxu0 %v1915
        %2001 = vmatpush.msra.mxu0 %v1913
        %2002 = vmatpush.msra.mxu0 %v1911
        %2003 = vmatpush.msra.mxu0 %v1909
        %2004 = vmatpush.msra.mxu0 %v1907
        %2005 = vmatpush.msra.mxu0 %v1905
        %2006 = vmatpush.msra.mxu0 %v1903
        %2007 = vmatpush.msra.mxu0 %v1901
        %2008 = vmatpush.msra.mxu0 %v1899
        %2009 = vmatpush.msra.mxu0 %v1897
        %2010 = vmatpush.msra.mxu0 %v1895
        %2011 = vmatpush.msra.mxu0 %v1893
        %2012 = vmatmul.f32.gmra.mxu0 %v1869
        %v2013 = vpop.f32.mrf.mxu0
        %v2014 = vadd.f32 0.0, %v2013
        %2015 = vdwg.mxu0
        %2016 = vmatpush.msra.mxu0 %v1955
        %2017 = vmatpush.msra.mxu0 %v1953
        %2018 = vmatpush.msra.mxu0 %v1951
        %2019 = vmatpush.msra.mxu0 %v1949
        %2020 = vmatpush.msra.mxu0 %v1947
        %2021 = vmatpush.msra.mxu0 %v1945
        %2022 = vmatpush.msra.mxu0 %v1943
        %2023 = vmatpush.msra.mxu0 %v1941
        %2024 = vmatpush.msra.mxu0 %v1939
        %2025 = vmatpush.msra.mxu0 %v1937
        %2026 = vmatpush.msra.mxu0 %v1935
        %2027 = vmatpush.msra.mxu0 %v1933
        %2028 = vmatpush.msra.mxu0 %v1931
        %2029 = vmatpush.msra.mxu0 %v1929
        %2030 = vmatpush.msra.mxu0 %v1927
        %2031 = vmatpush.msra.mxu0 %v1925
        %2032 = vmatmul.f32.gmra.mxu0 %v1889
        %v2033 = vpop.f32.mrf.mxu0
        %v2034 = vadd.f32 %v2014, %v2033
        %2035 = vdwg.mxu0
        %2036 = vmatpush.msra.mxu0 %v1812
        %2037 = vmatpush.msra.mxu0 %v1810
        %2038 = vmatpush.msra.mxu0 %v1808
        %2039 = vmatpush.msra.mxu0 %v1806
        %2040 = vmatpush.msra.mxu0 %v1804
        %2041 = vmatpush.msra.mxu0 %v1802
        %2042 = vmatpush.msra.mxu0 %v1800
        %2043 = vmatpush.msra.mxu0 %v1798
        %2044 = vmatpush.msra.mxu0 %v1796
        %2045 = vmatpush.msra.mxu0 %v1794
        %2046 = vmatpush.msra.mxu0 %v1792
        %2047 = vmatpush.msra.mxu0 %v1790
        %2048 = vmatpush.msra.mxu0 %v1788
        %2049 = vmatpush.msra.mxu0 %v1786
        %2050 = vmatpush.msra.mxu0 %v1784
        %2051 = vmatpush.msra.mxu0 %v1782
        %2052 = vmatmul.f32.gmra.mxu0 %v1760
        %v2053 = vpop.f32.mrf.mxu0
        %v2054 = vadd.f32 %v1994, %v2053
        %2055 = vdwg.mxu0
        %2056 = vmatpush.msra.mxu0 %v1844
        %2057 = vmatpush.msra.mxu0 %v1842
        %2058 = vmatpush.msra.mxu0 %v1840
        %2059 = vmatpush.msra.mxu0 %v1838
        %2060 = vmatpush.msra.mxu0 %v1836
        %2061 = vmatpush.msra.mxu0 %v1834
        %2062 = vmatpush.msra.mxu0 %v1832
        %2063 = vmatpush.msra.mxu0 %v1830
        %2064 = vmatpush.msra.mxu0 %v1828
        %2065 = vmatpush.msra.mxu0 %v1826
        %2066 = vmatpush.msra.mxu0 %v1824
        %2067 = vmatpush.msra.mxu0 %v1822
        %2068 = vmatpush.msra.mxu0 %v1820
        %2069 = vmatpush.msra.mxu0 %v1818
        %2070 = vmatpush.msra.mxu0 %v1816
        %2071 = vmatpush.msra.mxu0 %v1814
        %2072 = vmatmul.f32.gmra.mxu0 %v1780
        %v2073 = vpop.f32.mrf.mxu0
        %v2074 = vadd.f32 %v2054, %v2073
        %2075 = vdwg.mxu0
        %2076 = vmatpush.msra.mxu0 %v1813
        %2077 = vmatpush.msra.mxu0 %v1811
        %2078 = vmatpush.msra.mxu0 %v1809
        %2079 = vmatpush.msra.mxu0 %v1807
        %2080 = vmatpush.msra.mxu0 %v1805
        %2081 = vmatpush.msra.mxu0 %v1803
        %2082 = vmatpush.msra.mxu0 %v1801
        %2083 = vmatpush.msra.mxu0 %v1799
        %2084 = vmatpush.msra.mxu0 %v1797
        %2085 = vmatpush.msra.mxu0 %v1795
        %2086 = vmatpush.msra.mxu0 %v1793
        %2087 = vmatpush.msra.mxu0 %v1791
        %2088 = vmatpush.msra.mxu0 %v1789
        %2089 = vmatpush.msra.mxu0 %v1787
        %2090 = vmatpush.msra.mxu0 %v1785
        %2091 = vmatpush.msra.mxu0 %v1783
        %2092 = vmatmul.f32.gmra.mxu0 %v1760
        %v2093 = vpop.f32.mrf.mxu0
        %v2094 = vadd.f32 %v2034, %v2093
        %2095 = vdwg.mxu0
        %2096 = vmatpush.msra.mxu0 %v1845
        %2097 = vmatpush.msra.mxu0 %v1843
        %2098 = vmatpush.msra.mxu0 %v1841
        %2099 = vmatpush.msra.mxu0 %v1839
        %2100 = vmatpush.msra.mxu0 %v1837
        %2101 = vmatpush.msra.mxu0 %v1835
        %2102 = vmatpush.msra.mxu0 %v1833
        %2103 = vmatpush.msra.mxu0 %v1831
        %2104 = vmatpush.msra.mxu0 %v1829
        %2105 = vmatpush.msra.mxu0 %v1827
        %2106 = vmatpush.msra.mxu0 %v1825
        %2107 = vmatpush.msra.mxu0 %v1823
        %2108 = vmatpush.msra.mxu0 %v1821
        %2109 = vmatpush.msra.mxu0 %v1819
        %2110 = vmatpush.msra.mxu0 %v1817
        %2111 = vmatpush.msra.mxu0 %v1815
        %2112 = vmatmul.f32.gmra.mxu0 %v1780
        %v2113 = vpop.f32.mrf.mxu0
        %v2114 = vadd.f32 %v2094, %v2113
        %2115 = vdwg.mxu0
        %s2116 = scalar_lea.vmem [#allocation13], 4
        %v2117 = vld [vmem:[%s2116] sm:$0x3]
        %v2119 = vsel %vm1731, %v2117, 0
        %2121 = vmatpush.msra.mxu0 0.0
        %2122 = vmatpush.msra.mxu0 0.0
        %2123 = vmatpush.msra.mxu0 0.0
        %2124 = vmatpush.msra.mxu0 0.0
        %2125 = vmatpush.msra.mxu0 0.0
        %2126 = vmatpush.msra.mxu0 0.0
        %2127 = vmatpush.msra.mxu0 0.0
        %2128 = vmatpush.msra.mxu0 0.0
        %2129 = vmatpush.msra.mxu0 0.0
        %2130 = vmatpush.msra.mxu0 0.0
        %2131 = vmatpush.msra.mxu0 0.0
        %2132 = vmatpush.msra.mxu0 0.0
        %2133 = vmatpush.msra.mxu0 0.0
        %2134 = vmatpush.msra.mxu0 0.0
        %2135 = vmatpush.msra.mxu0 0.0
        %2136 = vmatpush.msra.mxu0 %v1737
        %2137 = vmatmul.f32.gmra.mxu0 %v2119
        %v2138 = vpop.f32.mrf.mxu0
        %v2139 = vadd.f32 0.0, %v2138
        %2140 = vdwg.mxu0
        %2141 = vmatpush.msra.mxu0 0.0
        %2142 = vmatpush.msra.mxu0 0.0
        %2143 = vmatpush.msra.mxu0 0.0
        %2144 = vmatpush.msra.mxu0 0.0
        %2145 = vmatpush.msra.mxu0 0.0
        %2146 = vmatpush.msra.mxu0 0.0
        %2147 = vmatpush.msra.mxu0 0.0
        %2148 = vmatpush.msra.mxu0 0.0
        %2149 = vmatpush.msra.mxu0 0.0
        %2150 = vmatpush.msra.mxu0 0.0
        %2151 = vmatpush.msra.mxu0 0.0
        %2152 = vmatpush.msra.mxu0 0.0
        %2153 = vmatpush.msra.mxu0 0.0
        %2154 = vmatpush.msra.mxu0 0.0
        %2155 = vmatpush.msra.mxu0 0.0
        %2156 = vmatpush.msra.mxu0 %v1740
        %2157 = vmatmul.f32.gmra.mxu0 %v2119
        %v2158 = vpop.f32.mrf.mxu0
        %v2159 = vadd.f32 0.0, %v2158
        %2160 = vdwg.mxu0
        %s2161 = scalar_lea.vmem [#allocation11], 1024
        %v2162 = vld [vmem:[%s2161] sm:$0xff]
        %v2163 = vld [vmem:[%s2161 + $0x8] sm:$0xff]
        %v2164 = vld [vmem:[%s2161 + $0x10] sm:$0xff]
        %v2165 = vld [vmem:[%s2161 + $0x18] sm:$0xff]
        %v2166 = vld [vmem:[%s2161 + $0x20] sm:$0xff]
        %v2167 = vld [vmem:[%s2161 + $0x28] sm:$0xff]
        %v2168 = vld [vmem:[%s2161 + $0x30] sm:$0xff]
        %v2169 = vld [vmem:[%s2161 + $0x38] sm:$0xff]
        %v2170 = vld [vmem:[%s2161 + $0x40] sm:$0xff]
        %v2171 = vld [vmem:[%s2161 + $0x48] sm:$0xff]
        %v2172 = vld [vmem:[%s2161 + $0x50] sm:$0xff]
        %v2173 = vld [vmem:[%s2161 + $0x58] sm:$0xff]
        %v2174 = vld [vmem:[%s2161 + $0x60] sm:$0xff]
        %v2175 = vld [vmem:[%s2161 + $0x68] sm:$0xff]
        %v2176 = vld [vmem:[%s2161 + $0x70] sm:$0xff]
        %v2177 = vld [vmem:[%s2161 + $0x78] sm:$0xff]
        %v2178 = vld [vmem:[%s2161 + $0x80] sm:$0xff]
        %v2179 = vld [vmem:[%s2161 + $0x88] sm:$0xff]
        %v2180 = vld [vmem:[%s2161 + $0x90] sm:$0xff]
        %v2181 = vld [vmem:[%s2161 + $0x98] sm:$0xff]
        %v2182 = vld [vmem:[%s2161 + $0xa0] sm:$0xff]
        %v2183 = vld [vmem:[%s2161 + $0xa8] sm:$0xff]
        %v2184 = vld [vmem:[%s2161 + $0xb0] sm:$0xff]
        %v2185 = vld [vmem:[%s2161 + $0xb8] sm:$0xff]
        %v2186 = vld [vmem:[%s2161 + $0xc0] sm:$0xff]
        %v2187 = vld [vmem:[%s2161 + $0xc8] sm:$0xff]
        %v2188 = vld [vmem:[%s2161 + $0xd0] sm:$0xff]
        %v2189 = vld [vmem:[%s2161 + $0xd8] sm:$0xff]
        %v2190 = vld [vmem:[%s2161 + $0xe0] sm:$0xff]
        %v2191 = vld [vmem:[%s2161 + $0xe8] sm:$0xff]
        %v2192 = vld [vmem:[%s2161 + $0xf0] sm:$0xff]
        %v2193 = vld [vmem:[%s2161 + $0xf8] sm:$0xff]
        %v2194 = vld [vmem:[%s2161 + $0x100] sm:$0xff]
        %v2195 = vld [vmem:[%s2161 + $0x108] sm:$0xff]
        %v2196 = vld [vmem:[%s2161 + $0x110] sm:$0xff]
        %v2197 = vld [vmem:[%s2161 + $0x118] sm:$0xff]
        %v2198 = vld [vmem:[%s2161 + $0x120] sm:$0xff]
        %v2199 = vld [vmem:[%s2161 + $0x128] sm:$0xff]
        %v2200 = vld [vmem:[%s2161 + $0x130] sm:$0xff]
        %v2201 = vld [vmem:[%s2161 + $0x138] sm:$0xff]
        %v2202 = vld [vmem:[%s2161 + $0x140] sm:$0xff]
        %v2203 = vld [vmem:[%s2161 + $0x148] sm:$0xff]
        %v2204 = vld [vmem:[%s2161 + $0x150] sm:$0xff]
        %v2205 = vld [vmem:[%s2161 + $0x158] sm:$0xff]
        %v2206 = vld [vmem:[%s2161 + $0x160] sm:$0xff]
        %v2207 = vld [vmem:[%s2161 + $0x168] sm:$0xff]
        %v2208 = vld [vmem:[%s2161 + $0x170] sm:$0xff]
        %v2209 = vld [vmem:[%s2161 + $0x178] sm:$0xff]
        %v2210 = vld [vmem:[%s2161 + $0x180] sm:$0xff]
        %v2211 = vld [vmem:[%s2161 + $0x188] sm:$0xff]
        %v2212 = vld [vmem:[%s2161 + $0x190] sm:$0xff]
        %v2213 = vld [vmem:[%s2161 + $0x198] sm:$0xff]
        %v2214 = vld [vmem:[%s2161 + $0x1a0] sm:$0xff]
        %v2215 = vld [vmem:[%s2161 + $0x1a8] sm:$0xff]
        %v2216 = vld [vmem:[%s2161 + $0x1b0] sm:$0xff]
        %v2217 = vld [vmem:[%s2161 + $0x1b8] sm:$0xff]
        %v2218 = vld [vmem:[%s2161 + $0x1c0] sm:$0xff]
        %v2219 = vld [vmem:[%s2161 + $0x1c8] sm:$0xff]
        %v2220 = vld [vmem:[%s2161 + $0x1d0] sm:$0xff]
        %v2221 = vld [vmem:[%s2161 + $0x1d8] sm:$0xff]
        %v2222 = vld [vmem:[%s2161 + $0x1e0] sm:$0xff]
        %v2223 = vld [vmem:[%s2161 + $0x1e8] sm:$0xff]
        %v2224 = vld [vmem:[%s2161 + $0x1f0] sm:$0xff]
        %v2225 = vld [vmem:[%s2161 + $0x1f8] sm:$0xff]
        %2226 = vmatpush.msra.mxu0 %v2192
        %2227 = vmatpush.msra.mxu0 %v2190
        %2228 = vmatpush.msra.mxu0 %v2188
        %2229 = vmatpush.msra.mxu0 %v2186
        %2230 = vmatpush.msra.mxu0 %v2184
        %2231 = vmatpush.msra.mxu0 %v2182
        %2232 = vmatpush.msra.mxu0 %v2180
        %2233 = vmatpush.msra.mxu0 %v2178
        %2234 = vmatpush.msra.mxu0 %v2176
        %2235 = vmatpush.msra.mxu0 %v2174
        %2236 = vmatpush.msra.mxu0 %v2172
        %2237 = vmatpush.msra.mxu0 %v2170
        %2238 = vmatpush.msra.mxu0 %v2168
        %2239 = vmatpush.msra.mxu0 %v2166
        %2240 = vmatpush.msra.mxu0 %v2164
        %2241 = vmatpush.msra.mxu0 %v2162
        %2242 = vmatmul.f32.gmra.mxu0 %v2139
        %v2243 = vpop.f32.mrf.mxu0
        %v2244 = vadd.f32 0.0, %v2243
        %2245 = vdwg.mxu0
        %2246 = vmatpush.msra.mxu0 %v2224
        %2247 = vmatpush.msra.mxu0 %v2222
        %2248 = vmatpush.msra.mxu0 %v2220
        %2249 = vmatpush.msra.mxu0 %v2218
        %2250 = vmatpush.msra.mxu0 %v2216
        %2251 = vmatpush.msra.mxu0 %v2214
        %2252 = vmatpush.msra.mxu0 %v2212
        %2253 = vmatpush.msra.mxu0 %v2210
        %2254 = vmatpush.msra.mxu0 %v2208
        %2255 = vmatpush.msra.mxu0 %v2206
        %2256 = vmatpush.msra.mxu0 %v2204
        %2257 = vmatpush.msra.mxu0 %v2202
        %2258 = vmatpush.msra.mxu0 %v2200
        %2259 = vmatpush.msra.mxu0 %v2198
        %2260 = vmatpush.msra.mxu0 %v2196
        %2261 = vmatpush.msra.mxu0 %v2194
        %2262 = vmatmul.f32.gmra.mxu0 %v2159
        %v2263 = vpop.f32.mrf.mxu0
        %v2264 = vadd.f32 %v2244, %v2263
        %2265 = vdwg.mxu0
        %2266 = vmatpush.msra.mxu0 %v2193
        %2267 = vmatpush.msra.mxu0 %v2191
        %2268 = vmatpush.msra.mxu0 %v2189
        %2269 = vmatpush.msra.mxu0 %v2187
        %2270 = vmatpush.msra.mxu0 %v2185
        %2271 = vmatpush.msra.mxu0 %v2183
        %2272 = vmatpush.msra.mxu0 %v2181
        %2273 = vmatpush.msra.mxu0 %v2179
        %2274 = vmatpush.msra.mxu0 %v2177
        %2275 = vmatpush.msra.mxu0 %v2175
        %2276 = vmatpush.msra.mxu0 %v2173
        %2277 = vmatpush.msra.mxu0 %v2171
        %2278 = vmatpush.msra.mxu0 %v2169
        %2279 = vmatpush.msra.mxu0 %v2167
        %2280 = vmatpush.msra.mxu0 %v2165
        %2281 = vmatpush.msra.mxu0 %v2163
        %2282 = vmatmul.f32.gmra.mxu0 %v2139
        %v2283 = vpop.f32.mrf.mxu0
        %v2284 = vadd.f32 0.0, %v2283
        %2285 = vdwg.mxu0
        %2286 = vmatpush.msra.mxu0 %v2225
        %2287 = vmatpush.msra.mxu0 %v2223
        %2288 = vmatpush.msra.mxu0 %v2221
        %2289 = vmatpush.msra.mxu0 %v2219
        %2290 = vmatpush.msra.mxu0 %v2217
        %2291 = vmatpush.msra.mxu0 %v2215
        %2292 = vmatpush.msra.mxu0 %v2213
        %2293 = vmatpush.msra.mxu0 %v2211
        %2294 = vmatpush.msra.mxu0 %v2209
        %2295 = vmatpush.msra.mxu0 %v2207
        %2296 = vmatpush.msra.mxu0 %v2205
        %2297 = vmatpush.msra.mxu0 %v2203
        %2298 = vmatpush.msra.mxu0 %v2201
        %2299 = vmatpush.msra.mxu0 %v2199
        %2300 = vmatpush.msra.mxu0 %v2197
        %2301 = vmatpush.msra.mxu0 %v2195
        %2302 = vmatmul.f32.gmra.mxu0 %v2159
        %v2303 = vpop.f32.mrf.mxu0
        %v2304 = vadd.f32 %v2284, %v2303
        %2305 = vdwg.mxu0
        %v2306 = vadd.f32 %v2074, %v2264
        %v2307 = vadd.f32 %v2114, %v2304
        %s2308 = scalar_lea.vmem [#allocation13], 6
        %v2309 = vld [vmem:[%s2308] sm:$0x3]
        %v2311 = vsel %vm1731, %v2309, 0
        %2313 = vmatpush.msra.mxu0 0.0
        %2314 = vmatpush.msra.mxu0 0.0
        %2315 = vmatpush.msra.mxu0 0.0
        %2316 = vmatpush.msra.mxu0 0.0
        %2317 = vmatpush.msra.mxu0 0.0
        %2318 = vmatpush.msra.mxu0 0.0
        %2319 = vmatpush.msra.mxu0 0.0
        %2320 = vmatpush.msra.mxu0 0.0
        %2321 = vmatpush.msra.mxu0 0.0
        %2322 = vmatpush.msra.mxu0 0.0
        %2323 = vmatpush.msra.mxu0 0.0
        %2324 = vmatpush.msra.mxu0 0.0
        %2325 = vmatpush.msra.mxu0 0.0
        %2326 = vmatpush.msra.mxu0 0.0
        %2327 = vmatpush.msra.mxu0 0.0
        %2328 = vmatpush.msra.mxu0 %v1737
        %2329 = vmatmul.f32.gmra.mxu0 %v2311
        %v2330 = vpop.f32.mrf.mxu0
        %v2331 = vadd.f32 0.0, %v2330
        %2332 = vdwg.mxu0
        %2333 = vmatpush.msra.mxu0 0.0
        %2334 = vmatpush.msra.mxu0 0.0
        %2335 = vmatpush.msra.mxu0 0.0
        %2336 = vmatpush.msra.mxu0 0.0
        %2337 = vmatpush.msra.mxu0 0.0
        %2338 = vmatpush.msra.mxu0 0.0
        %2339 = vmatpush.msra.mxu0 0.0
        %2340 = vmatpush.msra.mxu0 0.0
        %2341 = vmatpush.msra.mxu0 0.0
        %2342 = vmatpush.msra.mxu0 0.0
        %2343 = vmatpush.msra.mxu0 0.0
        %2344 = vmatpush.msra.mxu0 0.0
        %2345 = vmatpush.msra.mxu0 0.0
        %2346 = vmatpush.msra.mxu0 0.0
        %2347 = vmatpush.msra.mxu0 0.0
        %2348 = vmatpush.msra.mxu0 %v1740
        %2349 = vmatmul.f32.gmra.mxu0 %v2311
        %v2350 = vpop.f32.mrf.mxu0
        %v2351 = vadd.f32 0.0, %v2350
        %2352 = vdwg.mxu0
        %s2353 = scalar_lea.vmem [#allocation11], 1536
        %v2354 = vld [vmem:[%s2353] sm:$0xff]
        %v2355 = vld [vmem:[%s2353 + $0x8] sm:$0xff]
        %v2356 = vld [vmem:[%s2353 + $0x10] sm:$0xff]
        %v2357 = vld [vmem:[%s2353 + $0x18] sm:$0xff]
        %v2358 = vld [vmem:[%s2353 + $0x20] sm:$0xff]
        %v2359 = vld [vmem:[%s2353 + $0x28] sm:$0xff]
        %v2360 = vld [vmem:[%s2353 + $0x30] sm:$0xff]
        %v2361 = vld [vmem:[%s2353 + $0x38] sm:$0xff]
        %v2362 = vld [vmem:[%s2353 + $0x40] sm:$0xff]
        %v2363 = vld [vmem:[%s2353 + $0x48] sm:$0xff]
        %v2364 = vld [vmem:[%s2353 + $0x50] sm:$0xff]
        %v2365 = vld [vmem:[%s2353 + $0x58] sm:$0xff]
        %v2366 = vld [vmem:[%s2353 + $0x60] sm:$0xff]
        %v2367 = vld [vmem:[%s2353 + $0x68] sm:$0xff]
        %v2368 = vld [vmem:[%s2353 + $0x70] sm:$0xff]
        %v2369 = vld [vmem:[%s2353 + $0x78] sm:$0xff]
        %v2370 = vld [vmem:[%s2353 + $0x80] sm:$0xff]
        %v2371 = vld [vmem:[%s2353 + $0x88] sm:$0xff]
        %v2372 = vld [vmem:[%s2353 + $0x90] sm:$0xff]
        %v2373 = vld [vmem:[%s2353 + $0x98] sm:$0xff]
        %v2374 = vld [vmem:[%s2353 + $0xa0] sm:$0xff]
        %v2375 = vld [vmem:[%s2353 + $0xa8] sm:$0xff]
        %v2376 = vld [vmem:[%s2353 + $0xb0] sm:$0xff]
        %v2377 = vld [vmem:[%s2353 + $0xb8] sm:$0xff]
        %v2378 = vld [vmem:[%s2353 + $0xc0] sm:$0xff]
        %v2379 = vld [vmem:[%s2353 + $0xc8] sm:$0xff]
        %v2380 = vld [vmem:[%s2353 + $0xd0] sm:$0xff]
        %v2381 = vld [vmem:[%s2353 + $0xd8] sm:$0xff]
        %v2382 = vld [vmem:[%s2353 + $0xe0] sm:$0xff]
        %v2383 = vld [vmem:[%s2353 + $0xe8] sm:$0xff]
        %v2384 = vld [vmem:[%s2353 + $0xf0] sm:$0xff]
        %v2385 = vld [vmem:[%s2353 + $0xf8] sm:$0xff]
        %v2386 = vld [vmem:[%s2353 + $0x100] sm:$0xff]
        %v2387 = vld [vmem:[%s2353 + $0x108] sm:$0xff]
        %v2388 = vld [vmem:[%s2353 + $0x110] sm:$0xff]
        %v2389 = vld [vmem:[%s2353 + $0x118] sm:$0xff]
        %v2390 = vld [vmem:[%s2353 + $0x120] sm:$0xff]
        %v2391 = vld [vmem:[%s2353 + $0x128] sm:$0xff]
        %v2392 = vld [vmem:[%s2353 + $0x130] sm:$0xff]
        %v2393 = vld [vmem:[%s2353 + $0x138] sm:$0xff]
        %v2394 = vld [vmem:[%s2353 + $0x140] sm:$0xff]
        %v2395 = vld [vmem:[%s2353 + $0x148] sm:$0xff]
        %v2396 = vld [vmem:[%s2353 + $0x150] sm:$0xff]
        %v2397 = vld [vmem:[%s2353 + $0x158] sm:$0xff]
        %v2398 = vld [vmem:[%s2353 + $0x160] sm:$0xff]
        %v2399 = vld [vmem:[%s2353 + $0x168] sm:$0xff]
        %v2400 = vld [vmem:[%s2353 + $0x170] sm:$0xff]
        %v2401 = vld [vmem:[%s2353 + $0x178] sm:$0xff]
        %v2402 = vld [vmem:[%s2353 + $0x180] sm:$0xff]
        %v2403 = vld [vmem:[%s2353 + $0x188] sm:$0xff]
        %v2404 = vld [vmem:[%s2353 + $0x190] sm:$0xff]
        %v2405 = vld [vmem:[%s2353 + $0x198] sm:$0xff]
        %v2406 = vld [vmem:[%s2353 + $0x1a0] sm:$0xff]
        %v2407 = vld [vmem:[%s2353 + $0x1a8] sm:$0xff]
        %v2408 = vld [vmem:[%s2353 + $0x1b0] sm:$0xff]
        %v2409 = vld [vmem:[%s2353 + $0x1b8] sm:$0xff]
        %v2410 = vld [vmem:[%s2353 + $0x1c0] sm:$0xff]
        %v2411 = vld [vmem:[%s2353 + $0x1c8] sm:$0xff]
        %v2412 = vld [vmem:[%s2353 + $0x1d0] sm:$0xff]
        %v2413 = vld [vmem:[%s2353 + $0x1d8] sm:$0xff]
        %v2414 = vld [vmem:[%s2353 + $0x1e0] sm:$0xff]
        %v2415 = vld [vmem:[%s2353 + $0x1e8] sm:$0xff]
        %v2416 = vld [vmem:[%s2353 + $0x1f0] sm:$0xff]
        %v2417 = vld [vmem:[%s2353 + $0x1f8] sm:$0xff]
        %2418 = vmatpush.msra.mxu0 %v2384
        %2419 = vmatpush.msra.mxu0 %v2382
        %2420 = vmatpush.msra.mxu0 %v2380
        %2421 = vmatpush.msra.mxu0 %v2378
        %2422 = vmatpush.msra.mxu0 %v2376
        %2423 = vmatpush.msra.mxu0 %v2374
        %2424 = vmatpush.msra.mxu0 %v2372
        %2425 = vmatpush.msra.mxu0 %v2370
        %2426 = vmatpush.msra.mxu0 %v2368
        %2427 = vmatpush.msra.mxu0 %v2366
        %2428 = vmatpush.msra.mxu0 %v2364
        %2429 = vmatpush.msra.mxu0 %v2362
        %2430 = vmatpush.msra.mxu0 %v2360
        %2431 = vmatpush.msra.mxu0 %v2358
        %2432 = vmatpush.msra.mxu0 %v2356
        %2433 = vmatpush.msra.mxu0 %v2354
        %2434 = vmatmul.f32.gmra.mxu0 %v2331
        %v2435 = vpop.f32.mrf.mxu0
        %v2436 = vadd.f32 0.0, %v2435
        %2437 = vdwg.mxu0
        %2438 = vmatpush.msra.mxu0 %v2416
        %2439 = vmatpush.msra.mxu0 %v2414
        %2440 = vmatpush.msra.mxu0 %v2412
        %2441 = vmatpush.msra.mxu0 %v2410
        %2442 = vmatpush.msra.mxu0 %v2408
        %2443 = vmatpush.msra.mxu0 %v2406
        %2444 = vmatpush.msra.mxu0 %v2404
        %2445 = vmatpush.msra.mxu0 %v2402
        %2446 = vmatpush.msra.mxu0 %v2400
        %2447 = vmatpush.msra.mxu0 %v2398
        %2448 = vmatpush.msra.mxu0 %v2396
        %2449 = vmatpush.msra.mxu0 %v2394
        %2450 = vmatpush.msra.mxu0 %v2392
        %2451 = vmatpush.msra.mxu0 %v2390
        %2452 = vmatpush.msra.mxu0 %v2388
        %2453 = vmatpush.msra.mxu0 %v2386
        %2454 = vmatmul.f32.gmra.mxu0 %v2351
        %v2455 = vpop.f32.mrf.mxu0
        %v2456 = vadd.f32 %v2436, %v2455
        %2457 = vdwg.mxu0
        %2458 = vmatpush.msra.mxu0 %v2385
        %2459 = vmatpush.msra.mxu0 %v2383
        %2460 = vmatpush.msra.mxu0 %v2381
        %2461 = vmatpush.msra.mxu0 %v2379
        %2462 = vmatpush.msra.mxu0 %v2377
        %2463 = vmatpush.msra.mxu0 %v2375
        %2464 = vmatpush.msra.mxu0 %v2373
        %2465 = vmatpush.msra.mxu0 %v2371
        %2466 = vmatpush.msra.mxu0 %v2369
        %2467 = vmatpush.msra.mxu0 %v2367
        %2468 = vmatpush.msra.mxu0 %v2365
        %2469 = vmatpush.msra.mxu0 %v2363
        %2470 = vmatpush.msra.mxu0 %v2361
        %2471 = vmatpush.msra.mxu0 %v2359
        %2472 = vmatpush.msra.mxu0 %v2357
        %2473 = vmatpush.msra.mxu0 %v2355
        %2474 = vmatmul.f32.gmra.mxu0 %v2331
        %v2475 = vpop.f32.mrf.mxu0
        %v2476 = vadd.f32 0.0, %v2475
        %2477 = vdwg.mxu0
        %2478 = vmatpush.msra.mxu0 %v2417
        %2479 = vmatpush.msra.mxu0 %v2415
        %2480 = vmatpush.msra.mxu0 %v2413
        %2481 = vmatpush.msra.mxu0 %v2411
        %2482 = vmatpush.msra.mxu0 %v2409
        %2483 = vmatpush.msra.mxu0 %v2407
        %2484 = vmatpush.msra.mxu0 %v2405
        %2485 = vmatpush.msra.mxu0 %v2403
        %2486 = vmatpush.msra.mxu0 %v2401
        %2487 = vmatpush.msra.mxu0 %v2399
        %2488 = vmatpush.msra.mxu0 %v2397
        %2489 = vmatpush.msra.mxu0 %v2395
        %2490 = vmatpush.msra.mxu0 %v2393
        %2491 = vmatpush.msra.mxu0 %v2391
        %2492 = vmatpush.msra.mxu0 %v2389
        %2493 = vmatpush.msra.mxu0 %v2387
        %2494 = vmatmul.f32.gmra.mxu0 %v2351
        %v2495 = vpop.f32.mrf.mxu0
        %v2496 = vadd.f32 %v2476, %v2495
        %2497 = vdwg.mxu0
        %v2498 = vadd.f32 %v2306, %v2456
        %v2499 = vadd.f32 %v2307, %v2496
        %v2500 = vld [vmem:[%s9] sm:$0x3]
        %v2502 = vperm.slane %v2500, 0
        %v2503 = vperm.slane %v2500, 1
        %v2506 = vadd.f32 %v2498, %v2502
        %v2507 = vadd.f32 %v2499, %v2503
        %vm2508 = vcmp.ge.f32.partialorder %v2506, 0.0
        %vm2509 = vcmp.ge.f32.partialorder %v2507, 0.0
        %v2510 = vmul.f32 %v2506, 0.1
        %v2511 = vmul.f32 %v2507, 0.1
        %v2512 = vsel %vm2508, %v2506, %v2510
        %v2513 = vsel %vm2509, %v2507, %v2511
        %v2514 = vld [vmem:[#allocation14] sm:$0xff]
        %v2515 = vld [vmem:[#allocation14 + $0x8] sm:$0xff]
        %v2516 = vld [vmem:[#allocation14 + $0x10] sm:$0xff]
        %v2517 = vld [vmem:[#allocation14 + $0x18] sm:$0xff]
        %v2518 = vld [vmem:[#allocation14 + $0x20] sm:$0xff]
        %v2519 = vld [vmem:[#allocation14 + $0x28] sm:$0xff]
        %v2520 = vld [vmem:[#allocation14 + $0x30] sm:$0xff]
        %v2521 = vld [vmem:[#allocation14 + $0x38] sm:$0xff]
        %v2522 = vld [vmem:[#allocation14 + $0x40] sm:$0xff]
        %v2523 = vld [vmem:[#allocation14 + $0x48] sm:$0xff]
        %v2524 = vld [vmem:[#allocation14 + $0x50] sm:$0xff]
        %v2525 = vld [vmem:[#allocation14 + $0x58] sm:$0xff]
        %v2526 = vld [vmem:[#allocation14 + $0x60] sm:$0xff]
        %v2527 = vld [vmem:[#allocation14 + $0x68] sm:$0xff]
        %v2528 = vld [vmem:[#allocation14 + $0x70] sm:$0xff]
        %v2529 = vld [vmem:[#allocation14 + $0x78] sm:$0xff]
        %v2530 = vld [vmem:[#allocation14 + $0x80] sm:$0xff]
        %v2531 = vld [vmem:[#allocation14 + $0x88] sm:$0xff]
        %v2532 = vld [vmem:[#allocation14 + $0x90] sm:$0xff]
        %v2533 = vld [vmem:[#allocation14 + $0x98] sm:$0xff]
        %v2534 = vld [vmem:[#allocation14 + $0xa0] sm:$0xff]
        %v2535 = vld [vmem:[#allocation14 + $0xa8] sm:$0xff]
        %v2536 = vld [vmem:[#allocation14 + $0xb0] sm:$0xff]
        %v2537 = vld [vmem:[#allocation14 + $0xb8] sm:$0xff]
        %v2538 = vld [vmem:[#allocation14 + $0xc0] sm:$0xff]
        %v2539 = vld [vmem:[#allocation14 + $0xc8] sm:$0xff]
        %v2540 = vld [vmem:[#allocation14 + $0xd0] sm:$0xff]
        %v2541 = vld [vmem:[#allocation14 + $0xd8] sm:$0xff]
        %v2542 = vld [vmem:[#allocation14 + $0xe0] sm:$0xff]
        %v2543 = vld [vmem:[#allocation14 + $0xe8] sm:$0xff]
        %v2544 = vld [vmem:[#allocation14 + $0xf0] sm:$0xff]
        %v2545 = vld [vmem:[#allocation14 + $0xf8] sm:$0xff]
        %v2546 = vld [vmem:[#allocation14 + $0x100] sm:$0xff]
        %v2547 = vld [vmem:[#allocation14 + $0x108] sm:$0xff]
        %v2548 = vld [vmem:[#allocation14 + $0x110] sm:$0xff]
        %v2549 = vld [vmem:[#allocation14 + $0x118] sm:$0xff]
        %v2550 = vld [vmem:[#allocation14 + $0x120] sm:$0xff]
        %v2551 = vld [vmem:[#allocation14 + $0x128] sm:$0xff]
        %v2552 = vld [vmem:[#allocation14 + $0x130] sm:$0xff]
        %v2553 = vld [vmem:[#allocation14 + $0x138] sm:$0xff]
        %v2554 = vld [vmem:[#allocation14 + $0x140] sm:$0xff]
        %v2555 = vld [vmem:[#allocation14 + $0x148] sm:$0xff]
        %v2556 = vld [vmem:[#allocation14 + $0x150] sm:$0xff]
        %v2557 = vld [vmem:[#allocation14 + $0x158] sm:$0xff]
        %v2558 = vld [vmem:[#allocation14 + $0x160] sm:$0xff]
        %v2559 = vld [vmem:[#allocation14 + $0x168] sm:$0xff]
        %v2560 = vld [vmem:[#allocation14 + $0x170] sm:$0xff]
        %v2561 = vld [vmem:[#allocation14 + $0x178] sm:$0xff]
        %v2562 = vld [vmem:[#allocation14 + $0x180] sm:$0xff]
        %v2563 = vld [vmem:[#allocation14 + $0x188] sm:$0xff]
        %v2564 = vld [vmem:[#allocation14 + $0x190] sm:$0xff]
        %v2565 = vld [vmem:[#allocation14 + $0x198] sm:$0xff]
        %v2566 = vld [vmem:[#allocation14 + $0x1a0] sm:$0xff]
        %v2567 = vld [vmem:[#allocation14 + $0x1a8] sm:$0xff]
        %v2568 = vld [vmem:[#allocation14 + $0x1b0] sm:$0xff]
        %v2569 = vld [vmem:[#allocation14 + $0x1b8] sm:$0xff]
        %v2570 = vld [vmem:[#allocation14 + $0x1c0] sm:$0xff]
        %v2571 = vld [vmem:[#allocation14 + $0x1c8] sm:$0xff]
        %v2572 = vld [vmem:[#allocation14 + $0x1d0] sm:$0xff]
        %v2573 = vld [vmem:[#allocation14 + $0x1d8] sm:$0xff]
        %v2574 = vld [vmem:[#allocation14 + $0x1e0] sm:$0xff]
        %v2575 = vld [vmem:[#allocation14 + $0x1e8] sm:$0xff]
        %v2576 = vld [vmem:[#allocation14 + $0x1f0] sm:$0xff]
        %v2577 = vld [vmem:[#allocation14 + $0x1f8] sm:$0xff]
        %v2578 = vld [vmem:[#allocation14 + $0x200] sm:$0xff]
        %v2579 = vld [vmem:[#allocation14 + $0x208] sm:$0xff]
        %v2580 = vld [vmem:[#allocation14 + $0x210] sm:$0xff]
        %v2581 = vld [vmem:[#allocation14 + $0x218] sm:$0xff]
        %v2582 = vld [vmem:[#allocation14 + $0x220] sm:$0xff]
        %v2583 = vld [vmem:[#allocation14 + $0x228] sm:$0xff]
        %v2584 = vld [vmem:[#allocation14 + $0x230] sm:$0xff]
        %v2585 = vld [vmem:[#allocation14 + $0x238] sm:$0xff]
        %v2586 = vld [vmem:[#allocation14 + $0x240] sm:$0xff]
        %v2587 = vld [vmem:[#allocation14 + $0x248] sm:$0xff]
        %v2588 = vld [vmem:[#allocation14 + $0x250] sm:$0xff]
        %v2589 = vld [vmem:[#allocation14 + $0x258] sm:$0xff]
        %v2590 = vld [vmem:[#allocation14 + $0x260] sm:$0xff]
        %v2591 = vld [vmem:[#allocation14 + $0x268] sm:$0xff]
        %v2592 = vld [vmem:[#allocation14 + $0x270] sm:$0xff]
        %v2593 = vld [vmem:[#allocation14 + $0x278] sm:$0xff]
        %v2594 = vld [vmem:[#allocation14 + $0x280] sm:$0xff]
        %v2595 = vld [vmem:[#allocation14 + $0x288] sm:$0xff]
        %v2596 = vld [vmem:[#allocation14 + $0x290] sm:$0xff]
        %v2597 = vld [vmem:[#allocation14 + $0x298] sm:$0xff]
        %v2598 = vld [vmem:[#allocation14 + $0x2a0] sm:$0xff]
        %v2599 = vld [vmem:[#allocation14 + $0x2a8] sm:$0xff]
        %v2600 = vld [vmem:[#allocation14 + $0x2b0] sm:$0xff]
        %v2601 = vld [vmem:[#allocation14 + $0x2b8] sm:$0xff]
        %v2602 = vld [vmem:[#allocation14 + $0x2c0] sm:$0xff]
        %v2603 = vld [vmem:[#allocation14 + $0x2c8] sm:$0xff]
        %v2604 = vld [vmem:[#allocation14 + $0x2d0] sm:$0xff]
        %v2605 = vld [vmem:[#allocation14 + $0x2d8] sm:$0xff]
        %v2606 = vld [vmem:[#allocation14 + $0x2e0] sm:$0xff]
        %v2607 = vld [vmem:[#allocation14 + $0x2e8] sm:$0xff]
        %v2608 = vld [vmem:[#allocation14 + $0x2f0] sm:$0xff]
        %v2609 = vld [vmem:[#allocation14 + $0x2f8] sm:$0xff]
        %v2610 = vld [vmem:[#allocation14 + $0x300] sm:$0xff]
        %v2611 = vld [vmem:[#allocation14 + $0x308] sm:$0xff]
        %v2612 = vld [vmem:[#allocation14 + $0x310] sm:$0xff]
        %v2613 = vld [vmem:[#allocation14 + $0x318] sm:$0xff]
        %v2614 = vld [vmem:[#allocation14 + $0x320] sm:$0xff]
        %v2615 = vld [vmem:[#allocation14 + $0x328] sm:$0xff]
        %v2616 = vld [vmem:[#allocation14 + $0x330] sm:$0xff]
        %v2617 = vld [vmem:[#allocation14 + $0x338] sm:$0xff]
        %v2618 = vld [vmem:[#allocation14 + $0x340] sm:$0xff]
        %v2619 = vld [vmem:[#allocation14 + $0x348] sm:$0xff]
        %v2620 = vld [vmem:[#allocation14 + $0x350] sm:$0xff]
        %v2621 = vld [vmem:[#allocation14 + $0x358] sm:$0xff]
        %v2622 = vld [vmem:[#allocation14 + $0x360] sm:$0xff]
        %v2623 = vld [vmem:[#allocation14 + $0x368] sm:$0xff]
        %v2624 = vld [vmem:[#allocation14 + $0x370] sm:$0xff]
        %v2625 = vld [vmem:[#allocation14 + $0x378] sm:$0xff]
        %v2626 = vld [vmem:[#allocation14 + $0x380] sm:$0xff]
        %v2627 = vld [vmem:[#allocation14 + $0x388] sm:$0xff]
        %v2628 = vld [vmem:[#allocation14 + $0x390] sm:$0xff]
        %v2629 = vld [vmem:[#allocation14 + $0x398] sm:$0xff]
        %v2630 = vld [vmem:[#allocation14 + $0x3a0] sm:$0xff]
        %v2631 = vld [vmem:[#allocation14 + $0x3a8] sm:$0xff]
        %v2632 = vld [vmem:[#allocation14 + $0x3b0] sm:$0xff]
        %v2633 = vld [vmem:[#allocation14 + $0x3b8] sm:$0xff]
        %v2634 = vld [vmem:[#allocation14 + $0x3c0] sm:$0xff]
        %v2635 = vld [vmem:[#allocation14 + $0x3c8] sm:$0xff]
        %v2636 = vld [vmem:[#allocation14 + $0x3d0] sm:$0xff]
        %v2637 = vld [vmem:[#allocation14 + $0x3d8] sm:$0xff]
        %v2638 = vld [vmem:[#allocation14 + $0x3e0] sm:$0xff]
        %v2639 = vld [vmem:[#allocation14 + $0x3e8] sm:$0xff]
        %v2640 = vld [vmem:[#allocation14 + $0x3f0] sm:$0xff]
        %v2641 = vld [vmem:[#allocation14 + $0x3f8] sm:$0xff]
        %s2642 = scalar_lea.vmem [#allocation14], 1024
        %v2643 = vld [vmem:[%s2642] sm:$0xff]
        %v2644 = vld [vmem:[%s2642 + $0x8] sm:$0xff]
        %v2645 = vld [vmem:[%s2642 + $0x10] sm:$0xff]
        %v2646 = vld [vmem:[%s2642 + $0x18] sm:$0xff]
        %v2647 = vld [vmem:[%s2642 + $0x20] sm:$0xff]
        %v2648 = vld [vmem:[%s2642 + $0x28] sm:$0xff]
        %v2649 = vld [vmem:[%s2642 + $0x30] sm:$0xff]
        %v2650 = vld [vmem:[%s2642 + $0x38] sm:$0xff]
        %v2651 = vld [vmem:[%s2642 + $0x40] sm:$0xff]
        %v2652 = vld [vmem:[%s2642 + $0x48] sm:$0xff]
        %v2653 = vld [vmem:[%s2642 + $0x50] sm:$0xff]
        %v2654 = vld [vmem:[%s2642 + $0x58] sm:$0xff]
        %v2655 = vld [vmem:[%s2642 + $0x60] sm:$0xff]
        %v2656 = vld [vmem:[%s2642 + $0x68] sm:$0xff]
        %v2657 = vld [vmem:[%s2642 + $0x70] sm:$0xff]
        %v2658 = vld [vmem:[%s2642 + $0x78] sm:$0xff]
        %v2659 = vld [vmem:[%s2642 + $0x80] sm:$0xff]
        %v2660 = vld [vmem:[%s2642 + $0x88] sm:$0xff]
        %v2661 = vld [vmem:[%s2642 + $0x90] sm:$0xff]
        %v2662 = vld [vmem:[%s2642 + $0x98] sm:$0xff]
        %v2663 = vld [vmem:[%s2642 + $0xa0] sm:$0xff]
        %v2664 = vld [vmem:[%s2642 + $0xa8] sm:$0xff]
        %v2665 = vld [vmem:[%s2642 + $0xb0] sm:$0xff]
        %v2666 = vld [vmem:[%s2642 + $0xb8] sm:$0xff]
        %v2667 = vld [vmem:[%s2642 + $0xc0] sm:$0xff]
        %v2668 = vld [vmem:[%s2642 + $0xc8] sm:$0xff]
        %v2669 = vld [vmem:[%s2642 + $0xd0] sm:$0xff]
        %v2670 = vld [vmem:[%s2642 + $0xd8] sm:$0xff]
        %v2671 = vld [vmem:[%s2642 + $0xe0] sm:$0xff]
        %v2672 = vld [vmem:[%s2642 + $0xe8] sm:$0xff]
        %v2673 = vld [vmem:[%s2642 + $0xf0] sm:$0xff]
        %v2674 = vld [vmem:[%s2642 + $0xf8] sm:$0xff]
        %v2675 = vld [vmem:[%s2642 + $0x100] sm:$0xff]
        %v2676 = vld [vmem:[%s2642 + $0x108] sm:$0xff]
        %v2677 = vld [vmem:[%s2642 + $0x110] sm:$0xff]
        %v2678 = vld [vmem:[%s2642 + $0x118] sm:$0xff]
        %v2679 = vld [vmem:[%s2642 + $0x120] sm:$0xff]
        %v2680 = vld [vmem:[%s2642 + $0x128] sm:$0xff]
        %v2681 = vld [vmem:[%s2642 + $0x130] sm:$0xff]
        %v2682 = vld [vmem:[%s2642 + $0x138] sm:$0xff]
        %v2683 = vld [vmem:[%s2642 + $0x140] sm:$0xff]
        %v2684 = vld [vmem:[%s2642 + $0x148] sm:$0xff]
        %v2685 = vld [vmem:[%s2642 + $0x150] sm:$0xff]
        %v2686 = vld [vmem:[%s2642 + $0x158] sm:$0xff]
        %v2687 = vld [vmem:[%s2642 + $0x160] sm:$0xff]
        %v2688 = vld [vmem:[%s2642 + $0x168] sm:$0xff]
        %v2689 = vld [vmem:[%s2642 + $0x170] sm:$0xff]
        %v2690 = vld [vmem:[%s2642 + $0x178] sm:$0xff]
        %v2691 = vld [vmem:[%s2642 + $0x180] sm:$0xff]
        %v2692 = vld [vmem:[%s2642 + $0x188] sm:$0xff]
        %v2693 = vld [vmem:[%s2642 + $0x190] sm:$0xff]
        %v2694 = vld [vmem:[%s2642 + $0x198] sm:$0xff]
        %v2695 = vld [vmem:[%s2642 + $0x1a0] sm:$0xff]
        %v2696 = vld [vmem:[%s2642 + $0x1a8] sm:$0xff]
        %v2697 = vld [vmem:[%s2642 + $0x1b0] sm:$0xff]
        %v2698 = vld [vmem:[%s2642 + $0x1b8] sm:$0xff]
        %v2699 = vld [vmem:[%s2642 + $0x1c0] sm:$0xff]
        %v2700 = vld [vmem:[%s2642 + $0x1c8] sm:$0xff]
        %v2701 = vld [vmem:[%s2642 + $0x1d0] sm:$0xff]
        %v2702 = vld [vmem:[%s2642 + $0x1d8] sm:$0xff]
        %v2703 = vld [vmem:[%s2642 + $0x1e0] sm:$0xff]
        %v2704 = vld [vmem:[%s2642 + $0x1e8] sm:$0xff]
        %v2705 = vld [vmem:[%s2642 + $0x1f0] sm:$0xff]
        %v2706 = vld [vmem:[%s2642 + $0x1f8] sm:$0xff]
        %v2707 = vld [vmem:[%s2642 + $0x200] sm:$0xff]
        %v2708 = vld [vmem:[%s2642 + $0x208] sm:$0xff]
        %v2709 = vld [vmem:[%s2642 + $0x210] sm:$0xff]
        %v2710 = vld [vmem:[%s2642 + $0x218] sm:$0xff]
        %v2711 = vld [vmem:[%s2642 + $0x220] sm:$0xff]
        %v2712 = vld [vmem:[%s2642 + $0x228] sm:$0xff]
        %v2713 = vld [vmem:[%s2642 + $0x230] sm:$0xff]
        %v2714 = vld [vmem:[%s2642 + $0x238] sm:$0xff]
        %v2715 = vld [vmem:[%s2642 + $0x240] sm:$0xff]
        %v2716 = vld [vmem:[%s2642 + $0x248] sm:$0xff]
        %v2717 = vld [vmem:[%s2642 + $0x250] sm:$0xff]
        %v2718 = vld [vmem:[%s2642 + $0x258] sm:$0xff]
        %v2719 = vld [vmem:[%s2642 + $0x260] sm:$0xff]
        %v2720 = vld [vmem:[%s2642 + $0x268] sm:$0xff]
        %v2721 = vld [vmem:[%s2642 + $0x270] sm:$0xff]
        %v2722 = vld [vmem:[%s2642 + $0x278] sm:$0xff]
        %v2723 = vld [vmem:[%s2642 + $0x280] sm:$0xff]
        %v2724 = vld [vmem:[%s2642 + $0x288] sm:$0xff]
        %v2725 = vld [vmem:[%s2642 + $0x290] sm:$0xff]
        %v2726 = vld [vmem:[%s2642 + $0x298] sm:$0xff]
        %v2727 = vld [vmem:[%s2642 + $0x2a0] sm:$0xff]
        %v2728 = vld [vmem:[%s2642 + $0x2a8] sm:$0xff]
        %v2729 = vld [vmem:[%s2642 + $0x2b0] sm:$0xff]
        %v2730 = vld [vmem:[%s2642 + $0x2b8] sm:$0xff]
        %v2731 = vld [vmem:[%s2642 + $0x2c0] sm:$0xff]
        %v2732 = vld [vmem:[%s2642 + $0x2c8] sm:$0xff]
        %v2733 = vld [vmem:[%s2642 + $0x2d0] sm:$0xff]
        %v2734 = vld [vmem:[%s2642 + $0x2d8] sm:$0xff]
        %v2735 = vld [vmem:[%s2642 + $0x2e0] sm:$0xff]
        %v2736 = vld [vmem:[%s2642 + $0x2e8] sm:$0xff]
        %v2737 = vld [vmem:[%s2642 + $0x2f0] sm:$0xff]
        %v2738 = vld [vmem:[%s2642 + $0x2f8] sm:$0xff]
        %v2739 = vld [vmem:[%s2642 + $0x300] sm:$0xff]
        %v2740 = vld [vmem:[%s2642 + $0x308] sm:$0xff]
        %v2741 = vld [vmem:[%s2642 + $0x310] sm:$0xff]
        %v2742 = vld [vmem:[%s2642 + $0x318] sm:$0xff]
        %v2743 = vld [vmem:[%s2642 + $0x320] sm:$0xff]
        %v2744 = vld [vmem:[%s2642 + $0x328] sm:$0xff]
        %v2745 = vld [vmem:[%s2642 + $0x330] sm:$0xff]
        %v2746 = vld [vmem:[%s2642 + $0x338] sm:$0xff]
        %v2747 = vld [vmem:[%s2642 + $0x340] sm:$0xff]
        %v2748 = vld [vmem:[%s2642 + $0x348] sm:$0xff]
        %v2749 = vld [vmem:[%s2642 + $0x350] sm:$0xff]
        %v2750 = vld [vmem:[%s2642 + $0x358] sm:$0xff]
        %v2751 = vld [vmem:[%s2642 + $0x360] sm:$0xff]
        %v2752 = vld [vmem:[%s2642 + $0x368] sm:$0xff]
        %v2753 = vld [vmem:[%s2642 + $0x370] sm:$0xff]
        %v2754 = vld [vmem:[%s2642 + $0x378] sm:$0xff]
        %v2755 = vld [vmem:[%s2642 + $0x380] sm:$0xff]
        %v2756 = vld [vmem:[%s2642 + $0x388] sm:$0xff]
        %v2757 = vld [vmem:[%s2642 + $0x390] sm:$0xff]
        %v2758 = vld [vmem:[%s2642 + $0x398] sm:$0xff]
        %v2759 = vld [vmem:[%s2642 + $0x3a0] sm:$0xff]
        %v2760 = vld [vmem:[%s2642 + $0x3a8] sm:$0xff]
        %v2761 = vld [vmem:[%s2642 + $0x3b0] sm:$0xff]
        %v2762 = vld [vmem:[%s2642 + $0x3b8] sm:$0xff]
        %v2763 = vld [vmem:[%s2642 + $0x3c0] sm:$0xff]
        %v2764 = vld [vmem:[%s2642 + $0x3c8] sm:$0xff]
        %v2765 = vld [vmem:[%s2642 + $0x3d0] sm:$0xff]
        %v2766 = vld [vmem:[%s2642 + $0x3d8] sm:$0xff]
        %v2767 = vld [vmem:[%s2642 + $0x3e0] sm:$0xff]
        %v2768 = vld [vmem:[%s2642 + $0x3e8] sm:$0xff]
        %v2769 = vld [vmem:[%s2642 + $0x3f0] sm:$0xff]
        %v2770 = vld [vmem:[%s2642 + $0x3f8] sm:$0xff]
        %v2773 = vrot.slane %v2512, 1
        %v2774 = vrot.slane %v2513, 1
        %2777 = vmatpush.msra.mxu0 %v2703
        %2778 = vmatpush.msra.mxu0 %v2699
        %2779 = vmatpush.msra.mxu0 %v2695
        %2780 = vmatpush.msra.mxu0 %v2691
        %2781 = vmatpush.msra.mxu0 %v2687
        %2782 = vmatpush.msra.mxu0 %v2683
        %2783 = vmatpush.msra.mxu0 %v2679
        %2784 = vmatpush.msra.mxu0 %v2675
        %2785 = vmatpush.msra.mxu0 %v2671
        %2786 = vmatpush.msra.mxu0 %v2667
        %2787 = vmatpush.msra.mxu0 %v2663
        %2788 = vmatpush.msra.mxu0 %v2659
        %2789 = vmatpush.msra.mxu0 %v2655
        %2790 = vmatpush.msra.mxu0 %v2651
        %2791 = vmatpush.msra.mxu0 %v2647
        %2792 = vmatpush.msra.mxu0 %v2643
        %2793 = vmatmul.f32.gmra.mxu0 %v2773
        %v2794 = vpop.f32.mrf.mxu0
        %v2795 = vadd.f32 0.0, %v2794
        %2796 = vdwg.mxu0
        %2797 = vmatpush.msra.mxu0 %v2767
        %2798 = vmatpush.msra.mxu0 %v2763
        %2799 = vmatpush.msra.mxu0 %v2759
        %2800 = vmatpush.msra.mxu0 %v2755
        %2801 = vmatpush.msra.mxu0 %v2751
        %2802 = vmatpush.msra.mxu0 %v2747
        %2803 = vmatpush.msra.mxu0 %v2743
        %2804 = vmatpush.msra.mxu0 %v2739
        %2805 = vmatpush.msra.mxu0 %v2735
        %2806 = vmatpush.msra.mxu0 %v2731
        %2807 = vmatpush.msra.mxu0 %v2727
        %2808 = vmatpush.msra.mxu0 %v2723
        %2809 = vmatpush.msra.mxu0 %v2719
        %2810 = vmatpush.msra.mxu0 %v2715
        %2811 = vmatpush.msra.mxu0 %v2711
        %2812 = vmatpush.msra.mxu0 %v2707
        %2813 = vmatmul.f32.gmra.mxu0 %v2774
        %v2814 = vpop.f32.mrf.mxu0
        %v2815 = vadd.f32 %v2795, %v2814
        %2816 = vdwg.mxu0
        %2817 = vmatpush.msra.mxu0 %v2704
        %2818 = vmatpush.msra.mxu0 %v2700
        %2819 = vmatpush.msra.mxu0 %v2696
        %2820 = vmatpush.msra.mxu0 %v2692
        %2821 = vmatpush.msra.mxu0 %v2688
        %2822 = vmatpush.msra.mxu0 %v2684
        %2823 = vmatpush.msra.mxu0 %v2680
        %2824 = vmatpush.msra.mxu0 %v2676
        %2825 = vmatpush.msra.mxu0 %v2672
        %2826 = vmatpush.msra.mxu0 %v2668
        %2827 = vmatpush.msra.mxu0 %v2664
        %2828 = vmatpush.msra.mxu0 %v2660
        %2829 = vmatpush.msra.mxu0 %v2656
        %2830 = vmatpush.msra.mxu0 %v2652
        %2831 = vmatpush.msra.mxu0 %v2648
        %2832 = vmatpush.msra.mxu0 %v2644
        %2833 = vmatmul.f32.gmra.mxu0 %v2773
        %v2834 = vpop.f32.mrf.mxu0
        %v2835 = vadd.f32 0.0, %v2834
        %2836 = vdwg.mxu0
        %2837 = vmatpush.msra.mxu0 %v2768
        %2838 = vmatpush.msra.mxu0 %v2764
        %2839 = vmatpush.msra.mxu0 %v2760
        %2840 = vmatpush.msra.mxu0 %v2756
        %2841 = vmatpush.msra.mxu0 %v2752
        %2842 = vmatpush.msra.mxu0 %v2748
        %2843 = vmatpush.msra.mxu0 %v2744
        %2844 = vmatpush.msra.mxu0 %v2740
        %2845 = vmatpush.msra.mxu0 %v2736
        %2846 = vmatpush.msra.mxu0 %v2732
        %2847 = vmatpush.msra.mxu0 %v2728
        %2848 = vmatpush.msra.mxu0 %v2724
        %2849 = vmatpush.msra.mxu0 %v2720
        %2850 = vmatpush.msra.mxu0 %v2716
        %2851 = vmatpush.msra.mxu0 %v2712
        %2852 = vmatpush.msra.mxu0 %v2708
        %2853 = vmatmul.f32.gmra.mxu0 %v2774
        %v2854 = vpop.f32.mrf.mxu0
        %v2855 = vadd.f32 %v2835, %v2854
        %2856 = vdwg.mxu0
        %2857 = vmatpush.msra.mxu0 %v2705
        %2858 = vmatpush.msra.mxu0 %v2701
        %2859 = vmatpush.msra.mxu0 %v2697
        %2860 = vmatpush.msra.mxu0 %v2693
        %2861 = vmatpush.msra.mxu0 %v2689
        %2862 = vmatpush.msra.mxu0 %v2685
        %2863 = vmatpush.msra.mxu0 %v2681
        %2864 = vmatpush.msra.mxu0 %v2677
        %2865 = vmatpush.msra.mxu0 %v2673
        %2866 = vmatpush.msra.mxu0 %v2669
        %2867 = vmatpush.msra.mxu0 %v2665
        %2868 = vmatpush.msra.mxu0 %v2661
        %2869 = vmatpush.msra.mxu0 %v2657
        %2870 = vmatpush.msra.mxu0 %v2653
        %2871 = vmatpush.msra.mxu0 %v2649
        %2872 = vmatpush.msra.mxu0 %v2645
        %2873 = vmatmul.f32.gmra.mxu0 %v2773
        %v2874 = vpop.f32.mrf.mxu0
        %v2875 = vadd.f32 0.0, %v2874
        %2876 = vdwg.mxu0
        %2877 = vmatpush.msra.mxu0 %v2769
        %2878 = vmatpush.msra.mxu0 %v2765
        %2879 = vmatpush.msra.mxu0 %v2761
        %2880 = vmatpush.msra.mxu0 %v2757
        %2881 = vmatpush.msra.mxu0 %v2753
        %2882 = vmatpush.msra.mxu0 %v2749
        %2883 = vmatpush.msra.mxu0 %v2745
        %2884 = vmatpush.msra.mxu0 %v2741
        %2885 = vmatpush.msra.mxu0 %v2737
        %2886 = vmatpush.msra.mxu0 %v2733
        %2887 = vmatpush.msra.mxu0 %v2729
        %2888 = vmatpush.msra.mxu0 %v2725
        %2889 = vmatpush.msra.mxu0 %v2721
        %2890 = vmatpush.msra.mxu0 %v2717
        %2891 = vmatpush.msra.mxu0 %v2713
        %2892 = vmatpush.msra.mxu0 %v2709
        %2893 = vmatmul.f32.gmra.mxu0 %v2774
        %v2894 = vpop.f32.mrf.mxu0
        %v2895 = vadd.f32 %v2875, %v2894
        %2896 = vdwg.mxu0
        %2897 = vmatpush.msra.mxu0 %v2706
        %2898 = vmatpush.msra.mxu0 %v2702
        %2899 = vmatpush.msra.mxu0 %v2698
        %2900 = vmatpush.msra.mxu0 %v2694
        %2901 = vmatpush.msra.mxu0 %v2690
        %2902 = vmatpush.msra.mxu0 %v2686
        %2903 = vmatpush.msra.mxu0 %v2682
        %2904 = vmatpush.msra.mxu0 %v2678
        %2905 = vmatpush.msra.mxu0 %v2674
        %2906 = vmatpush.msra.mxu0 %v2670
        %2907 = vmatpush.msra.mxu0 %v2666
        %2908 = vmatpush.msra.mxu0 %v2662
        %2909 = vmatpush.msra.mxu0 %v2658
        %2910 = vmatpush.msra.mxu0 %v2654
        %2911 = vmatpush.msra.mxu0 %v2650
        %2912 = vmatpush.msra.mxu0 %v2646
        %2913 = vmatmul.f32.gmra.mxu0 %v2773
        %v2914 = vpop.f32.mrf.mxu0
        %v2915 = vadd.f32 0.0, %v2914
        %2916 = vdwg.mxu0
        %2917 = vmatpush.msra.mxu0 %v2770
        %2918 = vmatpush.msra.mxu0 %v2766
        %2919 = vmatpush.msra.mxu0 %v2762
        %2920 = vmatpush.msra.mxu0 %v2758
        %2921 = vmatpush.msra.mxu0 %v2754
        %2922 = vmatpush.msra.mxu0 %v2750
        %2923 = vmatpush.msra.mxu0 %v2746
        %2924 = vmatpush.msra.mxu0 %v2742
        %2925 = vmatpush.msra.mxu0 %v2738
        %2926 = vmatpush.msra.mxu0 %v2734
        %2927 = vmatpush.msra.mxu0 %v2730
        %2928 = vmatpush.msra.mxu0 %v2726
        %2929 = vmatpush.msra.mxu0 %v2722
        %2930 = vmatpush.msra.mxu0 %v2718
        %2931 = vmatpush.msra.mxu0 %v2714
        %2932 = vmatpush.msra.mxu0 %v2710
        %2933 = vmatmul.f32.gmra.mxu0 %v2774
        %v2934 = vpop.f32.mrf.mxu0
        %v2935 = vadd.f32 %v2915, %v2934
        %2936 = vdwg.mxu0
        %2937 = vmatpush.msra.mxu0 %v2574
        %2938 = vmatpush.msra.mxu0 %v2570
        %2939 = vmatpush.msra.mxu0 %v2566
        %2940 = vmatpush.msra.mxu0 %v2562
        %2941 = vmatpush.msra.mxu0 %v2558
        %2942 = vmatpush.msra.mxu0 %v2554
        %2943 = vmatpush.msra.mxu0 %v2550
        %2944 = vmatpush.msra.mxu0 %v2546
        %2945 = vmatpush.msra.mxu0 %v2542
        %2946 = vmatpush.msra.mxu0 %v2538
        %2947 = vmatpush.msra.mxu0 %v2534
        %2948 = vmatpush.msra.mxu0 %v2530
        %2949 = vmatpush.msra.mxu0 %v2526
        %2950 = vmatpush.msra.mxu0 %v2522
        %2951 = vmatpush.msra.mxu0 %v2518
        %2952 = vmatpush.msra.mxu0 %v2514
        %2953 = vmatmul.f32.gmra.mxu0 %v2512
        %v2954 = vpop.f32.mrf.mxu0
        %v2955 = vadd.f32 %v2815, %v2954
        %2956 = vdwg.mxu0
        %2957 = vmatpush.msra.mxu0 %v2638
        %2958 = vmatpush.msra.mxu0 %v2634
        %2959 = vmatpush.msra.mxu0 %v2630
        %2960 = vmatpush.msra.mxu0 %v2626
        %2961 = vmatpush.msra.mxu0 %v2622
        %2962 = vmatpush.msra.mxu0 %v2618
        %2963 = vmatpush.msra.mxu0 %v2614
        %2964 = vmatpush.msra.mxu0 %v2610
        %2965 = vmatpush.msra.mxu0 %v2606
        %2966 = vmatpush.msra.mxu0 %v2602
        %2967 = vmatpush.msra.mxu0 %v2598
        %2968 = vmatpush.msra.mxu0 %v2594
        %2969 = vmatpush.msra.mxu0 %v2590
        %2970 = vmatpush.msra.mxu0 %v2586
        %2971 = vmatpush.msra.mxu0 %v2582
        %2972 = vmatpush.msra.mxu0 %v2578
        %2973 = vmatmul.f32.gmra.mxu0 %v2513
        %v2974 = vpop.f32.mrf.mxu0
        %v2975 = vadd.f32 %v2955, %v2974
        %2976 = vdwg.mxu0
        %2977 = vmatpush.msra.mxu0 %v2575
        %2978 = vmatpush.msra.mxu0 %v2571
        %2979 = vmatpush.msra.mxu0 %v2567
        %2980 = vmatpush.msra.mxu0 %v2563
        %2981 = vmatpush.msra.mxu0 %v2559
        %2982 = vmatpush.msra.mxu0 %v2555
        %2983 = vmatpush.msra.mxu0 %v2551
        %2984 = vmatpush.msra.mxu0 %v2547
        %2985 = vmatpush.msra.mxu0 %v2543
        %2986 = vmatpush.msra.mxu0 %v2539
        %2987 = vmatpush.msra.mxu0 %v2535
        %2988 = vmatpush.msra.mxu0 %v2531
        %2989 = vmatpush.msra.mxu0 %v2527
        %2990 = vmatpush.msra.mxu0 %v2523
        %2991 = vmatpush.msra.mxu0 %v2519
        %2992 = vmatpush.msra.mxu0 %v2515
        %2993 = vmatmul.f32.gmra.mxu0 %v2512
        %v2994 = vpop.f32.mrf.mxu0
        %v2995 = vadd.f32 %v2855, %v2994
        %2996 = vdwg.mxu0
        %2997 = vmatpush.msra.mxu0 %v2639
        %2998 = vmatpush.msra.mxu0 %v2635
        %2999 = vmatpush.msra.mxu0 %v2631
        %3000 = vmatpush.msra.mxu0 %v2627
        %3001 = vmatpush.msra.mxu0 %v2623
        %3002 = vmatpush.msra.mxu0 %v2619
        %3003 = vmatpush.msra.mxu0 %v2615
        %3004 = vmatpush.msra.mxu0 %v2611
        %3005 = vmatpush.msra.mxu0 %v2607
        %3006 = vmatpush.msra.mxu0 %v2603
        %3007 = vmatpush.msra.mxu0 %v2599
        %3008 = vmatpush.msra.mxu0 %v2595
        %3009 = vmatpush.msra.mxu0 %v2591
        %3010 = vmatpush.msra.mxu0 %v2587
        %3011 = vmatpush.msra.mxu0 %v2583
        %3012 = vmatpush.msra.mxu0 %v2579
        %3013 = vmatmul.f32.gmra.mxu0 %v2513
        %v3014 = vpop.f32.mrf.mxu0
        %v3015 = vadd.f32 %v2995, %v3014
        %3016 = vdwg.mxu0
        %3017 = vmatpush.msra.mxu0 %v2576
        %3018 = vmatpush.msra.mxu0 %v2572
        %3019 = vmatpush.msra.mxu0 %v2568
        %3020 = vmatpush.msra.mxu0 %v2564
        %3021 = vmatpush.msra.mxu0 %v2560
        %3022 = vmatpush.msra.mxu0 %v2556
        %3023 = vmatpush.msra.mxu0 %v2552
        %3024 = vmatpush.msra.mxu0 %v2548
        %3025 = vmatpush.msra.mxu0 %v2544
        %3026 = vmatpush.msra.mxu0 %v2540
        %3027 = vmatpush.msra.mxu0 %v2536
        %3028 = vmatpush.msra.mxu0 %v2532
        %3029 = vmatpush.msra.mxu0 %v2528
        %3030 = vmatpush.msra.mxu0 %v2524
        %3031 = vmatpush.msra.mxu0 %v2520
        %3032 = vmatpush.msra.mxu0 %v2516
        %3033 = vmatmul.f32.gmra.mxu0 %v2512
        %v3034 = vpop.f32.mrf.mxu0
        %v3035 = vadd.f32 %v2895, %v3034
        %3036 = vdwg.mxu0
        %3037 = vmatpush.msra.mxu0 %v2640
        %3038 = vmatpush.msra.mxu0 %v2636
        %3039 = vmatpush.msra.mxu0 %v2632
        %3040 = vmatpush.msra.mxu0 %v2628
        %3041 = vmatpush.msra.mxu0 %v2624
        %3042 = vmatpush.msra.mxu0 %v2620
        %3043 = vmatpush.msra.mxu0 %v2616
        %3044 = vmatpush.msra.mxu0 %v2612
        %3045 = vmatpush.msra.mxu0 %v2608
        %3046 = vmatpush.msra.mxu0 %v2604
        %3047 = vmatpush.msra.mxu0 %v2600
        %3048 = vmatpush.msra.mxu0 %v2596
        %3049 = vmatpush.msra.mxu0 %v2592
        %3050 = vmatpush.msra.mxu0 %v2588
        %3051 = vmatpush.msra.mxu0 %v2584
        %3052 = vmatpush.msra.mxu0 %v2580
        %3053 = vmatmul.f32.gmra.mxu0 %v2513
        %v3054 = vpop.f32.mrf.mxu0
        %v3055 = vadd.f32 %v3035, %v3054
        %3056 = vdwg.mxu0
        %3057 = vmatpush.msra.mxu0 %v2577
        %3058 = vmatpush.msra.mxu0 %v2573
        %3059 = vmatpush.msra.mxu0 %v2569
        %3060 = vmatpush.msra.mxu0 %v2565
        %3061 = vmatpush.msra.mxu0 %v2561
        %3062 = vmatpush.msra.mxu0 %v2557
        %3063 = vmatpush.msra.mxu0 %v2553
        %3064 = vmatpush.msra.mxu0 %v2549
        %3065 = vmatpush.msra.mxu0 %v2545
        %3066 = vmatpush.msra.mxu0 %v2541
        %3067 = vmatpush.msra.mxu0 %v2537
        %3068 = vmatpush.msra.mxu0 %v2533
        %3069 = vmatpush.msra.mxu0 %v2529
        %3070 = vmatpush.msra.mxu0 %v2525
        %3071 = vmatpush.msra.mxu0 %v2521
        %3072 = vmatpush.msra.mxu0 %v2517
        %3073 = vmatmul.f32.gmra.mxu0 %v2512
        %v3074 = vpop.f32.mrf.mxu0
        %v3075 = vadd.f32 %v2935, %v3074
        %3076 = vdwg.mxu0
        %3077 = vmatpush.msra.mxu0 %v2641
        %3078 = vmatpush.msra.mxu0 %v2637
        %3079 = vmatpush.msra.mxu0 %v2633
        %3080 = vmatpush.msra.mxu0 %v2629
        %3081 = vmatpush.msra.mxu0 %v2625
        %3082 = vmatpush.msra.mxu0 %v2621
        %3083 = vmatpush.msra.mxu0 %v2617
        %3084 = vmatpush.msra.mxu0 %v2613
        %3085 = vmatpush.msra.mxu0 %v2609
        %3086 = vmatpush.msra.mxu0 %v2605
        %3087 = vmatpush.msra.mxu0 %v2601
        %3088 = vmatpush.msra.mxu0 %v2597
        %3089 = vmatpush.msra.mxu0 %v2593
        %3090 = vmatpush.msra.mxu0 %v2589
        %3091 = vmatpush.msra.mxu0 %v2585
        %3092 = vmatpush.msra.mxu0 %v2581
        %3093 = vmatmul.f32.gmra.mxu0 %v2513
        %v3094 = vpop.f32.mrf.mxu0
        %v3095 = vadd.f32 %v3075, %v3094
        %3096 = vdwg.mxu0
        %v3097 = vld [vmem:[%s11] sm:$0x1]
        %vm3098 = vcmask 15360
        %v3100 = vsel %vm3098, %v3097, 0
        %vm3102 = vcmask 1041408
        %v3103 = vsel %vm3102, %v2512, 0
        %v3105 = vsel %vm3102, %v2513, 0
        %3107 = vmatpush.msra.mxu0 0.0
        %3108 = vmatpush.msra.mxu0 0.0
        %3109 = vmatpush.msra.mxu0 0.0
        %3110 = vmatpush.msra.mxu0 0.0
        %3111 = vmatpush.msra.mxu0 0.0
        %3112 = vmatpush.msra.mxu0 0.0
        %3113 = vmatpush.msra.mxu0 0.0
        %3114 = vmatpush.msra.mxu0 0.0
        %3115 = vmatpush.msra.mxu0 0.0
        %3116 = vmatpush.msra.mxu0 0.0
        %3117 = vmatpush.msra.mxu0 0.0
        %3118 = vmatpush.msra.mxu0 0.0
        %3119 = vmatpush.msra.mxu0 0.0
        %3120 = vmatpush.msra.mxu0 0.0
        %3121 = vmatpush.msra.mxu0 0.0
        %3122 = vmatpush.msra.mxu0 %v3103
        %3123 = vmatmul.f32.gmra.mxu0 %v3100
        %v3124 = vpop.f32.mrf.mxu0
        %v3125 = vadd.f32 0.0, %v3124
        %3126 = vdwg.mxu0
        %3127 = vmatpush.msra.mxu0 0.0
        %3128 = vmatpush.msra.mxu0 0.0
        %3129 = vmatpush.msra.mxu0 0.0
        %3130 = vmatpush.msra.mxu0 0.0
        %3131 = vmatpush.msra.mxu0 0.0
        %3132 = vmatpush.msra.mxu0 0.0
        %3133 = vmatpush.msra.mxu0 0.0
        %3134 = vmatpush.msra.mxu0 0.0
        %3135 = vmatpush.msra.mxu0 0.0
        %3136 = vmatpush.msra.mxu0 0.0
        %3137 = vmatpush.msra.mxu0 0.0
        %3138 = vmatpush.msra.mxu0 0.0
        %3139 = vmatpush.msra.mxu0 0.0
        %3140 = vmatpush.msra.mxu0 0.0
        %3141 = vmatpush.msra.mxu0 0.0
        %3142 = vmatpush.msra.mxu0 %v3105
        %3143 = vmatmul.f32.gmra.mxu0 %v3100
        %v3144 = vpop.f32.mrf.mxu0
        %v3145 = vadd.f32 0.0, %v3144
        %3146 = vdwg.mxu0
        %v3147 = vld [vmem:[%s10] sm:$0x3]
        %v3149 = vperm.slane %v3147, 0
        %v3150 = vperm.slane %v3147, 1
        %v3153 = vmul.f32 %v3125, %v3149
        %v3154 = vmul.f32 %v3145, %v3150
        %vm3155 = vcmask 1040384
        %v3156 = vsel %vm3155, %v3153, 0.0
        %v3157 = vsel %vm3155, %v3154, 0.0
        %v3158 = vadd.f32 %v3156, %v3157
        %3159 = vadd.xlane.f32.xlu0 %v3158
        %v3160 = vpop.xlane.xlu0 %3159
        %s3161 = scalar_lea.vmem %s11, 1
        %v3162 = vld [vmem:[%s3161] sm:$0x1]
        %v3164 = vsel %vm3098, %v3162, 0
        %3166 = vmatpush.msra.mxu0 0.0
        %3167 = vmatpush.msra.mxu0 0.0
        %3168 = vmatpush.msra.mxu0 0.0
        %3169 = vmatpush.msra.mxu0 0.0
        %3170 = vmatpush.msra.mxu0 0.0
        %3171 = vmatpush.msra.mxu0 0.0
        %3172 = vmatpush.msra.mxu0 0.0
        %3173 = vmatpush.msra.mxu0 0.0
        %3174 = vmatpush.msra.mxu0 0.0
        %3175 = vmatpush.msra.mxu0 0.0
        %3176 = vmatpush.msra.mxu0 0.0
        %3177 = vmatpush.msra.mxu0 0.0
        %3178 = vmatpush.msra.mxu0 0.0
        %3179 = vmatpush.msra.mxu0 0.0
        %3180 = vmatpush.msra.mxu0 0.0
        %3181 = vmatpush.msra.mxu0 %v3103
        %3182 = vmatmul.f32.gmra.mxu0 %v3164
        %v3183 = vpop.f32.mrf.mxu0
        %v3184 = vadd.f32 0.0, %v3183
        %3185 = vdwg.mxu0
        %3186 = vmatpush.msra.mxu0 0.0
        %3187 = vmatpush.msra.mxu0 0.0
        %3188 = vmatpush.msra.mxu0 0.0
        %3189 = vmatpush.msra.mxu0 0.0
        %3190 = vmatpush.msra.mxu0 0.0
        %3191 = vmatpush.msra.mxu0 0.0
        %3192 = vmatpush.msra.mxu0 0.0
        %3193 = vmatpush.msra.mxu0 0.0
        %3194 = vmatpush.msra.mxu0 0.0
        %3195 = vmatpush.msra.mxu0 0.0
        %3196 = vmatpush.msra.mxu0 0.0
        %3197 = vmatpush.msra.mxu0 0.0
        %3198 = vmatpush.msra.mxu0 0.0
        %3199 = vmatpush.msra.mxu0 0.0
        %3200 = vmatpush.msra.mxu0 0.0
        %3201 = vmatpush.msra.mxu0 %v3105
        %3202 = vmatmul.f32.gmra.mxu0 %v3164
        %v3203 = vpop.f32.mrf.mxu0
        %v3204 = vadd.f32 0.0, %v3203
        %3205 = vdwg.mxu0
        %s3206 = scalar_lea.vmem %s10, 2
        %v3207 = vld [vmem:[%s3206] sm:$0x3]
        %v3209 = vperm.slane %v3207, 0
        %v3210 = vperm.slane %v3207, 1
        %v3213 = vmul.f32 %v3184, %v3209
        %v3214 = vmul.f32 %v3204, %v3210
        %v3215 = vsel %vm3155, %v3213, 0.0
        %v3216 = vsel %vm3155, %v3214, 0.0
        %v3217 = vadd.f32 %v3215, %v3216
        %3218 = vadd.xlane.f32.xlu0 %v3217
        %v3219 = vpop.xlane.xlu0 %3218
        %v3220 = vadd.f32 %v3160, %v3219
        %s3221 = scalar_lea.vmem %s11, 2
        %v3222 = vld [vmem:[%s3221] sm:$0x1]
        %v3224 = vsel %vm3098, %v3222, 0
        %3226 = vmatpush.msra.mxu0 0.0
        %3227 = vmatpush.msra.mxu0 0.0
        %3228 = vmatpush.msra.mxu0 0.0
        %3229 = vmatpush.msra.mxu0 0.0
        %3230 = vmatpush.msra.mxu0 0.0
        %3231 = vmatpush.msra.mxu0 0.0
        %3232 = vmatpush.msra.mxu0 0.0
        %3233 = vmatpush.msra.mxu0 0.0
        %3234 = vmatpush.msra.mxu0 0.0
        %3235 = vmatpush.msra.mxu0 0.0
        %3236 = vmatpush.msra.mxu0 0.0
        %3237 = vmatpush.msra.mxu0 0.0
        %3238 = vmatpush.msra.mxu0 0.0
        %3239 = vmatpush.msra.mxu0 0.0
        %3240 = vmatpush.msra.mxu0 0.0
        %3241 = vmatpush.msra.mxu0 %v3103
        %3242 = vmatmul.f32.gmra.mxu0 %v3224
        %v3243 = vpop.f32.mrf.mxu0
        %v3244 = vadd.f32 0.0, %v3243
        %3245 = vdwg.mxu0
        %3246 = vmatpush.msra.mxu0 0.0
        %3247 = vmatpush.msra.mxu0 0.0
        %3248 = vmatpush.msra.mxu0 0.0
        %3249 = vmatpush.msra.mxu0 0.0
        %3250 = vmatpush.msra.mxu0 0.0
        %3251 = vmatpush.msra.mxu0 0.0
        %3252 = vmatpush.msra.mxu0 0.0
        %3253 = vmatpush.msra.mxu0 0.0
        %3254 = vmatpush.msra.mxu0 0.0
        %3255 = vmatpush.msra.mxu0 0.0
        %3256 = vmatpush.msra.mxu0 0.0
        %3257 = vmatpush.msra.mxu0 0.0
        %3258 = vmatpush.msra.mxu0 0.0
        %3259 = vmatpush.msra.mxu0 0.0
        %3260 = vmatpush.msra.mxu0 0.0
        %3261 = vmatpush.msra.mxu0 %v3105
        %3262 = vmatmul.f32.gmra.mxu0 %v3224
        %v3263 = vpop.f32.mrf.mxu0
        %v3264 = vadd.f32 0.0, %v3263
        %3265 = vdwg.mxu0
        %s3266 = scalar_lea.vmem %s10, 4
        %v3267 = vld [vmem:[%s3266] sm:$0x3]
        %v3269 = vperm.slane %v3267, 0
        %v3270 = vperm.slane %v3267, 1
        %v3273 = vmul.f32 %v3244, %v3269
        %v3274 = vmul.f32 %v3264, %v3270
        %v3275 = vsel %vm3155, %v3273, 0.0
        %v3276 = vsel %vm3155, %v3274, 0.0
        %v3277 = vadd.f32 %v3275, %v3276
        %3278 = vadd.xlane.f32.xlu0 %v3277
        %v3279 = vpop.xlane.xlu0 %3278
        %v3280 = vadd.f32 %v3220, %v3279
        %s3281 = scalar_lea.vmem %s11, 3
        %v3282 = vld [vmem:[%s3281] sm:$0x1]
        %v3284 = vsel %vm3098, %v3282, 0
        %3286 = vmatpush.msra.mxu0 0.0
        %3287 = vmatpush.msra.mxu0 0.0
        %3288 = vmatpush.msra.mxu0 0.0
        %3289 = vmatpush.msra.mxu0 0.0
        %3290 = vmatpush.msra.mxu0 0.0
        %3291 = vmatpush.msra.mxu0 0.0
        %3292 = vmatpush.msra.mxu0 0.0
        %3293 = vmatpush.msra.mxu0 0.0
        %3294 = vmatpush.msra.mxu0 0.0
        %3295 = vmatpush.msra.mxu0 0.0
        %3296 = vmatpush.msra.mxu0 0.0
        %3297 = vmatpush.msra.mxu0 0.0
        %3298 = vmatpush.msra.mxu0 0.0
        %3299 = vmatpush.msra.mxu0 0.0
        %3300 = vmatpush.msra.mxu0 0.0
        %3301 = vmatpush.msra.mxu0 %v3103
        %3302 = vmatmul.f32.gmra.mxu0 %v3284
        %v3303 = vpop.f32.mrf.mxu0
        %v3304 = vadd.f32 0.0, %v3303
        %3305 = vdwg.mxu0
        %3306 = vmatpush.msra.mxu0 0.0
        %3307 = vmatpush.msra.mxu0 0.0
        %3308 = vmatpush.msra.mxu0 0.0
        %3309 = vmatpush.msra.mxu0 0.0
        %3310 = vmatpush.msra.mxu0 0.0
        %3311 = vmatpush.msra.mxu0 0.0
        %3312 = vmatpush.msra.mxu0 0.0
        %3313 = vmatpush.msra.mxu0 0.0
        %3314 = vmatpush.msra.mxu0 0.0
        %3315 = vmatpush.msra.mxu0 0.0
        %3316 = vmatpush.msra.mxu0 0.0
        %3317 = vmatpush.msra.mxu0 0.0
        %3318 = vmatpush.msra.mxu0 0.0
        %3319 = vmatpush.msra.mxu0 0.0
        %3320 = vmatpush.msra.mxu0 0.0
        %3321 = vmatpush.msra.mxu0 %v3105
        %3322 = vmatmul.f32.gmra.mxu0 %v3284
        %v3323 = vpop.f32.mrf.mxu0
        %v3324 = vadd.f32 0.0, %v3323
        %3325 = vdwg.mxu0
        %s3326 = scalar_lea.vmem %s10, 6
        %v3327 = vld [vmem:[%s3326] sm:$0x3]
        %v3329 = vperm.slane %v3327, 0
        %v3330 = vperm.slane %v3327, 1
        %v3333 = vmul.f32 %v3304, %v3329
        %v3334 = vmul.f32 %v3324, %v3330
        %v3335 = vsel %vm3155, %v3333, 0.0
        %v3336 = vsel %vm3155, %v3334, 0.0
        %v3337 = vadd.f32 %v3335, %v3336
        %3338 = vadd.xlane.f32.xlu0 %v3337
        %v3339 = vpop.xlane.xlu0 %3338
        %v3340 = vadd.f32 %v3280, %v3339
        %v3341 = vld [vmem:[#allocation2] sm:$0x1]
        %v3342 = vadd.f32 %v3340, %v3341
        %vm3343 = vcmask 0
        %3344 = vst.msk [vmem:[%s637] sm:$0x1] %vm3343, %v3342
        %v3349 = vrot.slane %v3015, 7
        %v3350 = vrot.slane %v3055, 6
        %v3351 = vrot.slane %v3095, 5
        %v3352 = vsel %vm3155, %v2975, %v3349
        %vm3353 = vcmask 1042434
        %v3354 = vsel %vm3353, %v3350, %v3351
        %v3355 = vsel %vm3102, %v3352, %v3354
        %v3357 = vlaneseq
        %vm3358 = vcmp.ge.s32.totalorder %v3357, 0
        %vm3359 = vcmp.lt.s32.totalorder %v3357, 512
        %vm3360 = vmand %vm3358, %vm3359
        %3361 = vst.msk [vmem:[%s641] sm:$0xf] %vm3360, %v3355
        %p3362 = scmp.lt.s32.totalorder %s36, 1
        %s3363 = scalar_select %p3362, %s36, 1
        %s3364 = scalar_lea.vmem %s14, %s3363
        %p3365 = scmp.lt.s32.totalorder %s36, 1
        %s3366 = scalar_select %p3365, %s36, 1
        %s3367 = smul.addr %s3366, 4
        %s3368 = scalar_lea.vmem %s15, %s3367
        // Predicated region
        $region109: #{discriminator_forward.1} parent=75 // pred_check
          %p3369 = pneg %p353
        $region110: #{discriminator_forward.1} parent=75 // pred_check_branch
          %3371 = sbr.rel (%p3369) target = $region112
        $region111: #{discriminator_forward.1} parent=75 // pred_region
          _
        $region112: #{discriminator_forward.1} parent=75 // pred_fallthru
          _
        // Predicated region
        $region113: #{discriminator_forward.1} parent=75 // pred_check
          %p3372 = pneg %p379
        $region114: #{discriminator_forward.1} parent=75 // pred_check_branch
          %3374 = sbr.rel (%p3372) target = $region116
        $region115: #{discriminator_forward.1} parent=75 // pred_region
          _
        $region116: #{discriminator_forward.1} parent=75 // pred_fallthru
          _
      $region76: #{discriminator_forward.1} parent=5 // pred_fallthru
        _
      %p3375 = scmp.le.s32.totalorder 2, %s31
      // Predicated region
      $region117: #{discriminator_forward.1} parent=5 // pred_check
        %p3376 = pneg %p3375
      $region118: #{discriminator_forward.1} parent=5 // pred_check_branch
        %3378 = sbr.rel (%p3376) target = $region120
      $region119: #{discriminator_forward.1} parent=5 // pred_region
        %s3379 = ssub.s32 %s31, 2
        // Predicated region
        $region121: #{discriminator_forward.1} parent=119 // pred_check
          %p3380 = pneg %p359
        $region122: #{discriminator_forward.1} parent=119 // pred_check_branch
          %3382 = sbr.rel (%p3380) target = $region124
        $region123: #{discriminator_forward.1} parent=119 // pred_region
          %p3383 = scmp.lt.s32.totalorder %s37, 1
          %s3384 = scalar_select %p3383, %s37, 1
          %s3385 = scalar_lea.vmem %s14, %s3384
        $region124: #{discriminator_forward.1} parent=119 // pred_fallthru
          _
        // Predicated region
        $region125: #{discriminator_forward.1} parent=119 // pred_check
          %p3386 = pneg %p385
        $region126: #{discriminator_forward.1} parent=119 // pred_check_branch
          %3388 = sbr.rel (%p3386) target = $region128
        $region127: #{discriminator_forward.1} parent=119 // pred_region
          %p3389 = scmp.lt.s32.totalorder %s37, 1
          %s3390 = scalar_select %p3389, %s37, 1
          %s3391 = smul.addr %s3390, 4
          %s3392 = scalar_lea.vmem %s15, %s3391
        $region128: #{discriminator_forward.1} parent=119 // pred_fallthru
          _
      $region120: #{discriminator_forward.1} parent=5 // pred_fallthru
        _
    $region6: #{discriminator_forward.1} parent=1 // loop_footer
      %s35 = sadd.s32 1, %s31
    $region7: #{discriminator_forward.1} parent=1 // loop_footer_branch
      %30 = sbr.rel target = $region3
    $region8: #{discriminator_forward.1} parent=1 // loop_exit
      _
    %3393 = vsyncpa [#allocation4], 1
    %s3394 = scalar_lea.sflag [#allocation4], 1
    %3395 = vsyncpa %s3394, 1
    %3396 = vsyncpa [#allocation6], 1
    %3397 = vsyncpa [#allocation9], 1
    %3398 = vsyncpa [#allocation12], 1
    %3399 = vsyncpa [#allocation15], 1

</llo_original>
